<compile_context>
chip_gen: v7x
topology: tpu7x:2x2x1
jax: 0.10.0
libtpu: 0.0.40
codegen_flags: <defaults>
</compile_context>

<pallas_src>
import itertools

import jax
import jax.numpy as jnp
import numpy as np
from jax.experimental import pallas as pl
from jax.experimental.pallas import tpu as pltpu

LANE = 128


def _round_up(a, m):
    return (a + m - 1) // m * m


def _pack_rows(items, dtype, row_tile, min_width=LANE):
    """Pack [(name, 2-D array)] into one zero-padded (rows, W) buffer.

    Each block is padded to (round_up(rows, row_tile), W) with
    W = round_up(max(cols, min_width), 128); static in-kernel slices start on
    sublane-tile boundaries and the zero padding is harmless in every matmul.
    Returns (packed, {name: (row_off, rows, cols)}).
    """
    arrs = [(n, np.asarray(m, np.float32)) for n, m in items]
    width = _round_up(max([m.shape[1] for _, m in arrs] + [min_width]), LANE)
    offs, blocks, r = {}, [], 0
    for name, m in arrs:
        rows, cols = m.shape
        rp = _round_up(rows, row_tile)
        blk = np.zeros((rp, width), np.float32)
        blk[:rows, :cols] = m
        blocks.append(blk)
        offs[name] = (r, rows, cols)
        r += rp
    packed = jnp.asarray(np.concatenate(blocks, axis=0), dtype=dtype)
    return packed, offs


def _make_kernel(TB, N, Nv, Nneu, P, Hp, H2p, Dep, Dop, Ntp, chunk, woffs, boffs):
    f32 = jnp.float32

    def chunk_list(n):
        c = max(1, min(chunk, n))
        out, s = [], 0
        while s < n:
            sz = min(c, n - s)
            out.append((s, sz))
            s += sz
        return out

    def kernel(x_ref, y_ref, z_ref, wx_ref, w_ref, b_ref, out_ref):
        cd = w_ref.dtype                      # matmul compute dtype (bf16 or f32)
        relu = lambda v: jnp.maximum(v, 0.0)

        def W(name, cols=None):
            off, rows, rcols = woffs[name]
            return w_ref[off:off + rows, :(rcols if cols is None else cols)]

        def Bias(name, cols=None):
            off, _, rcols = boffs[name]
            return b_ref[off:off + 1, :(rcols if cols is None else cols)]

        x2 = x_ref[...]                       # (TB*N,    P)  compute dtype
        y2 = y_ref[...]                       # (TB*Nv,   S)
        z2 = z_ref[...]                       # (TB*Nneu, T)

        # One wide MXU launch for every first-layer weight whose LHS is x2; each
        # result lives in its own 128-aligned lane slot (zeros past H).
        xh = jnp.dot(x2, wx_ref[:P, :], preferred_element_type=f32)   # (TB*N, 5*Hp)
        pp_recv = xh[:, 0 * Hp:1 * Hp]
        pp_send = xh[:, 1 * Hp:2 * Hp]
        pv_recv = xh[:, 2 * Hp:3 * Hp]
        pn_recv = xh[:, 3 * Hp:4 * Hp]
        fo1_x = xh[:, 4 * Hp:5 * Hp]

        def edge_tail(pre, h1_cd):
            # (rows, Hp) cd -> lane-dense (rows, Dep) f32.
            h2 = relu(jnp.dot(h1_cd, W(pre + "2", H2p), preferred_element_type=f32)
                      + Bias(pre + "2", H2p)).astype(cd)
            return relu(jnp.dot(h2, W(pre + "3", Dep), preferred_element_type=f32)
                        + Bias(pre + "3", Dep))

        def edge_branch(pre, recv_h, send_h, n_send, subtract_self):
            # sum_s MLP(relu(W_r x_r + W_s o_s + b)), chunked over the sender axis.
            b1 = Bias(pre + "1", Hp)                              # (1, Hp) f32
            recv4 = recv_h.reshape(TB, N, 1, Hp)
            send3 = send_h.reshape(TB, n_send, Hp)
            ebar = jnp.zeros((TB * N, Dep), f32)
            for start, size in chunk_list(n_send):
                send_c = send3[:, start:start + size, :].reshape(TB, 1, size, Hp)
                # f32 bias-add + ReLU, ONE cast to the matmul dtype, implicit
                # broadcasting (no broadcast_to copy of the edge tensor).
                h1 = relu(recv4 + send_c + b1).astype(cd)         # (TB, N, size, Hp)
                e = edge_tail(pre, h1.reshape(TB * N * size, Hp)) # (TB*N*size, Dep)
                ebar = ebar + jnp.sum(e.reshape(TB * N, size, Dep), axis=1)
            if subtract_self:
                # Remove r == s edges (charged-charged branch): recompute exactly
                # the N diagonal edges per event at node level and subtract.
                h1d = relu(recv_h + send_h + b1).astype(cd)       # (TB*N, Hp)
                ebar = ebar - edge_tail(pre, h1d)
            return ebar                                           # (TB*N, Dep) f32

        send_pv = jnp.dot(y2, W("pv1b", Hp), preferred_element_type=f32)
        send_pn = jnp.dot(z2, W("pn1b", Hp), preferred_element_type=f32)

        ebar_pp = edge_branch("pp", pp_recv, pp_send, N, True)     # charged-charged
        ebar_pv = edge_branch("pv", pv_recv, send_pv, Nv, False)   # charged-vertex
        ebar_pn = edge_branch("pn", pn_recv, send_pn, Nneu, False) # charged-neutral

        # Object MLP on C = [x | Ebar_pp | Ebar_pv | Ebar_pn]: the x part was fused
        # into the wide x-dot; the three Ebar's feed one lane-concatenated dot.
        ecat = jnp.concatenate([ebar_pp.astype(cd), ebar_pv.astype(cd),
                                ebar_pn.astype(cd)], axis=-1)      # (TB*N, 3*Dep)
        h = relu(fo1_x
                 + jnp.dot(ecat, W("fo1_e", Hp), preferred_element_type=f32)
                 + Bias("fo1", Hp)).astype(cd)                     # (TB*N, Hp)
        h = relu(jnp.dot(h, W("fo2", H2p), preferred_element_type=f32)
                 + Bias("fo2", H2p)).astype(cd)                    # (TB*N, H2p)
        O = relu(jnp.dot(h, W("fo3", Dop), preferred_element_type=f32)
                 + Bias("fo3", Dop))                               # (TB*N, Dop) f32

        # Sum over constituents, then the lane-dense final classifier (TB, Ntp).
        Nsum = jnp.sum(O.reshape(TB, N, Dop), axis=1)              # (TB, Dop)
        out_ref[...] = (jnp.dot(Nsum.astype(cd), W("fc", Ntp),
                                preferred_element_type=f32) + Bias("fc", Ntp))

    return kernel


def graphnet_all_particle_pallas(x, y, z, params, *, block_b=None, chunk_send=16,
                                 matmul_dtype=jnp.bfloat16, vmem_limit_bytes=None):
    """Forward pass.  x: (B, P, N) charged, y: (B, S, Nv) vertices, z: (B, T, Nneu)."""
    B, P, N = x.shape
    _, S, Nv = y.shape
    _, T, Nneu = z.shape
    p = params
    H, H2 = p["fr2w"].shape
    De = p["fr3w"].shape[1]
    Do = p["fo3w"].shape[1]
    n_targets = p["fcw"].shape[1]

    Hp, H2p = _round_up(H, LANE), _round_up(H2, LANE)
    Dep, Dop = _round_up(De, LANE), _round_up(Do, LANE)
    Ntp = _round_up(n_targets, LANE)
    is_bf16 = np.dtype(matmul_dtype) == np.dtype(jnp.bfloat16)
    bytes_cd = 2 if is_bf16 else 4

    # ---- VMEM budget -> batch tile (TB) and sender-axis chunk size ----------
    if vmem_limit_bytes is None:
        cap = 64 * 1024 * 1024                      # conservative: v7x per-TC VMEM
        try:
            cap = int(getattr(pltpu.get_tpu_info(), "vmem_capacity_bytes", cap) or cap)
        except Exception:
            pass
        # ~54 MiB on v7x (64 MiB physical), ~100 MiB on v5e/v6e (128 MiB physical).
        vmem_limit_bytes = min(int(cap * 0.85), 100 * 1024 * 1024)
    budget = int(0.8 * vmem_limit_bytes)

    chunk = max(1, min(chunk_send, max(N, Nv, Nneu)))
    if chunk >= 8:
        chunk = (chunk // 8) * 8                    # sublane-friendly chunk size

    def est_bytes(tb, c):
        rows = tb * N
        edge = rows * c * (Hp * bytes_cd + H2p * bytes_cd + Dep * 4)   # h1,h2 + e
        node = rows * (5 * Hp * 4                    # xh
                       + 3 * Dep * (4 + bytes_cd)    # ebar accumulators + ecat
                       + Hp * (4 + bytes_cd)         # fo1 activation
                       + H2p * (4 + bytes_cd)        # fo2 activation
                       + Dop * 4)                    # O
        inputs = 2 * tb * (N * P + Nv * S + Nneu * T) * bytes_cd
        outs = 2 * tb * Ntp * 4
        return int(1.4 * (edge + node)) + inputs + outs

    if block_b is None:
        block_b = 128
    if B <= 8:
        TB = B
    else:
        tb = _round_up(min(block_b, B), 8)
        while tb > 8 and est_bytes(tb, chunk) > budget:
            tb -= 8
        TB = tb
    while est_bytes(TB, chunk) > budget and chunk > 1:
        chunk = max(1, chunk // 2)

    B_pad = _round_up(B, TB)
    nb = B_pad // TB
    if nb > 1 and nb % 2 == 1:
        nb += 1                                     # keep both megacore TCs busy (v7x)
        B_pad = nb * TB

    def prep(a, n_nodes):
        aT = jnp.swapaxes(a, 1, 2)                  # (B, nodes, feat)
        if B_pad != B:
            aT = jnp.pad(aT, ((0, B_pad - B), (0, 0), (0, 0)))
        return aT.reshape(B_pad * n_nodes, a.shape[1]).astype(matmul_dtype)

    x2, y2, z2 = prep(x, N), prep(y, Nv), prep(z, Nneu)

    # ---- pack weights / biases (all padding done once on the host) ----------
    npf = lambda a: np.asarray(a, np.float32)

    def pad_rows(w, rows):
        w = npf(w)
        out = np.zeros((rows, w.shape[1]), np.float32)
        out[:w.shape[0]] = w
        return out

    fr1w, fr1pw, fr1nw, fo1w = npf(p["fr1w"]), npf(p["fr1pw"]), npf(p["fr1nw"]), npf(p["fo1w"])
    # All five first-layer weights whose LHS is x, each in a 128-aligned lane slot.
    xfused = np.zeros((P, 5 * Hp), np.float32)
    for k, blk in enumerate([fr1w[:P], fr1w[P:], fr1pw[:P], fr1nw[:P], fo1w[:P]]):
        xfused[:, k * Hp:k * Hp + H] = blk
    # fo1 edge part, each De-row block aligned to its lane-dense Ebar slot.
    fo1_e = np.zeros((3 * Dep, H), np.float32)
    for k in range(3):
        fo1_e[k * Dep:k * Dep + De] = fo1w[P + k * De:P + (k + 1) * De]

    row_tile = 16 if is_bf16 else 8                 # bf16 sublane tile is (16, 128)
    wx_packed, _ = _pack_rows([("xfused", xfused)], matmul_dtype, row_tile,
                              min_width=5 * Hp)
    wlist = [
        ("pv1b", fr1pw[P:]), ("pn1b", fr1nw[P:]),
        ("pp2", pad_rows(p["fr2w"], Hp)), ("pp3", pad_rows(p["fr3w"], H2p)),
        ("pv2", pad_rows(p["fr2pw"], Hp)), ("pv3", pad_rows(p["fr3pw"], H2p)),
        ("pn2", pad_rows(p["fr2nw"], Hp)), ("pn3", pad_rows(p["fr3nw"], H2p)),
        ("fo1_e", fo1_e),
        ("fo2", pad_rows(p["fo2w"], Hp)), ("fo3", pad_rows(p["fo3w"], H2p)),
        ("fc", pad_rows(p["fcw"], Dop)),
    ]
    blist = [
        ("pp1", p["fr1b"]), ("pp2", p["fr2b"]), ("pp3", p["fr3b"]),
        ("pv1", p["fr1pb"]), ("pv2", p["fr2pb"]), ("pv3", p["fr3pb"]),
        ("pn1", p["fr1nb"]), ("pn2", p["fr2nb"]), ("pn3", p["fr3nb"]),
        ("fo1", p["fo1b"]), ("fo2", p["fo2b"]), ("fo3", p["fo3b"]),
        ("fc", p["fcb"]),
    ]
    w_packed, woffs = _pack_rows(wlist, matmul_dtype, row_tile,
                                 min_width=max(Hp, H2p, Dep, Dop, Ntp))
    b_packed, boffs = _pack_rows(blist, jnp.float32, 8,
                                 min_width=max(Hp, H2p, Dep, Dop, Ntp))

    kernel = _make_kernel(TB, N, Nv, Nneu, P, Hp, H2p, Dep, Dop, Ntp, chunk,
                          woffs, boffs)

    grid_spec = pl.GridSpec(
        grid=(nb,),
        in_specs=[
            pl.BlockSpec((TB * N, P), lambda b: (b, 0)),
            pl.BlockSpec((TB * Nv, S), lambda b: (b, 0)),
            pl.BlockSpec((TB * Nneu, T), lambda b: (b, 0)),
            # Grid-invariant packed weights / biases (fetched once, reused per step).
            pl.BlockSpec(wx_packed.shape, lambda b: (0, 0)),
            pl.BlockSpec(w_packed.shape, lambda b: (0, 0)),
            pl.BlockSpec(b_packed.shape, lambda b: (0, 0)),
        ],
        out_specs=pl.BlockSpec((TB, Ntp), lambda b: (b, 0)),
    )
    out = pl.pallas_call(
        kernel,
        out_shape=jax.ShapeDtypeStruct((B_pad, Ntp), jnp.float32),
        grid_spec=grid_spec,
        compiler_params=pltpu.CompilerParams(
            dimension_semantics=("parallel",),      # v7x: shard batch over 2 TCs
            vmem_limit_bytes=int(vmem_limit_bytes),
        ),
    )(x2, y2, z2, wx_packed, w_packed, b_packed)
    return out[:B, :n_targets]


# ----------------------------- pure-JAX reference -----------------------------

def build_relation_matrices(N, Nv, Nneu):
    Nr, Nt, Nn = N * (N - 1), N * Nv, N * Nneu
    Rr = np.zeros((N, Nr), np.float32)
    Rs = np.zeros((N, Nr), np.float32)
    pairs = [q for q in itertools.product(range(N), range(N)) if q[0] != q[1]]
    for i, (r, s) in enumerate(pairs):
        Rr[r, i] = 1.0
        Rs[s, i] = 1.0
    Rk = np.zeros((N, Nt), np.float32)
    Rv = np.zeros((Nv, Nt), np.float32)
    for i, (k, v) in enumerate(itertools.product(range(N), range(Nv))):
        Rk[k, i] = 1.0
        Rv[v, i] = 1.0
    Rc = np.zeros((N, Nn), np.float32)
    Rn = np.zeros((Nneu, Nn), np.float32)
    for i, (k, v) in enumerate(itertools.product(range(N), range(Nneu))):
        Rc[k, i] = 1.0
        Rn[v, i] = 1.0
    return tuple(jnp.asarray(m) for m in (Rr, Rs, Rk, Rv, Rc, Rn))


def graphnet_reference(x, y, z, p, matmul_dtype=jnp.float32):
    """Mirrors the PyTorch forward (default flags); matmul inputs cast to matmul_dtype."""
    relu = jax.nn.relu
    N, Nv, Nneu = x.shape[2], y.shape[2], z.shape[2]
    Rr, Rs, Rk, Rv, Rc, Rn = build_relation_matrices(N, Nv, Nneu)
    md = matmul_dtype

    def mm(a, w):
        return jnp.matmul(a.astype(md), w.astype(md), preferred_element_type=jnp.float32)

    def edge_mlp(Bm, w1, b1, w2, b2, w3, b3):
        h = relu(mm(Bm, w1) + b1)
        h = relu(mm(h, w2) + b2)
        return relu(mm(h, w3) + b3)

    Orr = jnp.einsum("bpn,nr->bpr", x, Rr)
    Ors = jnp.einsum("bpn,nr->bpr", x, Rs)
    Bpp = jnp.concatenate([Orr, Ors], axis=1).transpose(0, 2, 1)
    E = edge_mlp(Bpp, p["fr1w"], p["fr1b"], p["fr2w"], p["fr2b"], p["fr3w"], p["fr3b"])
    Ebar_pp = jnp.einsum("nr,bre->bne", Rr, E)

    Ork = jnp.einsum("bpn,nt->bpt", x, Rk)
    Orv = jnp.einsum("bsv,vt->bst", y, Rv)
    Bpv = jnp.concatenate([Ork, Orv], axis=1).transpose(0, 2, 1)
    E = edge_mlp(Bpv, p["fr1pw"], p["fr1pb"], p["fr2pw"], p["fr2pb"], p["fr3pw"], p["fr3pb"])
    Ebar_pv = jnp.einsum("nt,bte->bne", Rk, E)

    Orc = jnp.einsum("bpn,nm->bpm", x, Rc)
    Orn = jnp.einsum("btq,qm->btm", z, Rn)
    Bpn = jnp.concatenate([Orc, Orn], axis=1).transpose(0, 2, 1)
    E = edge_mlp(Bpn, p["fr1nw"], p["fr1nb"], p["fr2nw"], p["fr2nb"], p["fr3nw"], p["fr3nb"])
    Ebar_pn = jnp.einsum("nm,bme->bne", Rc, E)

    C = jnp.concatenate([x.transpose(0, 2, 1), Ebar_pp, Ebar_pv, Ebar_pn], axis=2)
    h = relu(mm(C, p["fo1w"]) + p["fo1b"])
    h = relu(mm(h, p["fo2w"]) + p["fo2b"])
    O = relu(mm(h, p["fo3w"]) + p["fo3b"])
    Nsum = jnp.sum(O, axis=1)
    return mm(Nsum, p["fcw"]) + p["fcb"]


def init_params(key, P, S, T, hidden, De, Do, n_targets):
    h2 = hidden // 2

    def linear(k, fin, fout):
        k1, k2 = jax.random.split(k)
        bound = 1.0 / np.sqrt(fin)
        w = jax.random.uniform(k1, (fin, fout), jnp.float32, -bound, bound)
        b = jax.random.uniform(k2, (1, fout), jnp.float32, -bound, bound)
        return w, b

    keys = jax.random.split(key, 13)
    p = {}
    p["fr1w"], p["fr1b"] = linear(keys[0], 2 * P, hidden)
    p["fr2w"], p["fr2b"] = linear(keys[1], hidden, h2)
    p["fr3w"], p["fr3b"] = linear(keys[2], h2, De)
    p["fr1pw"], p["fr1pb"] = linear(keys[3], S + P, hidden)
    p["fr2pw"], p["fr2pb"] = linear(keys[4], hidden, h2)
    p["fr3pw"], p["fr3pb"] = linear(keys[5], h2, De)
    p["fr1nw"], p["fr1nb"] = linear(keys[6], T + P, hidden)
    p["fr2nw"], p["fr2nb"] = linear(keys[7], hidden, h2)
    p["fr3nw"], p["fr3nb"] = linear(keys[8], h2, De)
    p["fo1w"], p["fo1b"] = linear(keys[9], P + 3 * De, hidden)
    p["fo2w"], p["fo2b"] = linear(keys[10], hidden, h2)
    p["fo3w"], p["fo3b"] = linear(keys[11], h2, Do)
    p["fcw"], p["fcb"] = linear(keys[12], Do, n_targets)
    return p


if __name__ == "__main__":
    # Small shapes consistent with the module's constructor.
    B, N, Nv, Nneu = 2, 8, 4, 6            # events, charged, vertices, neutral
    P, S, T = 4, 3, 4                      # charged / vertex / neutral features
    hidden, De, Do, n_targets = 32, 5, 6, 2

    key = jax.random.PRNGKey(0)
    kx, ky, kz, kp = jax.random.split(key, 4)
    x = jax.random.normal(kx, (B, P, N), jnp.float32)
    y = jax.random.normal(ky, (B, S, Nv), jnp.float32)
    z = jax.random.normal(kz, (B, T, Nneu), jnp.float32)
    params = init_params(kp, P, S, T, hidden, De, Do, n_targets)

    # f32 matmul path: exact check against the PyTorch-structured reference.
    out_f32 = jax.block_until_ready(
        graphnet_all_particle_pallas(x, y, z, params, matmul_dtype=jnp.float32))
    ref_f32 = jax.block_until_ready(graphnet_reference(x, y, z, params, jnp.float32))
    np.testing.assert_allclose(np.asarray(out_f32), np.asarray(ref_f32),
                               rtol=1e-4, atol=1e-4)

    # bf16 matmul path (MXU-native, the performance default): compare against a
    # reference using the same matmul input dtype (f32 accumulation everywhere).
    out_bf16 = jax.block_until_ready(
        graphnet_all_particle_pallas(x, y, z, params, matmul_dtype=jnp.bfloat16))
    ref_bf16 = jax.block_until_ready(graphnet_reference(x, y, z, params, jnp.bfloat16))
    np.testing.assert_allclose(np.asarray(out_bf16), np.asarray(ref_bf16),
                               rtol=2e-2, atol=2e-2)

    print("KERNEL_OK")
</pallas_src>

<mosaic_0001>
module attributes {stable_mosaic.version = 11 : i64} {
  func.func @kernel(%arg0: i32, %arg1: memref<16x4xf32, #tpu.memory_space<vmem>>, %arg2: memref<8x3xf32, #tpu.memory_space<vmem>>, %arg3: memref<12x4xf32, #tpu.memory_space<vmem>>, %arg4: memref<8x640xf32, #tpu.memory_space<vmem>>, %arg5: memref<1552x128xf32, #tpu.memory_space<vmem>>, %arg6: memref<104x128xf32, #tpu.memory_space<vmem>>, %arg7: memref<2x128xf32, #tpu.memory_space<vmem>>) attributes {dimension_semantics = [#tpu.dimension_semantics<parallel>], iteration_bounds = array<i64: 1>, scalar_prefetch = 0 : i64, scratch_operands = 0 : i64, tpu.core_type = #tpu.core_type<tc>, window_params = [{transform_indices = @transform_0, window_bounds = array<i64: 16, 4>}, {transform_indices = @transform_1, window_bounds = array<i64: 8, 3>}, {transform_indices = @transform_2, window_bounds = array<i64: 12, 4>}, {pipeline_mode = #tpu.pipeline_mode<synchronous>, transform_indices = @transform_3, window_bounds = array<i64: 8, 640>}, {pipeline_mode = #tpu.pipeline_mode<synchronous>, transform_indices = @transform_4, window_bounds = array<i64: 1552, 128>}, {pipeline_mode = #tpu.pipeline_mode<synchronous>, transform_indices = @transform_5, window_bounds = array<i64: 104, 128>}, {transform_indices = @transform_6, window_bounds = array<i64: 2, 128>}]} {
    %c0 = arith.constant 0 : index
    %c0_0 = arith.constant 0 : index
    %0 = vector.load %arg1[%c0, %c0_0] : memref<16x4xf32, #tpu.memory_space<vmem>>, vector<16x4xf32>
    %c0_1 = arith.constant 0 : index
    %c0_2 = arith.constant 0 : index
    %1 = vector.load %arg2[%c0_1, %c0_2] : memref<8x3xf32, #tpu.memory_space<vmem>>, vector<8x3xf32>
    %c0_3 = arith.constant 0 : index
    %c0_4 = arith.constant 0 : index
    %2 = vector.load %arg3[%c0_3, %c0_4] : memref<12x4xf32, #tpu.memory_space<vmem>>, vector<12x4xf32>
    %c0_5 = arith.constant 0 : index
    %c0_6 = arith.constant 0 : index
    %3 = vector.load %arg4[%c0_5, %c0_6] : memref<8x640xf32, #tpu.memory_space<vmem>>, vector<4x640xf32>
    %cst = arith.constant dense<0.000000e+00> : vector<16x640xf32>
    %4 = tpu.matmul %0, %3, %cst {dimension_numbers = #tpu.dot_dimension_numbers<[1], [0], [0], [1], [0, 0, 1, 1], [], []>} : vector<16x4xf32>, vector<4x640xf32>, vector<16x640xf32> -> vector<16x640xf32>
    %5 = vector.extract_strided_slice %4 {offsets = [0, 0], sizes = [16, 128], strides = [1, 1]} : vector<16x640xf32> to vector<16x128xf32>
    %6 = vector.extract_strided_slice %4 {offsets = [0, 128], sizes = [16, 128], strides = [1, 1]} : vector<16x640xf32> to vector<16x128xf32>
    %7 = vector.extract_strided_slice %4 {offsets = [0, 256], sizes = [16, 128], strides = [1, 1]} : vector<16x640xf32> to vector<16x128xf32>
    %8 = vector.extract_strided_slice %4 {offsets = [0, 384], sizes = [16, 128], strides = [1, 1]} : vector<16x640xf32> to vector<16x128xf32>
    %9 = vector.extract_strided_slice %4 {offsets = [0, 512], sizes = [16, 128], strides = [1, 1]} : vector<16x640xf32> to vector<16x128xf32>
    %c0_7 = arith.constant 0 : index
    %c0_8 = arith.constant 0 : index
    %10 = vector.load %arg5[%c0_7, %c0_8] : memref<1552x128xf32, #tpu.memory_space<vmem>>, vector<3x128xf32>
    %cst_9 = arith.constant dense<0.000000e+00> : vector<8x128xf32>
    %11 = tpu.matmul %1, %10, %cst_9 {dimension_numbers = #tpu.dot_dimension_numbers<[1], [0], [0], [1], [0, 0, 1, 1], [], []>} : vector<8x3xf32>, vector<3x128xf32>, vector<8x128xf32> -> vector<8x128xf32>
    %c8 = arith.constant 8 : index
    %c0_10 = arith.constant 0 : index
    %12 = vector.load %arg5[%c8, %c0_10] : memref<1552x128xf32, #tpu.memory_space<vmem>>, vector<4x128xf32>
    %cst_11 = arith.constant dense<0.000000e+00> : vector<12x128xf32>
    %13 = tpu.matmul %2, %12, %cst_11 {dimension_numbers = #tpu.dot_dimension_numbers<[1], [0], [0], [1], [0, 0, 1, 1], [], []>} : vector<12x4xf32>, vector<4x128xf32>, vector<12x128xf32> -> vector<12x128xf32>
    %c0_12 = arith.constant 0 : index
    %c0_13 = arith.constant 0 : index
    %14 = vector.load %arg6[%c0_12, %c0_13] : memref<104x128xf32, #tpu.memory_space<vmem>>, vector<1x128xf32>
    %15 = vector.shape_cast %5 : vector<16x128xf32> to vector<2x8x1x128xf32>
    %16 = vector.shape_cast %6 : vector<16x128xf32> to vector<2x8x128xf32>
    %cst_14 = arith.constant 0.000000e+00 : f32
    %17 = vector.broadcast %cst_14 : f32 to vector<16x128xf32>
    %18 = vector.shape_cast %16 : vector<2x8x128xf32> to vector<2x1x8x128xf32>
    %19 = vector.broadcast %15 : vector<2x8x1x128xf32> to vector<2x8x8x128xf32>
    %20 = vector.broadcast %18 : vector<2x1x8x128xf32> to vector<2x8x8x128xf32>
    %21 = arith.addf %19, %20 : vector<2x8x8x128xf32>
    %22 = vector.shape_cast %14 : vector<1x128xf32> to vector<1x1x1x128xf32>
    %23 = vector.broadcast %22 : vector<1x1x1x128xf32> to vector<2x8x8x128xf32>
    %24 = arith.addf %21, %23 : vector<2x8x8x128xf32>
    %cst_15 = arith.constant 0.000000e+00 : f32
    %25 = vector.broadcast %cst_15 : f32 to vector<2x8x8x128xf32>
    %26 = arith.maximumf %24, %25 : vector<2x8x8x128xf32>
    %27 = vector.shape_cast %26 : vector<2x8x8x128xf32> to vector<128x128xf32>
    %c16 = arith.constant 16 : index
    %c0_16 = arith.constant 0 : index
    %28 = vector.load %arg5[%c16, %c0_16] : memref<1552x128xf32, #tpu.memory_space<vmem>>, vector<128x128xf32>
    %cst_17 = arith.constant dense<0.000000e+00> : vector<128x128xf32>
    %29 = tpu.matmul %27, %28, %cst_17 {dimension_numbers = #tpu.dot_dimension_numbers<[1], [0], [0], [1], [0, 0, 1, 1], [], []>} : vector<128x128xf32>, vector<128x128xf32>, vector<128x128xf32> -> vector<128x128xf32>
    %c8_18 = arith.constant 8 : index
    %c0_19 = arith.constant 0 : index
    %30 = vector.load %arg6[%c8_18, %c0_19] : memref<104x128xf32, #tpu.memory_space<vmem>>, vector<1x128xf32>
    %31 = vector.broadcast %30 : vector<1x128xf32> to vector<128x128xf32>
    %32 = arith.addf %29, %31 : vector<128x128xf32>
    %cst_20 = arith.constant 0.000000e+00 : f32
    %33 = vector.broadcast %cst_20 : f32 to vector<128x128xf32>
    %34 = arith.maximumf %32, %33 : vector<128x128xf32>
    %c144 = arith.constant 144 : index
    %c0_21 = arith.constant 0 : index
    %35 = vector.load %arg5[%c144, %c0_21] : memref<1552x128xf32, #tpu.memory_space<vmem>>, vector<128x128xf32>
    %cst_22 = arith.constant dense<0.000000e+00> : vector<128x128xf32>
    %36 = tpu.matmul %34, %35, %cst_22 {dimension_numbers = #tpu.dot_dimension_numbers<[1], [0], [0], [1], [0, 0, 1, 1], [], []>} : vector<128x128xf32>, vector<128x128xf32>, vector<128x128xf32> -> vector<128x128xf32>
    %c16_23 = arith.constant 16 : index
    %c0_24 = arith.constant 0 : index
    %37 = vector.load %arg6[%c16_23, %c0_24] : memref<104x128xf32, #tpu.memory_space<vmem>>, vector<1x128xf32>
    %38 = vector.broadcast %37 : vector<1x128xf32> to vector<128x128xf32>
    %39 = arith.addf %36, %38 : vector<128x128xf32>
    %cst_25 = arith.constant 0.000000e+00 : f32
    %40 = vector.broadcast %cst_25 : f32 to vector<128x128xf32>
    %41 = arith.maximumf %39, %40 : vector<128x128xf32>
    %42 = vector.shape_cast %41 : vector<128x128xf32> to vector<16x8x128xf32>
    %cst_26 = arith.constant dense<0.000000e+00> : vector<16x128xf32>
    %43 = vector.multi_reduction <add>, %42, %cst_26 [1] : vector<16x8x128xf32> to vector<16x128xf32>
    %44 = arith.addf %17, %43 : vector<16x128xf32>
    %45 = arith.addf %5, %6 : vector<16x128xf32>
    %46 = vector.broadcast %14 : vector<1x128xf32> to vector<16x128xf32>
    %47 = arith.addf %45, %46 : vector<16x128xf32>
    %cst_27 = arith.constant 0.000000e+00 : f32
    %48 = vector.broadcast %cst_27 : f32 to vector<16x128xf32>
    %49 = arith.maximumf %47, %48 : vector<16x128xf32>
    %c16_28 = arith.constant 16 : index
    %c0_29 = arith.constant 0 : index
    %50 = vector.load %arg5[%c16_28, %c0_29] : memref<1552x128xf32, #tpu.memory_space<vmem>>, vector<128x128xf32>
    %cst_30 = arith.constant dense<0.000000e+00> : vector<16x128xf32>
    %51 = tpu.matmul %49, %50, %cst_30 {dimension_numbers = #tpu.dot_dimension_numbers<[1], [0], [0], [1], [0, 0, 1, 1], [], []>} : vector<16x128xf32>, vector<128x128xf32>, vector<16x128xf32> -> vector<16x128xf32>
    %c8_31 = arith.constant 8 : index
    %c0_32 = arith.constant 0 : index
    %52 = vector.load %arg6[%c8_31, %c0_32] : memref<104x128xf32, #tpu.memory_space<vmem>>, vector<1x128xf32>
    %53 = vector.broadcast %52 : vector<1x128xf32> to vector<16x128xf32>
    %54 = arith.addf %51, %53 : vector<16x128xf32>
    %cst_33 = arith.constant 0.000000e+00 : f32
    %55 = vector.broadcast %cst_33 : f32 to vector<16x128xf32>
    %56 = arith.maximumf %54, %55 : vector<16x128xf32>
    %c144_34 = arith.constant 144 : index
    %c0_35 = arith.constant 0 : index
    %57 = vector.load %arg5[%c144_34, %c0_35] : memref<1552x128xf32, #tpu.memory_space<vmem>>, vector<128x128xf32>
    %cst_36 = arith.constant dense<0.000000e+00> : vector<16x128xf32>
    %58 = tpu.matmul %56, %57, %cst_36 {dimension_numbers = #tpu.dot_dimension_numbers<[1], [0], [0], [1], [0, 0, 1, 1], [], []>} : vector<16x128xf32>, vector<128x128xf32>, vector<16x128xf32> -> vector<16x128xf32>
    %c16_37 = arith.constant 16 : index
    %c0_38 = arith.constant 0 : index
    %59 = vector.load %arg6[%c16_37, %c0_38] : memref<104x128xf32, #tpu.memory_space<vmem>>, vector<1x128xf32>
    %60 = vector.broadcast %59 : vector<1x128xf32> to vector<16x128xf32>
    %61 = arith.addf %58, %60 : vector<16x128xf32>
    %cst_39 = arith.constant 0.000000e+00 : f32
    %62 = vector.broadcast %cst_39 : f32 to vector<16x128xf32>
    %63 = arith.maximumf %61, %62 : vector<16x128xf32>
    %64 = arith.subf %44, %63 : vector<16x128xf32>
    %c24 = arith.constant 24 : index
    %c0_40 = arith.constant 0 : index
    %65 = vector.load %arg6[%c24, %c0_40] : memref<104x128xf32, #tpu.memory_space<vmem>>, vector<1x128xf32>
    %66 = vector.shape_cast %7 : vector<16x128xf32> to vector<2x8x1x128xf32>
    %67 = vector.shape_cast %11 : vector<8x128xf32> to vector<2x4x128xf32>
    %cst_41 = arith.constant 0.000000e+00 : f32
    %68 = vector.broadcast %cst_41 : f32 to vector<16x128xf32>
    %69 = vector.shape_cast %67 : vector<2x4x128xf32> to vector<2x1x4x128xf32>
    %70 = vector.broadcast %66 : vector<2x8x1x128xf32> to vector<2x8x4x128xf32>
    %71 = vector.broadcast %69 : vector<2x1x4x128xf32> to vector<2x8x4x128xf32>
    %72 = arith.addf %70, %71 : vector<2x8x4x128xf32>
    %73 = vector.shape_cast %65 : vector<1x128xf32> to vector<1x1x1x128xf32>
    %74 = vector.broadcast %73 : vector<1x1x1x128xf32> to vector<2x8x4x128xf32>
    %75 = arith.addf %72, %74 : vector<2x8x4x128xf32>
    %cst_42 = arith.constant 0.000000e+00 : f32
    %76 = vector.broadcast %cst_42 : f32 to vector<2x8x4x128xf32>
    %77 = arith.maximumf %75, %76 : vector<2x8x4x128xf32>
    %78 = vector.shape_cast %77 : vector<2x8x4x128xf32> to vector<64x128xf32>
    %c272 = arith.constant 272 : index
    %c0_43 = arith.constant 0 : index
    %79 = vector.load %arg5[%c272, %c0_43] : memref<1552x128xf32, #tpu.memory_space<vmem>>, vector<128x128xf32>
    %cst_44 = arith.constant dense<0.000000e+00> : vector<64x128xf32>
    %80 = tpu.matmul %78, %79, %cst_44 {dimension_numbers = #tpu.dot_dimension_numbers<[1], [0], [0], [1], [0, 0, 1, 1], [], []>} : vector<64x128xf32>, vector<128x128xf32>, vector<64x128xf32> -> vector<64x128xf32>
    %c32 = arith.constant 32 : index
    %c0_45 = arith.constant 0 : index
    %81 = vector.load %arg6[%c32, %c0_45] : memref<104x128xf32, #tpu.memory_space<vmem>>, vector<1x128xf32>
    %82 = vector.broadcast %81 : vector<1x128xf32> to vector<64x128xf32>
    %83 = arith.addf %80, %82 : vector<64x128xf32>
    %cst_46 = arith.constant 0.000000e+00 : f32
    %84 = vector.broadcast %cst_46 : f32 to vector<64x128xf32>
    %85 = arith.maximumf %83, %84 : vector<64x128xf32>
    %c400 = arith.constant 400 : index
    %c0_47 = arith.constant 0 : index
    %86 = vector.load %arg5[%c400, %c0_47] : memref<1552x128xf32, #tpu.memory_space<vmem>>, vector<128x128xf32>
    %cst_48 = arith.constant dense<0.000000e+00> : vector<64x128xf32>
    %87 = tpu.matmul %85, %86, %cst_48 {dimension_numbers = #tpu.dot_dimension_numbers<[1], [0], [0], [1], [0, 0, 1, 1], [], []>} : vector<64x128xf32>, vector<128x128xf32>, vector<64x128xf32> -> vector<64x128xf32>
    %c40 = arith.constant 40 : index
    %c0_49 = arith.constant 0 : index
    %88 = vector.load %arg6[%c40, %c0_49] : memref<104x128xf32, #tpu.memory_space<vmem>>, vector<1x128xf32>
    %89 = vector.broadcast %88 : vector<1x128xf32> to vector<64x128xf32>
    %90 = arith.addf %87, %89 : vector<64x128xf32>
    %cst_50 = arith.constant 0.000000e+00 : f32
    %91 = vector.broadcast %cst_50 : f32 to vector<64x128xf32>
    %92 = arith.maximumf %90, %91 : vector<64x128xf32>
    %93 = vector.shape_cast %92 : vector<64x128xf32> to vector<16x4x128xf32>
    %cst_51 = arith.constant dense<0.000000e+00> : vector<16x128xf32>
    %94 = vector.multi_reduction <add>, %93, %cst_51 [1] : vector<16x4x128xf32> to vector<16x128xf32>
    %95 = arith.addf %68, %94 : vector<16x128xf32>
    %c48 = arith.constant 48 : index
    %c0_52 = arith.constant 0 : index
    %96 = vector.load %arg6[%c48, %c0_52] : memref<104x128xf32, #tpu.memory_space<vmem>>, vector<1x128xf32>
    %97 = vector.shape_cast %8 : vector<16x128xf32> to vector<2x8x1x128xf32>
    %98 = vector.shape_cast %13 : vector<12x128xf32> to vector<2x6x128xf32>
    %cst_53 = arith.constant 0.000000e+00 : f32
    %99 = vector.broadcast %cst_53 : f32 to vector<16x128xf32>
    %100 = vector.shape_cast %98 : vector<2x6x128xf32> to vector<2x1x6x128xf32>
    %101 = vector.broadcast %97 : vector<2x8x1x128xf32> to vector<2x8x6x128xf32>
    %102 = vector.broadcast %100 : vector<2x1x6x128xf32> to vector<2x8x6x128xf32>
    %103 = arith.addf %101, %102 : vector<2x8x6x128xf32>
    %104 = vector.shape_cast %96 : vector<1x128xf32> to vector<1x1x1x128xf32>
    %105 = vector.broadcast %104 : vector<1x1x1x128xf32> to vector<2x8x6x128xf32>
    %106 = arith.addf %103, %105 : vector<2x8x6x128xf32>
    %cst_54 = arith.constant 0.000000e+00 : f32
    %107 = vector.broadcast %cst_54 : f32 to vector<2x8x6x128xf32>
    %108 = arith.maximumf %106, %107 : vector<2x8x6x128xf32>
    %109 = vector.shape_cast %108 : vector<2x8x6x128xf32> to vector<96x128xf32>
    %c528 = arith.constant 528 : index
    %c0_55 = arith.constant 0 : index
    %110 = vector.load %arg5[%c528, %c0_55] : memref<1552x128xf32, #tpu.memory_space<vmem>>, vector<128x128xf32>
    %cst_56 = arith.constant dense<0.000000e+00> : vector<96x128xf32>
    %111 = tpu.matmul %109, %110, %cst_56 {dimension_numbers = #tpu.dot_dimension_numbers<[1], [0], [0], [1], [0, 0, 1, 1], [], []>} : vector<96x128xf32>, vector<128x128xf32>, vector<96x128xf32> -> vector<96x128xf32>
    %c56 = arith.constant 56 : index
    %c0_57 = arith.constant 0 : index
    %112 = vector.load %arg6[%c56, %c0_57] : memref<104x128xf32, #tpu.memory_space<vmem>>, vector<1x128xf32>
    %113 = vector.broadcast %112 : vector<1x128xf32> to vector<96x128xf32>
    %114 = arith.addf %111, %113 : vector<96x128xf32>
    %cst_58 = arith.constant 0.000000e+00 : f32
    %115 = vector.broadcast %cst_58 : f32 to vector<96x128xf32>
    %116 = arith.maximumf %114, %115 : vector<96x128xf32>
    %c656 = arith.constant 656 : index
    %c0_59 = arith.constant 0 : index
    %117 = vector.load %arg5[%c656, %c0_59] : memref<1552x128xf32, #tpu.memory_space<vmem>>, vector<128x128xf32>
    %cst_60 = arith.constant dense<0.000000e+00> : vector<96x128xf32>
    %118 = tpu.matmul %116, %117, %cst_60 {dimension_numbers = #tpu.dot_dimension_numbers<[1], [0], [0], [1], [0, 0, 1, 1], [], []>} : vector<96x128xf32>, vector<128x128xf32>, vector<96x128xf32> -> vector<96x128xf32>
    %c64 = arith.constant 64 : index
    %c0_61 = arith.constant 0 : index
    %119 = vector.load %arg6[%c64, %c0_61] : memref<104x128xf32, #tpu.memory_space<vmem>>, vector<1x128xf32>
    %120 = vector.broadcast %119 : vector<1x128xf32> to vector<96x128xf32>
    %121 = arith.addf %118, %120 : vector<96x128xf32>
    %cst_62 = arith.constant 0.000000e+00 : f32
    %122 = vector.broadcast %cst_62 : f32 to vector<96x128xf32>
    %123 = arith.maximumf %121, %122 : vector<96x128xf32>
    %124 = vector.shape_cast %123 : vector<96x128xf32> to vector<16x6x128xf32>
    %cst_63 = arith.constant dense<0.000000e+00> : vector<16x128xf32>
    %125 = vector.multi_reduction <add>, %124, %cst_63 [1] : vector<16x6x128xf32> to vector<16x128xf32>
    %126 = arith.addf %99, %125 : vector<16x128xf32>
    %127 = tpu.concatenate %64, %95, %126 in 1 : vector<16x128xf32>, vector<16x128xf32>, vector<16x128xf32> -> vector<16x384xf32>
    %c784 = arith.constant 784 : index
    %c0_64 = arith.constant 0 : index
    %128 = vector.load %arg5[%c784, %c0_64] : memref<1552x128xf32, #tpu.memory_space<vmem>>, vector<384x128xf32>
    %cst_65 = arith.constant dense<0.000000e+00> : vector<16x128xf32>
    %129 = tpu.matmul %127, %128, %cst_65 {dimension_numbers = #tpu.dot_dimension_numbers<[1], [0], [0], [1], [0, 0, 1, 1], [], []>} : vector<16x384xf32>, vector<384x128xf32>, vector<16x128xf32> -> vector<16x128xf32>
    %130 = arith.addf %9, %129 : vector<16x128xf32>
    %c72 = arith.constant 72 : index
    %c0_66 = arith.constant 0 : index
    %131 = vector.load %arg6[%c72, %c0_66] : memref<104x128xf32, #tpu.memory_space<vmem>>, vector<1x128xf32>
    %132 = vector.broadcast %131 : vector<1x128xf32> to vector<16x128xf32>
    %133 = arith.addf %130, %132 : vector<16x128xf32>
    %cst_67 = arith.constant 0.000000e+00 : f32
    %134 = vector.broadcast %cst_67 : f32 to vector<16x128xf32>
    %135 = arith.maximumf %133, %134 : vector<16x128xf32>
    %c1168 = arith.constant 1168 : index
    %c0_68 = arith.constant 0 : index
    %136 = vector.load %arg5[%c1168, %c0_68] : memref<1552x128xf32, #tpu.memory_space<vmem>>, vector<128x128xf32>
    %cst_69 = arith.constant dense<0.000000e+00> : vector<16x128xf32>
    %137 = tpu.matmul %135, %136, %cst_69 {dimension_numbers = #tpu.dot_dimension_numbers<[1], [0], [0], [1], [0, 0, 1, 1], [], []>} : vector<16x128xf32>, vector<128x128xf32>, vector<16x128xf32> -> vector<16x128xf32>
    %c80 = arith.constant 80 : index
    %c0_70 = arith.constant 0 : index
    %138 = vector.load %arg6[%c80, %c0_70] : memref<104x128xf32, #tpu.memory_space<vmem>>, vector<1x128xf32>
    %139 = vector.broadcast %138 : vector<1x128xf32> to vector<16x128xf32>
    %140 = arith.addf %137, %139 : vector<16x128xf32>
    %cst_71 = arith.constant 0.000000e+00 : f32
    %141 = vector.broadcast %cst_71 : f32 to vector<16x128xf32>
    %142 = arith.maximumf %140, %141 : vector<16x128xf32>
    %c1296 = arith.constant 1296 : index
    %c0_72 = arith.constant 0 : index
    %143 = vector.load %arg5[%c1296, %c0_72] : memref<1552x128xf32, #tpu.memory_space<vmem>>, vector<128x128xf32>
    %cst_73 = arith.constant dense<0.000000e+00> : vector<16x128xf32>
    %144 = tpu.matmul %142, %143, %cst_73 {dimension_numbers = #tpu.dot_dimension_numbers<[1], [0], [0], [1], [0, 0, 1, 1], [], []>} : vector<16x128xf32>, vector<128x128xf32>, vector<16x128xf32> -> vector<16x128xf32>
    %c88 = arith.constant 88 : index
    %c0_74 = arith.constant 0 : index
    %145 = vector.load %arg6[%c88, %c0_74] : memref<104x128xf32, #tpu.memory_space<vmem>>, vector<1x128xf32>
    %146 = vector.broadcast %145 : vector<1x128xf32> to vector<16x128xf32>
    %147 = arith.addf %144, %146 : vector<16x128xf32>
    %cst_75 = arith.constant 0.000000e+00 : f32
    %148 = vector.broadcast %cst_75 : f32 to vector<16x128xf32>
    %149 = arith.maximumf %147, %148 : vector<16x128xf32>
    %150 = vector.shape_cast %149 : vector<16x128xf32> to vector<2x8x128xf32>
    %cst_76 = arith.constant dense<0.000000e+00> : vector<2x128xf32>
    %151 = vector.multi_reduction <add>, %150, %cst_76 [1] : vector<2x8x128xf32> to vector<2x128xf32>
    %c1424 = arith.constant 1424 : index
    %c0_77 = arith.constant 0 : index
    %152 = vector.load %arg5[%c1424, %c0_77] : memref<1552x128xf32, #tpu.memory_space<vmem>>, vector<128x128xf32>
    %cst_78 = arith.constant dense<0.000000e+00> : vector<2x128xf32>
    %153 = tpu.matmul %151, %152, %cst_78 {dimension_numbers = #tpu.dot_dimension_numbers<[1], [0], [0], [1], [0, 0, 1, 1], [], []>} : vector<2x128xf32>, vector<128x128xf32>, vector<2x128xf32> -> vector<2x128xf32>
    %c96 = arith.constant 96 : index
    %c0_79 = arith.constant 0 : index
    %154 = vector.load %arg6[%c96, %c0_79] : memref<104x128xf32, #tpu.memory_space<vmem>>, vector<1x128xf32>
    %155 = vector.broadcast %154 : vector<1x128xf32> to vector<2x128xf32>
    %156 = arith.addf %153, %155 : vector<2x128xf32>
    %c0_80 = arith.constant 0 : index
    %c0_81 = arith.constant 0 : index
    %157 = vector.load %arg7[%c0_80, %c0_81] : memref<2x128xf32, #tpu.memory_space<vmem>>, vector<2x128xf32>
    tpu.vector_store %arg7[%c0_80, %c0_81], %156 {strides = array<i32>} : memref<2x128xf32, #tpu.memory_space<vmem>>, vector<2x128xf32>,
    return
  }
  func.func @transform_0(%arg0: i32) -> (i32, i32) {
    %c0_i32 = arith.constant 0 : i32
    %c0_i32_0 = arith.constant 0 : i32
    return %arg0, %c0_i32 : i32, i32
  }
  func.func @transform_1(%arg0: i32) -> (i32, i32) {
    %c0_i32 = arith.constant 0 : i32
    %c0_i32_0 = arith.constant 0 : i32
    return %arg0, %c0_i32 : i32, i32
  }
  func.func @transform_2(%arg0: i32) -> (i32, i32) {
    %c0_i32 = arith.constant 0 : i32
    %c0_i32_0 = arith.constant 0 : i32
    return %arg0, %c0_i32 : i32, i32
  }
  func.func @transform_3(%arg0: i32) -> (i32, i32) {
    %c0_i32 = arith.constant 0 : i32
    %c0_i32_0 = arith.constant 0 : i32
    %c0_i32_1 = arith.constant 0 : i32
    return %c0_i32, %c0_i32_0 : i32, i32
  }
  func.func @transform_4(%arg0: i32) -> (i32, i32) {
    %c0_i32 = arith.constant 0 : i32
    %c0_i32_0 = arith.constant 0 : i32
    %c0_i32_1 = arith.constant 0 : i32
    return %c0_i32, %c0_i32_0 : i32, i32
  }
  func.func @transform_5(%arg0: i32) -> (i32, i32) {
    %c0_i32 = arith.constant 0 : i32
    %c0_i32_0 = arith.constant 0 : i32
    %c0_i32_1 = arith.constant 0 : i32
    return %c0_i32, %c0_i32_0 : i32, i32
  }
  func.func @transform_6(%arg0: i32) -> (i32, i32) {
    %c0_i32 = arith.constant 0 : i32
    %c0_i32_0 = arith.constant 0 : i32
    return %arg0, %c0_i32 : i32, i32
  }
}

</mosaic_0001>

<llo_original>
// kernel: tpu_custom_call.1
$region0: #{tpu_custom_call.1}
  #allocation0 [shape = 'u32[]', space=smem, size = 0x4, offset = 0x4, fixed_abs, tag = 'smem constant byte address 0x4 - core index']
  #allocation1 [shape = 'u32[144,128]{1,0:T(1,128)}', space=vmem, size = 0x12000, scoped, tag = 'internal scratch']
  %s0 = inlined_call_operand.vmem [shape: f32[16,4], index: 0, kind: input, shape index: {}]
  %s1 = inlined_call_operand.vmem [shape: f32[8,3], index: 1, kind: input, shape index: {}]
  %s2 = inlined_call_operand.vmem [shape: f32[12,4], index: 2, kind: input, shape index: {}]
  %s3 = inlined_call_operand.vmem [shape: f32[8,640], index: 3, kind: input, shape index: {}]
  %s4 = inlined_call_operand.hbm [shape: f32[1552,128], index: 4, kind: input, shape index: {}]
  %s5 = inlined_call_operand.hbm [shape: f32[104,128], index: 5, kind: input, shape index: {}]
  %s6 = inlined_call_operand.hbm [shape: f32[2,128], index: 6, kind: output, shape index: {}]
  %s7 = sld [smem:[#allocation0]]
  $region42: #{tpu_custom_call.1} parent=0
    _
  %s9 = ssub.s32 1, %s7
  %s10 = scalar_select 0, %s9, %s7
  $region1: #{tpu_custom_call.1} parent=0
    #allocation2 [shape = 'u8[794624]{0}', space=vmem, size = 0xc2000, scoped, tag = 'input window, operand 4, single buffered']
    #allocation3 [shape = 's32[1]{0}', space=sflag, size = 0x4, scoped, tag = 'scoped memory for tpu_custom_call.1']
    #allocation4 [shape = 's32[1]{0}', space=sflag, size = 0x4, scoped, tag = 'scoped memory for tpu_custom_call.1']
    #allocation5 [shape = 'u8[53248]{0}', space=vmem, size = 0xd000, scoped, tag = 'input window, operand 5, single buffered']
    #allocation6 [shape = 's32[1]{0}', space=sflag, size = 0x4, scoped, tag = 'scoped memory for tpu_custom_call.1']
    #allocation7 [shape = 'u8[1024]{0}', space=vmem, size = 0x400, scoped, tag = 'output window, operand 0, single buffered']
    %11 = vsyncpa [#allocation3], 0
    %12 = vsyncpa [#allocation6], 0
    %13 = vsyncpa [#allocation4], 0
    // Predicated region
    $region2: #{tpu_custom_call.1} parent=1 // pred_check
      _
    $region3: #{tpu_custom_call.1} parent=1 // pred_check_branch
      %15 = sbr.rel (0) target = $region5
    $region4: #{tpu_custom_call.1} parent=1 // pred_region
      _
    $region5: #{tpu_custom_call.1} parent=1 // pred_fallthru
      _
    // Predicated region
    $region6: #{tpu_custom_call.1} parent=1 // pred_check
      _
    $region7: #{tpu_custom_call.1} parent=1 // pred_check_branch
      %17 = sbr.rel (0) target = $region9
    $region8: #{tpu_custom_call.1} parent=1 // pred_region
      _
    $region9: #{tpu_custom_call.1} parent=1 // pred_fallthru
      _
    // Predicated region
    $region10: #{tpu_custom_call.1} parent=1 // pred_check
      _
    $region11: #{tpu_custom_call.1} parent=1 // pred_check_branch
      %19 = sbr.rel (0) target = $region13
    $region12: #{tpu_custom_call.1} parent=1 // pred_region
      _
    $region13: #{tpu_custom_call.1} parent=1 // pred_fallthru
      _
    // Predicated region
    $region14: #{tpu_custom_call.1} parent=1 // pred_check
      _
    $region15: #{tpu_custom_call.1} parent=1 // pred_check_branch
      %21 = sbr.rel (0) target = $region17
    $region16: #{tpu_custom_call.1} parent=1 // pred_region
      _
    $region17: #{tpu_custom_call.1} parent=1 // pred_fallthru
      _
    // Predicated region
    $region18: #{tpu_custom_call.1} parent=1 // pred_check
      _
    $region19: #{tpu_custom_call.1} parent=1 // pred_check_branch
      %23 = sbr.rel (0) target = $region21
    $region20: #{tpu_custom_call.1} parent=1 // pred_region
      %s25 = ssub.s32 24832, 24832
      %26 = vsyncadd [#allocation3], %s25
      %s27 = sshll.u32 [#allocation2], 4
      %s28 = int_to_ptr.vmem [resolvable:$true] %s27
      %33 = dma.hbm_to_vmem [thread:$0]  %s4, 24832, %s28, [#allocation3], 128, 128, 8
    $region21: #{tpu_custom_call.1} parent=1 // pred_fallthru
      _
    // Predicated region
    $region22: #{tpu_custom_call.1} parent=1 // pred_check
      _
    $region23: #{tpu_custom_call.1} parent=1 // pred_check_branch
      %35 = sbr.rel (0) target = $region25
    $region24: #{tpu_custom_call.1} parent=1 // pred_region
      %s37 = ssub.s32 1664, 1664
      %38 = vsyncadd [#allocation6], %s37
      %s39 = sshll.u32 [#allocation5], 4
      %s40 = int_to_ptr.vmem [resolvable:$true] %s39
      %45 = dma.hbm_to_vmem [thread:$0]  %s5, 1664, %s40, [#allocation6], 128, 128, 8
    $region25: #{tpu_custom_call.1} parent=1 // pred_fallthru
      _
    // Predicated region
    $region26: #{tpu_custom_call.1} parent=1 // pred_check
      _
    $region27: #{tpu_custom_call.1} parent=1 // pred_check_branch
      %47 = sbr.rel (0) target = $region29
    $region28: #{tpu_custom_call.1} parent=1 // pred_region
      %48 = dma.done [#allocation3], 24832
    $region29: #{tpu_custom_call.1} parent=1 // pred_fallthru
      _
    // Predicated region
    $region30: #{tpu_custom_call.1} parent=1 // pred_check
      _
    $region31: #{tpu_custom_call.1} parent=1 // pred_check_branch
      %50 = sbr.rel (0) target = $region33
    $region32: #{tpu_custom_call.1} parent=1 // pred_region
      %51 = dma.done [#allocation6], 1664
    $region33: #{tpu_custom_call.1} parent=1 // pred_fallthru
      _
    %v52 = vld [vmem:[%s0] sm:$0xff]
    %v53 = vld [vmem:[%s0 + $0x8] sm:$0xff]
    %v54 = vld [vmem:[%s1] sm:$0xff]
    %v55 = vld [vmem:[%s2] sm:$0xff]
    %v56 = vld [vmem:[%s2 + $0x8] sm:$0xf]
    %v57 = vld [vmem:[%s3] sm:$0xf]
    %v58 = vld [vmem:[%s3 + $0x8] sm:$0xf]
    %v59 = vld [vmem:[%s3 + $0x10] sm:$0xf]
    %v60 = vld [vmem:[%s3 + $0x18] sm:$0xf]
    %v61 = vld [vmem:[%s3 + $0x20] sm:$0xf]
    %vm62 = vcmask 31744
    %v64 = vsel %vm62, %v52, 0
    %v67 = vsel %vm62, %v53, 0
    %vm69 = vcmask 1043456
    %v71 = vsel %vm69, %v57, 0
    %v74 = vsel %vm69, %v58, 0
    %v77 = vsel %vm69, %v59, 0
    %v80 = vsel %vm69, %v60, 0
    %v83 = vsel %vm69, %v61, 0
    %85 = vmatprep.subr.mxu0 %v74
    %86 = vmatpush1.msra.mxu0 %v71
    %87 = vmatprep.subr.mxu0 0.0
    %88 = vmatpush1.msra.mxu0 0.0
    %89 = vmatprep.subr.mxu0 0.0
    %90 = vmatpush1.msra.mxu0 0.0
    %91 = vmatprep.subr.mxu0 0.0
    %92 = vmatpush1.msra.mxu0 0.0
    %93 = vmatprep.subr.mxu0 0.0
    %94 = vmatpush1.msra.mxu0 0.0
    %95 = vmatprep.subr.mxu0 0.0
    %96 = vmatpush1.msra.mxu0 0.0
    %97 = vmatprep.subr.mxu0 0.0
    %98 = vmatpush1.msra.mxu0 0.0
    %99 = vmatprep.subr.mxu0 0.0
    %100 = vmatpush1.msra.mxu0 0.0
    %101 = vmatprep.subr.mxu0 0.0
    %102 = vmatpush1.msra.mxu0 0.0
    %103 = vmatprep.subr.mxu0 0.0
    %104 = vmatpush1.msra.mxu0 0.0
    %105 = vmatprep.subr.mxu0 0.0
    %106 = vmatpush1.msra.mxu0 0.0
    %107 = vmatprep.subr.mxu0 0.0
    %108 = vmatpush1.msra.mxu0 0.0
    %109 = vmatprep.subr.mxu0 0.0
    %110 = vmatpush1.msra.mxu0 0.0
    %111 = vmatprep.subr.mxu0 0.0
    %112 = vmatpush1.msra.mxu0 0.0
    %113 = vmatprep.subr.mxu0 0.0
    %114 = vmatpush1.msra.mxu0 0.0
    %115 = vmatprep.subr.mxu0 0.0
    %116 = vmatpush1.msra.mxu0 0.0
    %117 = vmatprep.subr.mxu0 0.0
    %118 = vmatpush1.msra.mxu0 0.0
    %119 = vmatprep.subr.mxu0 0.0
    %120 = vmatpush1.msra.mxu0 0.0
    %121 = vmatprep.subr.mxu0 0.0
    %122 = vmatpush1.msra.mxu0 0.0
    %123 = vmatprep.subr.mxu0 0.0
    %124 = vmatpush1.msra.mxu0 0.0
    %125 = vmatprep.subr.mxu0 0.0
    %126 = vmatpush1.msra.mxu0 0.0
    %127 = vmatprep.subr.mxu0 0.0
    %128 = vmatpush1.msra.mxu0 0.0
    %129 = vmatprep.subr.mxu0 0.0
    %130 = vmatpush1.msra.mxu0 0.0
    %131 = vmatprep.subr.mxu0 0.0
    %132 = vmatpush1.msra.mxu0 0.0
    %133 = vmatprep.subr.mxu0 0.0
    %134 = vmatpush1.msra.mxu0 0.0
    %135 = vmatprep.subr.mxu0 0.0
    %136 = vmatpush1.msra.mxu0 0.0
    %137 = vmatprep.subr.mxu0 0.0
    %138 = vmatpush1.msra.mxu0 0.0
    %139 = vmatprep.subr.mxu0 0.0
    %140 = vmatpush1.msra.mxu0 0.0
    %141 = vmatprep.subr.mxu0 0.0
    %142 = vmatpush1.msra.mxu0 0.0
    %143 = vmatprep.subr.mxu0 0.0
    %144 = vmatpush1.msra.mxu0 0.0
    %145 = vmatprep.subr.mxu0 0.0
    %146 = vmatpush1.msra.mxu0 0.0
    %147 = vmatprep.subr.mxu0 0.0
    %148 = vmatpush1.msra.mxu0 0.0
    %149 = vmatprep.mubr.f32.mxu0 0.0
    %150 = vmatmul.mubr.f32.gmra.mrb[0].mxu0 %v64
    %v151 = vpop.f32.mrb[0].mxu0
    %v152 = vadd.f32 0.0, %v151
    %v153 = vpop.f32.mrb[0].mxu0
    %v154 = vadd.f32 0.0, %v153
    %155 = vmatprep.mubr.f32.mxu0 0.0
    %156 = vmatmul.mubr.f32.gmra.mrb[0].mxu0 %v67
    %v157 = vpop.f32.mrb[0].mxu0
    %v158 = vadd.f32 0.0, %v157
    %v159 = vpop.f32.mrb[0].mxu0
    %v160 = vadd.f32 0.0, %v159
    %161 = vdwg.mxu0
    %162 = vmatprep.subr.mxu0 %v80
    %163 = vmatpush1.msra.mxu0 %v77
    %164 = vmatprep.subr.mxu0 0.0
    %165 = vmatpush1.msra.mxu0 0.0
    %166 = vmatprep.subr.mxu0 0.0
    %167 = vmatpush1.msra.mxu0 0.0
    %168 = vmatprep.subr.mxu0 0.0
    %169 = vmatpush1.msra.mxu0 0.0
    %170 = vmatprep.subr.mxu0 0.0
    %171 = vmatpush1.msra.mxu0 0.0
    %172 = vmatprep.subr.mxu0 0.0
    %173 = vmatpush1.msra.mxu0 0.0
    %174 = vmatprep.subr.mxu0 0.0
    %175 = vmatpush1.msra.mxu0 0.0
    %176 = vmatprep.subr.mxu0 0.0
    %177 = vmatpush1.msra.mxu0 0.0
    %178 = vmatprep.subr.mxu0 0.0
    %179 = vmatpush1.msra.mxu0 0.0
    %180 = vmatprep.subr.mxu0 0.0
    %181 = vmatpush1.msra.mxu0 0.0
    %182 = vmatprep.subr.mxu0 0.0
    %183 = vmatpush1.msra.mxu0 0.0
    %184 = vmatprep.subr.mxu0 0.0
    %185 = vmatpush1.msra.mxu0 0.0
    %186 = vmatprep.subr.mxu0 0.0
    %187 = vmatpush1.msra.mxu0 0.0
    %188 = vmatprep.subr.mxu0 0.0
    %189 = vmatpush1.msra.mxu0 0.0
    %190 = vmatprep.subr.mxu0 0.0
    %191 = vmatpush1.msra.mxu0 0.0
    %192 = vmatprep.subr.mxu0 0.0
    %193 = vmatpush1.msra.mxu0 0.0
    %194 = vmatprep.subr.mxu0 0.0
    %195 = vmatpush1.msra.mxu0 0.0
    %196 = vmatprep.subr.mxu0 0.0
    %197 = vmatpush1.msra.mxu0 0.0
    %198 = vmatprep.subr.mxu0 0.0
    %199 = vmatpush1.msra.mxu0 0.0
    %200 = vmatprep.subr.mxu0 0.0
    %201 = vmatpush1.msra.mxu0 0.0
    %202 = vmatprep.subr.mxu0 0.0
    %203 = vmatpush1.msra.mxu0 0.0
    %204 = vmatprep.subr.mxu0 0.0
    %205 = vmatpush1.msra.mxu0 0.0
    %206 = vmatprep.subr.mxu0 0.0
    %207 = vmatpush1.msra.mxu0 0.0
    %208 = vmatprep.subr.mxu0 0.0
    %209 = vmatpush1.msra.mxu0 0.0
    %210 = vmatprep.subr.mxu0 0.0
    %211 = vmatpush1.msra.mxu0 0.0
    %212 = vmatprep.subr.mxu0 0.0
    %213 = vmatpush1.msra.mxu0 0.0
    %214 = vmatprep.subr.mxu0 0.0
    %215 = vmatpush1.msra.mxu0 0.0
    %216 = vmatprep.subr.mxu0 0.0
    %217 = vmatpush1.msra.mxu0 0.0
    %218 = vmatprep.subr.mxu0 0.0
    %219 = vmatpush1.msra.mxu0 0.0
    %220 = vmatprep.subr.mxu0 0.0
    %221 = vmatpush1.msra.mxu0 0.0
    %222 = vmatprep.subr.mxu0 0.0
    %223 = vmatpush1.msra.mxu0 0.0
    %224 = vmatprep.subr.mxu0 0.0
    %225 = vmatpush1.msra.mxu0 0.0
    %226 = vmatprep.mubr.f32.mxu0 0.0
    %227 = vmatmul.mubr.f32.gmra.mrb[0].mxu0 %v64
    %v228 = vpop.f32.mrb[0].mxu0
    %v229 = vadd.f32 0.0, %v228
    %v230 = vpop.f32.mrb[0].mxu0
    %v231 = vadd.f32 0.0, %v230
    %232 = vmatprep.mubr.f32.mxu0 0.0
    %233 = vmatmul.mubr.f32.gmra.mrb[0].mxu0 %v67
    %v234 = vpop.f32.mrb[0].mxu0
    %v235 = vadd.f32 0.0, %v234
    %v236 = vpop.f32.mrb[0].mxu0
    %v237 = vadd.f32 0.0, %v236
    %238 = vdwg.mxu0
    %239 = vmatprep.subr.mxu0 0.0
    %240 = vmatpush1.msra.mxu0 %v83
    %241 = vmatprep.subr.mxu0 0.0
    %242 = vmatpush1.msra.mxu0 0.0
    %243 = vmatprep.subr.mxu0 0.0
    %244 = vmatpush1.msra.mxu0 0.0
    %245 = vmatprep.subr.mxu0 0.0
    %246 = vmatpush1.msra.mxu0 0.0
    %247 = vmatprep.subr.mxu0 0.0
    %248 = vmatpush1.msra.mxu0 0.0
    %249 = vmatprep.subr.mxu0 0.0
    %250 = vmatpush1.msra.mxu0 0.0
    %251 = vmatprep.subr.mxu0 0.0
    %252 = vmatpush1.msra.mxu0 0.0
    %253 = vmatprep.subr.mxu0 0.0
    %254 = vmatpush1.msra.mxu0 0.0
    %255 = vmatprep.subr.mxu0 0.0
    %256 = vmatpush1.msra.mxu0 0.0
    %257 = vmatprep.subr.mxu0 0.0
    %258 = vmatpush1.msra.mxu0 0.0
    %259 = vmatprep.subr.mxu0 0.0
    %260 = vmatpush1.msra.mxu0 0.0
    %261 = vmatprep.subr.mxu0 0.0
    %262 = vmatpush1.msra.mxu0 0.0
    %263 = vmatprep.subr.mxu0 0.0
    %264 = vmatpush1.msra.mxu0 0.0
    %265 = vmatprep.subr.mxu0 0.0
    %266 = vmatpush1.msra.mxu0 0.0
    %267 = vmatprep.subr.mxu0 0.0
    %268 = vmatpush1.msra.mxu0 0.0
    %269 = vmatprep.subr.mxu0 0.0
    %270 = vmatpush1.msra.mxu0 0.0
    %271 = vmatprep.subr.mxu0 0.0
    %272 = vmatpush1.msra.mxu0 0.0
    %273 = vmatprep.subr.mxu0 0.0
    %274 = vmatpush1.msra.mxu0 0.0
    %275 = vmatprep.subr.mxu0 0.0
    %276 = vmatpush1.msra.mxu0 0.0
    %277 = vmatprep.subr.mxu0 0.0
    %278 = vmatpush1.msra.mxu0 0.0
    %279 = vmatprep.subr.mxu0 0.0
    %280 = vmatpush1.msra.mxu0 0.0
    %281 = vmatprep.subr.mxu0 0.0
    %282 = vmatpush1.msra.mxu0 0.0
    %283 = vmatprep.subr.mxu0 0.0
    %284 = vmatpush1.msra.mxu0 0.0
    %285 = vmatprep.subr.mxu0 0.0
    %286 = vmatpush1.msra.mxu0 0.0
    %287 = vmatprep.subr.mxu0 0.0
    %288 = vmatpush1.msra.mxu0 0.0
    %289 = vmatprep.subr.mxu0 0.0
    %290 = vmatpush1.msra.mxu0 0.0
    %291 = vmatprep.subr.mxu0 0.0
    %292 = vmatpush1.msra.mxu0 0.0
    %293 = vmatprep.subr.mxu0 0.0
    %294 = vmatpush1.msra.mxu0 0.0
    %295 = vmatprep.subr.mxu0 0.0
    %296 = vmatpush1.msra.mxu0 0.0
    %297 = vmatprep.subr.mxu0 0.0
    %298 = vmatpush1.msra.mxu0 0.0
    %299 = vmatprep.subr.mxu0 0.0
    %300 = vmatpush1.msra.mxu0 0.0
    %301 = vmatprep.subr.mxu0 0.0
    %302 = vmatpush1.msra.mxu0 0.0
    %303 = vmatprep.mubr.f32.mxu0 0.0
    %304 = vmatmul.mubr.f32.gmra.mrb[0].mxu0 %v64
    %v305 = vpop.f32.mrb[0].mxu0
    %v306 = vadd.f32 0.0, %v305
    %v307 = vpop.f32.mrb[0].mxu0
    %308 = vmatprep.mubr.f32.mxu0 0.0
    %309 = vmatmul.mubr.f32.gmra.mrb[0].mxu0 %v67
    %v310 = vpop.f32.mrb[0].mxu0
    %v311 = vadd.f32 0.0, %v310
    %v312 = vpop.f32.mrb[0].mxu0
    %313 = vdwg.mxu0
    %v314 = vld [vmem:[#allocation2] sm:$0x7]
    %vm315 = vcmask 23552
    %v317 = vsel %vm315, %v54, 0
    %vm319 = vcmask 1042432
    %v321 = vsel %vm319, %v314, 0
    %323 = vmatprep.subr.mxu0 0.0
    %324 = vmatpush1.msra.mxu0 %v321
    %325 = vmatprep.subr.mxu0 0.0
    %326 = vmatpush1.msra.mxu0 0.0
    %327 = vmatprep.subr.mxu0 0.0
    %328 = vmatpush1.msra.mxu0 0.0
    %329 = vmatprep.subr.mxu0 0.0
    %330 = vmatpush1.msra.mxu0 0.0
    %331 = vmatprep.subr.mxu0 0.0
    %332 = vmatpush1.msra.mxu0 0.0
    %333 = vmatprep.subr.mxu0 0.0
    %334 = vmatpush1.msra.mxu0 0.0
    %335 = vmatprep.subr.mxu0 0.0
    %336 = vmatpush1.msra.mxu0 0.0
    %337 = vmatprep.subr.mxu0 0.0
    %338 = vmatpush1.msra.mxu0 0.0
    %339 = vmatprep.subr.mxu0 0.0
    %340 = vmatpush1.msra.mxu0 0.0
    %341 = vmatprep.subr.mxu0 0.0
    %342 = vmatpush1.msra.mxu0 0.0
    %343 = vmatprep.subr.mxu0 0.0
    %344 = vmatpush1.msra.mxu0 0.0
    %345 = vmatprep.subr.mxu0 0.0
    %346 = vmatpush1.msra.mxu0 0.0
    %347 = vmatprep.subr.mxu0 0.0
    %348 = vmatpush1.msra.mxu0 0.0
    %349 = vmatprep.subr.mxu0 0.0
    %350 = vmatpush1.msra.mxu0 0.0
    %351 = vmatprep.subr.mxu0 0.0
    %352 = vmatpush1.msra.mxu0 0.0
    %353 = vmatprep.subr.mxu0 0.0
    %354 = vmatpush1.msra.mxu0 0.0
    %355 = vmatprep.subr.mxu0 0.0
    %356 = vmatpush1.msra.mxu0 0.0
    %357 = vmatprep.subr.mxu0 0.0
    %358 = vmatpush1.msra.mxu0 0.0
    %359 = vmatprep.subr.mxu0 0.0
    %360 = vmatpush1.msra.mxu0 0.0
    %361 = vmatprep.subr.mxu0 0.0
    %362 = vmatpush1.msra.mxu0 0.0
    %363 = vmatprep.subr.mxu0 0.0
    %364 = vmatpush1.msra.mxu0 0.0
    %365 = vmatprep.subr.mxu0 0.0
    %366 = vmatpush1.msra.mxu0 0.0
    %367 = vmatprep.subr.mxu0 0.0
    %368 = vmatpush1.msra.mxu0 0.0
    %369 = vmatprep.subr.mxu0 0.0
    %370 = vmatpush1.msra.mxu0 0.0
    %371 = vmatprep.subr.mxu0 0.0
    %372 = vmatpush1.msra.mxu0 0.0
    %373 = vmatprep.subr.mxu0 0.0
    %374 = vmatpush1.msra.mxu0 0.0
    %375 = vmatprep.subr.mxu0 0.0
    %376 = vmatpush1.msra.mxu0 0.0
    %377 = vmatprep.subr.mxu0 0.0
    %378 = vmatpush1.msra.mxu0 0.0
    %379 = vmatprep.subr.mxu0 0.0
    %380 = vmatpush1.msra.mxu0 0.0
    %381 = vmatprep.subr.mxu0 0.0
    %382 = vmatpush1.msra.mxu0 0.0
    %383 = vmatprep.subr.mxu0 0.0
    %384 = vmatpush1.msra.mxu0 0.0
    %385 = vmatprep.subr.mxu0 0.0
    %386 = vmatpush1.msra.mxu0 0.0
    %387 = vmatprep.mubr.f32.mxu0 0.0
    %388 = vmatmul.mubr.f32.gmra.mrb[0].mxu0 %v317
    %v389 = vpop.f32.mrb[0].mxu0
    %v390 = vadd.f32 0.0, %v389
    %v391 = vpop.f32.mrb[0].mxu0
    %392 = vdwg.mxu0
    %v393 = vld [vmem:[#allocation2 + $0x8] sm:$0xf]
    %v395 = vsel %vm62, %v55, 0
    %v398 = vsel %vm62, %v56, 0
    %v401 = vsel %vm69, %v393, 0
    %403 = vmatprep.subr.mxu0 0.0
    %404 = vmatpush1.msra.mxu0 %v401
    %405 = vmatprep.subr.mxu0 0.0
    %406 = vmatpush1.msra.mxu0 0.0
    %407 = vmatprep.subr.mxu0 0.0
    %408 = vmatpush1.msra.mxu0 0.0
    %409 = vmatprep.subr.mxu0 0.0
    %410 = vmatpush1.msra.mxu0 0.0
    %411 = vmatprep.subr.mxu0 0.0
    %412 = vmatpush1.msra.mxu0 0.0
    %413 = vmatprep.subr.mxu0 0.0
    %414 = vmatpush1.msra.mxu0 0.0
    %415 = vmatprep.subr.mxu0 0.0
    %416 = vmatpush1.msra.mxu0 0.0
    %417 = vmatprep.subr.mxu0 0.0
    %418 = vmatpush1.msra.mxu0 0.0
    %419 = vmatprep.subr.mxu0 0.0
    %420 = vmatpush1.msra.mxu0 0.0
    %421 = vmatprep.subr.mxu0 0.0
    %422 = vmatpush1.msra.mxu0 0.0
    %423 = vmatprep.subr.mxu0 0.0
    %424 = vmatpush1.msra.mxu0 0.0
    %425 = vmatprep.subr.mxu0 0.0
    %426 = vmatpush1.msra.mxu0 0.0
    %427 = vmatprep.subr.mxu0 0.0
    %428 = vmatpush1.msra.mxu0 0.0
    %429 = vmatprep.subr.mxu0 0.0
    %430 = vmatpush1.msra.mxu0 0.0
    %431 = vmatprep.subr.mxu0 0.0
    %432 = vmatpush1.msra.mxu0 0.0
    %433 = vmatprep.subr.mxu0 0.0
    %434 = vmatpush1.msra.mxu0 0.0
    %435 = vmatprep.subr.mxu0 0.0
    %436 = vmatpush1.msra.mxu0 0.0
    %437 = vmatprep.subr.mxu0 0.0
    %438 = vmatpush1.msra.mxu0 0.0
    %439 = vmatprep.subr.mxu0 0.0
    %440 = vmatpush1.msra.mxu0 0.0
    %441 = vmatprep.subr.mxu0 0.0
    %442 = vmatpush1.msra.mxu0 0.0
    %443 = vmatprep.subr.mxu0 0.0
    %444 = vmatpush1.msra.mxu0 0.0
    %445 = vmatprep.subr.mxu0 0.0
    %446 = vmatpush1.msra.mxu0 0.0
    %447 = vmatprep.subr.mxu0 0.0
    %448 = vmatpush1.msra.mxu0 0.0
    %449 = vmatprep.subr.mxu0 0.0
    %450 = vmatpush1.msra.mxu0 0.0
    %451 = vmatprep.subr.mxu0 0.0
    %452 = vmatpush1.msra.mxu0 0.0
    %453 = vmatprep.subr.mxu0 0.0
    %454 = vmatpush1.msra.mxu0 0.0
    %455 = vmatprep.subr.mxu0 0.0
    %456 = vmatpush1.msra.mxu0 0.0
    %457 = vmatprep.subr.mxu0 0.0
    %458 = vmatpush1.msra.mxu0 0.0
    %459 = vmatprep.subr.mxu0 0.0
    %460 = vmatpush1.msra.mxu0 0.0
    %461 = vmatprep.subr.mxu0 0.0
    %462 = vmatpush1.msra.mxu0 0.0
    %463 = vmatprep.subr.mxu0 0.0
    %464 = vmatpush1.msra.mxu0 0.0
    %465 = vmatprep.subr.mxu0 0.0
    %466 = vmatpush1.msra.mxu0 0.0
    %467 = vmatprep.mubr.f32.mxu0 0.0
    %468 = vmatmul.mubr.f32.gmra.mrb[0].mxu0 %v395
    %v469 = vpop.f32.mrb[0].mxu0
    %v470 = vadd.f32 0.0, %v469
    %v471 = vpop.f32.mrb[0].mxu0
    %472 = vmatprep.mubr.f32.mxu0 0.0
    %473 = vmatmul.mubr.f32.gmra.mrb[0].mxu0 %v398
    %v474 = vpop.f32.mrb[0].mxu0
    %v475 = vadd.f32 0.0, %v474
    %v476 = vpop.f32.mrb[0].mxu0
    %477 = vdwg.mxu0
    %v478 = vld [vmem:[#allocation5] sm:$0x1]
    %v481 = vcombine.high %v152, %v152
    %v483 = vunpack.c.l.s4 1966171168
    %v484 = vunpack.c.0.s8 %v483
    %v485 = vlaneseq
    %v486 = vshrl.u32 %v485, 7
    %v487 = vsub.s32 %v484, %v486
    %v488 = vrot.slane %v152, %v487
    %v490 = vunpack.c.l.s4 1966171168
    %v491 = vunpack.c.0.s8 %v490
    %v492 = vlaneseq
    %v493 = vshrl.u32 %v492, 7
    %v494 = vsub.s32 %v491, %v493
    %v495 = vrot.slane %v481, %v494
    %v496 = vcombine.high %v488, %v488
    %v497 = vcombine.high %v495, %v495
    %v499 = vunpack.c.l.s4 1966171168
    %v500 = vunpack.c.0.s8 %v499
    %v501 = vlaneseq
    %v502 = vshrl.u32 %v501, 7
    %v503 = vsub.s32 %v500, %v502
    %v504 = vrot.slane %v488, %v503
    %v506 = vunpack.c.l.s4 1966171168
    %v507 = vunpack.c.0.s8 %v506
    %v508 = vlaneseq
    %v509 = vshrl.u32 %v508, 7
    %v510 = vsub.s32 %v507, %v509
    %v511 = vrot.slane %v495, %v510
    %v513 = vunpack.c.l.s4 1966171168
    %v514 = vunpack.c.0.s8 %v513
    %v515 = vlaneseq
    %v516 = vshrl.u32 %v515, 7
    %v517 = vsub.s32 %v514, %v516
    %v518 = vrot.slane %v496, %v517
    %v520 = vunpack.c.l.s4 1966171168
    %v521 = vunpack.c.0.s8 %v520
    %v522 = vlaneseq
    %v523 = vshrl.u32 %v522, 7
    %v524 = vsub.s32 %v521, %v523
    %v525 = vrot.slane %v497, %v524
    %v526 = vcombine.high %v504, %v504
    %v527 = vcombine.high %v511, %v511
    %v528 = vcombine.high %v518, %v518
    %v529 = vcombine.high %v525, %v525
    %v530 = vcombine.high %v158, %v158
    %v532 = vunpack.c.l.s4 1966171168
    %v533 = vunpack.c.0.s8 %v532
    %v534 = vlaneseq
    %v535 = vshrl.u32 %v534, 7
    %v536 = vsub.s32 %v533, %v535
    %v537 = vrot.slane %v158, %v536
    %v539 = vunpack.c.l.s4 1966171168
    %v540 = vunpack.c.0.s8 %v539
    %v541 = vlaneseq
    %v542 = vshrl.u32 %v541, 7
    %v543 = vsub.s32 %v540, %v542
    %v544 = vrot.slane %v530, %v543
    %v545 = vcombine.high %v537, %v537
    %v546 = vcombine.high %v544, %v544
    %v548 = vunpack.c.l.s4 1966171168
    %v549 = vunpack.c.0.s8 %v548
    %v550 = vlaneseq
    %v551 = vshrl.u32 %v550, 7
    %v552 = vsub.s32 %v549, %v551
    %v553 = vrot.slane %v537, %v552
    %v555 = vunpack.c.l.s4 1966171168
    %v556 = vunpack.c.0.s8 %v555
    %v557 = vlaneseq
    %v558 = vshrl.u32 %v557, 7
    %v559 = vsub.s32 %v556, %v558
    %v560 = vrot.slane %v544, %v559
    %v562 = vunpack.c.l.s4 1966171168
    %v563 = vunpack.c.0.s8 %v562
    %v564 = vlaneseq
    %v565 = vshrl.u32 %v564, 7
    %v566 = vsub.s32 %v563, %v565
    %v567 = vrot.slane %v545, %v566
    %v569 = vunpack.c.l.s4 1966171168
    %v570 = vunpack.c.0.s8 %v569
    %v571 = vlaneseq
    %v572 = vshrl.u32 %v571, 7
    %v573 = vsub.s32 %v570, %v572
    %v574 = vrot.slane %v546, %v573
    %v575 = vcombine.high %v553, %v553
    %v576 = vcombine.high %v560, %v560
    %v577 = vcombine.high %v567, %v567
    %v578 = vcombine.high %v574, %v574
    %v579 = vlaneseq
    %v580 = vshrl.u32 %v579, 7
    %v581 = vsub.s32 0, %v580
    %v582 = vrot.slane %v504, %v581
    %v583 = vlaneseq
    %v584 = vshrl.u32 %v583, 7
    %v585 = vsub.s32 0, %v584
    %v586 = vrot.slane %v518, %v585
    %v587 = vlaneseq
    %v588 = vshrl.u32 %v587, 7
    %v589 = vsub.s32 0, %v588
    %v590 = vrot.slane %v526, %v589
    %v591 = vlaneseq
    %v592 = vshrl.u32 %v591, 7
    %v593 = vsub.s32 0, %v592
    %v594 = vrot.slane %v528, %v593
    %v595 = vlaneseq
    %v596 = vshrl.u32 %v595, 7
    %v597 = vsub.s32 0, %v596
    %v598 = vrot.slane %v511, %v597
    %v599 = vlaneseq
    %v600 = vshrl.u32 %v599, 7
    %v601 = vsub.s32 0, %v600
    %v602 = vrot.slane %v525, %v601
    %v603 = vlaneseq
    %v604 = vshrl.u32 %v603, 7
    %v605 = vsub.s32 0, %v604
    %v606 = vrot.slane %v527, %v605
    %v607 = vlaneseq
    %v608 = vshrl.u32 %v607, 7
    %v609 = vsub.s32 0, %v608
    %v610 = vrot.slane %v529, %v609
    %v611 = vlaneseq
    %v612 = vshrl.u32 %v611, 7
    %v613 = vsub.s32 0, %v612
    %v614 = vrot.slane %v553, %v613
    %v615 = vlaneseq
    %v616 = vshrl.u32 %v615, 7
    %v617 = vsub.s32 0, %v616
    %v618 = vrot.slane %v567, %v617
    %v619 = vlaneseq
    %v620 = vshrl.u32 %v619, 7
    %v621 = vsub.s32 0, %v620
    %v622 = vrot.slane %v575, %v621
    %v623 = vlaneseq
    %v624 = vshrl.u32 %v623, 7
    %v625 = vsub.s32 0, %v624
    %v626 = vrot.slane %v577, %v625
    %v627 = vlaneseq
    %v628 = vshrl.u32 %v627, 7
    %v629 = vsub.s32 0, %v628
    %v630 = vrot.slane %v560, %v629
    %v631 = vlaneseq
    %v632 = vshrl.u32 %v631, 7
    %v633 = vsub.s32 0, %v632
    %v634 = vrot.slane %v574, %v633
    %v635 = vlaneseq
    %v636 = vshrl.u32 %v635, 7
    %v637 = vsub.s32 0, %v636
    %v638 = vrot.slane %v576, %v637
    %v639 = vlaneseq
    %v640 = vshrl.u32 %v639, 7
    %v641 = vsub.s32 0, %v640
    %v642 = vrot.slane %v578, %v641
    %v659 = vadd.f32 %v582, %v154
    %v660 = vadd.f32 %v586, %v154
    %v661 = vadd.f32 %v590, %v154
    %v662 = vadd.f32 %v594, %v154
    %v663 = vadd.f32 %v598, %v154
    %v664 = vadd.f32 %v602, %v154
    %v665 = vadd.f32 %v606, %v154
    %v666 = vadd.f32 %v610, %v154
    %v667 = vadd.f32 %v614, %v160
    %v668 = vadd.f32 %v618, %v160
    %v669 = vadd.f32 %v622, %v160
    %v670 = vadd.f32 %v626, %v160
    %v671 = vadd.f32 %v630, %v160
    %v672 = vadd.f32 %v634, %v160
    %v673 = vadd.f32 %v638, %v160
    %v674 = vadd.f32 %v642, %v160
    %v675 = vlaneseq
    %v676 = vshrl.u32 %v675, 7
    %v677 = vsub.s32 0, %v676
    %v678 = vrot.slane %v478, %v677
    %v679 = vadd.f32 %v659, %v678
    %v680 = vadd.f32 %v660, %v678
    %v681 = vadd.f32 %v661, %v678
    %v682 = vadd.f32 %v662, %v678
    %v683 = vadd.f32 %v663, %v678
    %v684 = vadd.f32 %v664, %v678
    %v685 = vadd.f32 %v665, %v678
    %v686 = vadd.f32 %v666, %v678
    %v687 = vadd.f32 %v667, %v678
    %v688 = vadd.f32 %v668, %v678
    %v689 = vadd.f32 %v669, %v678
    %v690 = vadd.f32 %v670, %v678
    %v691 = vadd.f32 %v671, %v678
    %v692 = vadd.f32 %v672, %v678
    %v693 = vadd.f32 %v673, %v678
    %v694 = vadd.f32 %v674, %v678
    %v695 = vmax.f32 %v679, 0.0
    %v696 = vmax.f32 %v680, 0.0
    %v697 = vmax.f32 %v681, 0.0
    %v698 = vmax.f32 %v682, 0.0
    %v699 = vmax.f32 %v683, 0.0
    %v700 = vmax.f32 %v684, 0.0
    %v701 = vmax.f32 %v685, 0.0
    %v702 = vmax.f32 %v686, 0.0
    %v703 = vmax.f32 %v687, 0.0
    %v704 = vmax.f32 %v688, 0.0
    %v705 = vmax.f32 %v689, 0.0
    %v706 = vmax.f32 %v690, 0.0
    %v707 = vmax.f32 %v691, 0.0
    %v708 = vmax.f32 %v692, 0.0
    %v709 = vmax.f32 %v693, 0.0
    %v710 = vmax.f32 %v694, 0.0
    %v711 = vld [vmem:[#allocation2 + $0x10] sm:$0xff]
    %v712 = vld [vmem:[#allocation2 + $0x18] sm:$0xff]
    %v713 = vld [vmem:[#allocation2 + $0x20] sm:$0xff]
    %v714 = vld [vmem:[#allocation2 + $0x28] sm:$0xff]
    %v715 = vld [vmem:[#allocation2 + $0x30] sm:$0xff]
    %v716 = vld [vmem:[#allocation2 + $0x38] sm:$0xff]
    %v717 = vld [vmem:[#allocation2 + $0x40] sm:$0xff]
    %v718 = vld [vmem:[#allocation2 + $0x48] sm:$0xff]
    %v719 = vld [vmem:[#allocation2 + $0x50] sm:$0xff]
    %v720 = vld [vmem:[#allocation2 + $0x58] sm:$0xff]
    %v721 = vld [vmem:[#allocation2 + $0x60] sm:$0xff]
    %v722 = vld [vmem:[#allocation2 + $0x68] sm:$0xff]
    %v723 = vld [vmem:[#allocation2 + $0x70] sm:$0xff]
    %v724 = vld [vmem:[#allocation2 + $0x78] sm:$0xff]
    %v725 = vld [vmem:[#allocation2 + $0x80] sm:$0xff]
    %v726 = vld [vmem:[#allocation2 + $0x88] sm:$0xff]
    %v727 = vld [vmem:[#allocation5 + $0x8] sm:$0x1]
    %v728 = vlaneseq
    %v729 = vshrl.u32 %v728, 7
    %v730 = vsub.s32 0, %v729
    %v731 = vrot.slane %v727, %v730
    %732 = vmatprep.subr.mxu0 0.0
    %733 = vmatpush1.msra.mxu0 %v711
    %734 = vmatprep.subr.mxu0 0.0
    %735 = vmatpush1.msra.mxu0 %v712
    %736 = vmatprep.subr.mxu0 0.0
    %737 = vmatpush1.msra.mxu0 %v713
    %738 = vmatprep.subr.mxu0 0.0
    %739 = vmatpush1.msra.mxu0 %v714
    %740 = vmatprep.subr.mxu0 0.0
    %741 = vmatpush1.msra.mxu0 %v715
    %742 = vmatprep.subr.mxu0 0.0
    %743 = vmatpush1.msra.mxu0 %v716
    %744 = vmatprep.subr.mxu0 0.0
    %745 = vmatpush1.msra.mxu0 %v717
    %746 = vmatprep.subr.mxu0 0.0
    %747 = vmatpush1.msra.mxu0 %v718
    %748 = vmatprep.subr.mxu0 0.0
    %749 = vmatpush1.msra.mxu0 %v719
    %750 = vmatprep.subr.mxu0 0.0
    %751 = vmatpush1.msra.mxu0 %v720
    %752 = vmatprep.subr.mxu0 0.0
    %753 = vmatpush1.msra.mxu0 %v721
    %754 = vmatprep.subr.mxu0 0.0
    %755 = vmatpush1.msra.mxu0 %v722
    %756 = vmatprep.subr.mxu0 0.0
    %757 = vmatpush1.msra.mxu0 %v723
    %758 = vmatprep.subr.mxu0 0.0
    %759 = vmatpush1.msra.mxu0 %v724
    %760 = vmatprep.subr.mxu0 0.0
    %761 = vmatpush1.msra.mxu0 %v725
    %762 = vmatprep.subr.mxu0 0.0
    %763 = vmatpush1.msra.mxu0 %v726
    %764 = vmatprep.subr.mxu0 0.0
    %765 = vmatpush1.msra.mxu0 0.0
    %766 = vmatprep.subr.mxu0 0.0
    %767 = vmatpush1.msra.mxu0 0.0
    %768 = vmatprep.subr.mxu0 0.0
    %769 = vmatpush1.msra.mxu0 0.0
    %770 = vmatprep.subr.mxu0 0.0
    %771 = vmatpush1.msra.mxu0 0.0
    %772 = vmatprep.subr.mxu0 0.0
    %773 = vmatpush1.msra.mxu0 0.0
    %774 = vmatprep.subr.mxu0 0.0
    %775 = vmatpush1.msra.mxu0 0.0
    %776 = vmatprep.subr.mxu0 0.0
    %777 = vmatpush1.msra.mxu0 0.0
    %778 = vmatprep.subr.mxu0 0.0
    %779 = vmatpush1.msra.mxu0 0.0
    %780 = vmatprep.subr.mxu0 0.0
    %781 = vmatpush1.msra.mxu0 0.0
    %782 = vmatprep.subr.mxu0 0.0
    %783 = vmatpush1.msra.mxu0 0.0
    %784 = vmatprep.subr.mxu0 0.0
    %785 = vmatpush1.msra.mxu0 0.0
    %786 = vmatprep.subr.mxu0 0.0
    %787 = vmatpush1.msra.mxu0 0.0
    %788 = vmatprep.subr.mxu0 0.0
    %789 = vmatpush1.msra.mxu0 0.0
    %790 = vmatprep.subr.mxu0 0.0
    %791 = vmatpush1.msra.mxu0 0.0
    %792 = vmatprep.subr.mxu0 0.0
    %793 = vmatpush1.msra.mxu0 0.0
    %794 = vmatprep.subr.mxu0 0.0
    %795 = vmatpush1.msra.mxu0 0.0
    %796 = vmatprep.mubr.f32.mxu0 0.0
    %797 = vmatmul.mubr.f32.gmra.mrb[0].mxu0 %v695
    %v798 = vpop.f32.mrb[0].mxu0
    %v799 = vadd.f32 %v731, %v798
    %v800 = vpop.f32.mrb[0].mxu0
    %801 = vmatprep.mubr.f32.mxu0 0.0
    %802 = vmatmul.mubr.f32.gmra.mrb[0].mxu0 %v696
    %v803 = vpop.f32.mrb[0].mxu0
    %v804 = vadd.f32 %v731, %v803
    %v805 = vpop.f32.mrb[0].mxu0
    %806 = vmatprep.mubr.f32.mxu0 0.0
    %807 = vmatmul.mubr.f32.gmra.mrb[0].mxu0 %v697
    %v808 = vpop.f32.mrb[0].mxu0
    %v809 = vadd.f32 %v731, %v808
    %v810 = vpop.f32.mrb[0].mxu0
    %811 = vmatprep.mubr.f32.mxu0 0.0
    %812 = vmatmul.mubr.f32.gmra.mrb[0].mxu0 %v698
    %v813 = vpop.f32.mrb[0].mxu0
    %v814 = vadd.f32 %v731, %v813
    %v815 = vpop.f32.mrb[0].mxu0
    %816 = vmatprep.mubr.f32.mxu0 0.0
    %817 = vmatmul.mubr.f32.gmra.mrb[0].mxu0 %v699
    %v818 = vpop.f32.mrb[0].mxu0
    %v819 = vadd.f32 %v731, %v818
    %v820 = vpop.f32.mrb[0].mxu0
    %821 = vmatprep.mubr.f32.mxu0 0.0
    %822 = vmatmul.mubr.f32.gmra.mrb[0].mxu0 %v700
    %v823 = vpop.f32.mrb[0].mxu0
    %v824 = vadd.f32 %v731, %v823
    %v825 = vpop.f32.mrb[0].mxu0
    %826 = vmatprep.mubr.f32.mxu0 0.0
    %827 = vmatmul.mubr.f32.gmra.mrb[0].mxu0 %v701
    %v828 = vpop.f32.mrb[0].mxu0
    %v829 = vadd.f32 %v731, %v828
    %v830 = vpop.f32.mrb[0].mxu0
    %831 = vmatprep.mubr.f32.mxu0 0.0
    %832 = vmatmul.mubr.f32.gmra.mrb[0].mxu0 %v702
    %v833 = vpop.f32.mrb[0].mxu0
    %v834 = vadd.f32 %v731, %v833
    %v835 = vpop.f32.mrb[0].mxu0
    %836 = vmatprep.mubr.f32.mxu0 0.0
    %837 = vmatmul.mubr.f32.gmra.mrb[0].mxu0 %v703
    %v838 = vpop.f32.mrb[0].mxu0
    %v839 = vadd.f32 %v731, %v838
    %v840 = vpop.f32.mrb[0].mxu0
    %841 = vmatprep.mubr.f32.mxu0 0.0
    %842 = vmatmul.mubr.f32.gmra.mrb[0].mxu0 %v704
    %v843 = vpop.f32.mrb[0].mxu0
    %v844 = vadd.f32 %v731, %v843
    %v845 = vpop.f32.mrb[0].mxu0
    %846 = vmatprep.mubr.f32.mxu0 0.0
    %847 = vmatmul.mubr.f32.gmra.mrb[0].mxu0 %v705
    %v848 = vpop.f32.mrb[0].mxu0
    %v849 = vadd.f32 %v731, %v848
    %v850 = vpop.f32.mrb[0].mxu0
    %851 = vmatprep.mubr.f32.mxu0 0.0
    %852 = vmatmul.mubr.f32.gmra.mrb[0].mxu0 %v706
    %v853 = vpop.f32.mrb[0].mxu0
    %v854 = vadd.f32 %v731, %v853
    %v855 = vpop.f32.mrb[0].mxu0
    %856 = vmatprep.mubr.f32.mxu0 0.0
    %857 = vmatmul.mubr.f32.gmra.mrb[0].mxu0 %v707
    %v858 = vpop.f32.mrb[0].mxu0
    %v859 = vadd.f32 %v731, %v858
    %v860 = vpop.f32.mrb[0].mxu0
    %861 = vmatprep.mubr.f32.mxu0 0.0
    %862 = vmatmul.mubr.f32.gmra.mrb[0].mxu0 %v708
    %v863 = vpop.f32.mrb[0].mxu0
    %v864 = vadd.f32 %v731, %v863
    %v865 = vpop.f32.mrb[0].mxu0
    %866 = vmatprep.mubr.f32.mxu0 0.0
    %867 = vmatmul.mubr.f32.gmra.mrb[0].mxu0 %v709
    %v868 = vpop.f32.mrb[0].mxu0
    %v869 = vadd.f32 %v731, %v868
    %v870 = vpop.f32.mrb[0].mxu0
    %871 = vmatprep.mubr.f32.mxu0 0.0
    %872 = vmatmul.mubr.f32.gmra.mrb[0].mxu0 %v710
    %v873 = vpop.f32.mrb[0].mxu0
    %v874 = vadd.f32 %v731, %v873
    %v875 = vpop.f32.mrb[0].mxu0
    %876 = vdwg.mxu0
    %v877 = vmax.f32 %v799, 0.0
    %v878 = vmax.f32 %v804, 0.0
    %v879 = vmax.f32 %v809, 0.0
    %v880 = vmax.f32 %v814, 0.0
    %v881 = vmax.f32 %v819, 0.0
    %v882 = vmax.f32 %v824, 0.0
    %v883 = vmax.f32 %v829, 0.0
    %v884 = vmax.f32 %v834, 0.0
    %v885 = vmax.f32 %v839, 0.0
    %v886 = vmax.f32 %v844, 0.0
    %v887 = vmax.f32 %v849, 0.0
    %v888 = vmax.f32 %v854, 0.0
    %v889 = vmax.f32 %v859, 0.0
    %v890 = vmax.f32 %v864, 0.0
    %v891 = vmax.f32 %v869, 0.0
    %v892 = vmax.f32 %v874, 0.0
    %v893 = vld [vmem:[#allocation2 + $0x90] sm:$0xff]
    %v894 = vld [vmem:[#allocation2 + $0x98] sm:$0xff]
    %v895 = vld [vmem:[#allocation2 + $0xa0] sm:$0xff]
    %v896 = vld [vmem:[#allocation2 + $0xa8] sm:$0xff]
    %v897 = vld [vmem:[#allocation2 + $0xb0] sm:$0xff]
    %v898 = vld [vmem:[#allocation2 + $0xb8] sm:$0xff]
    %v899 = vld [vmem:[#allocation2 + $0xc0] sm:$0xff]
    %v900 = vld [vmem:[#allocation2 + $0xc8] sm:$0xff]
    %v901 = vld [vmem:[#allocation2 + $0xd0] sm:$0xff]
    %v902 = vld [vmem:[#allocation2 + $0xd8] sm:$0xff]
    %v903 = vld [vmem:[#allocation2 + $0xe0] sm:$0xff]
    %v904 = vld [vmem:[#allocation2 + $0xe8] sm:$0xff]
    %v905 = vld [vmem:[#allocation2 + $0xf0] sm:$0xff]
    %v906 = vld [vmem:[#allocation2 + $0xf8] sm:$0xff]
    %v907 = vld [vmem:[#allocation2 + $0x100] sm:$0xff]
    %v908 = vld [vmem:[#allocation2 + $0x108] sm:$0xff]
    %v909 = vld [vmem:[#allocation5 + $0x10] sm:$0x1]
    %v910 = vlaneseq
    %v911 = vshrl.u32 %v910, 7
    %v912 = vsub.s32 0, %v911
    %v913 = vrot.slane %v909, %v912
    %914 = vmatprep.subr.mxu0 0.0
    %915 = vmatpush1.msra.mxu0 %v893
    %916 = vmatprep.subr.mxu0 0.0
    %917 = vmatpush1.msra.mxu0 %v894
    %918 = vmatprep.subr.mxu0 0.0
    %919 = vmatpush1.msra.mxu0 %v895
    %920 = vmatprep.subr.mxu0 0.0
    %921 = vmatpush1.msra.mxu0 %v896
    %922 = vmatprep.subr.mxu0 0.0
    %923 = vmatpush1.msra.mxu0 %v897
    %924 = vmatprep.subr.mxu0 0.0
    %925 = vmatpush1.msra.mxu0 %v898
    %926 = vmatprep.subr.mxu0 0.0
    %927 = vmatpush1.msra.mxu0 %v899
    %928 = vmatprep.subr.mxu0 0.0
    %929 = vmatpush1.msra.mxu0 %v900
    %930 = vmatprep.subr.mxu0 0.0
    %931 = vmatpush1.msra.mxu0 %v901
    %932 = vmatprep.subr.mxu0 0.0
    %933 = vmatpush1.msra.mxu0 %v902
    %934 = vmatprep.subr.mxu0 0.0
    %935 = vmatpush1.msra.mxu0 %v903
    %936 = vmatprep.subr.mxu0 0.0
    %937 = vmatpush1.msra.mxu0 %v904
    %938 = vmatprep.subr.mxu0 0.0
    %939 = vmatpush1.msra.mxu0 %v905
    %940 = vmatprep.subr.mxu0 0.0
    %941 = vmatpush1.msra.mxu0 %v906
    %942 = vmatprep.subr.mxu0 0.0
    %943 = vmatpush1.msra.mxu0 %v907
    %944 = vmatprep.subr.mxu0 0.0
    %945 = vmatpush1.msra.mxu0 %v908
    %946 = vmatprep.subr.mxu0 0.0
    %947 = vmatpush1.msra.mxu0 0.0
    %948 = vmatprep.subr.mxu0 0.0
    %949 = vmatpush1.msra.mxu0 0.0
    %950 = vmatprep.subr.mxu0 0.0
    %951 = vmatpush1.msra.mxu0 0.0
    %952 = vmatprep.subr.mxu0 0.0
    %953 = vmatpush1.msra.mxu0 0.0
    %954 = vmatprep.subr.mxu0 0.0
    %955 = vmatpush1.msra.mxu0 0.0
    %956 = vmatprep.subr.mxu0 0.0
    %957 = vmatpush1.msra.mxu0 0.0
    %958 = vmatprep.subr.mxu0 0.0
    %959 = vmatpush1.msra.mxu0 0.0
    %960 = vmatprep.subr.mxu0 0.0
    %961 = vmatpush1.msra.mxu0 0.0
    %962 = vmatprep.subr.mxu0 0.0
    %963 = vmatpush1.msra.mxu0 0.0
    %964 = vmatprep.subr.mxu0 0.0
    %965 = vmatpush1.msra.mxu0 0.0
    %966 = vmatprep.subr.mxu0 0.0
    %967 = vmatpush1.msra.mxu0 0.0
    %968 = vmatprep.subr.mxu0 0.0
    %969 = vmatpush1.msra.mxu0 0.0
    %970 = vmatprep.subr.mxu0 0.0
    %971 = vmatpush1.msra.mxu0 0.0
    %972 = vmatprep.subr.mxu0 0.0
    %973 = vmatpush1.msra.mxu0 0.0
    %974 = vmatprep.subr.mxu0 0.0
    %975 = vmatpush1.msra.mxu0 0.0
    %976 = vmatprep.subr.mxu0 0.0
    %977 = vmatpush1.msra.mxu0 0.0
    %978 = vmatprep.mubr.f32.mxu0 0.0
    %979 = vmatmul.mubr.f32.gmra.mrb[0].mxu0 %v877
    %v980 = vpop.f32.mrb[0].mxu0
    %v981 = vadd.f32 %v913, %v980
    %v982 = vpop.f32.mrb[0].mxu0
    %983 = vmatprep.mubr.f32.mxu0 0.0
    %984 = vmatmul.mubr.f32.gmra.mrb[0].mxu0 %v878
    %v985 = vpop.f32.mrb[0].mxu0
    %v986 = vadd.f32 %v913, %v985
    %v987 = vpop.f32.mrb[0].mxu0
    %988 = vmatprep.mubr.f32.mxu0 0.0
    %989 = vmatmul.mubr.f32.gmra.mrb[0].mxu0 %v879
    %v990 = vpop.f32.mrb[0].mxu0
    %v991 = vadd.f32 %v913, %v990
    %v992 = vpop.f32.mrb[0].mxu0
    %993 = vmatprep.mubr.f32.mxu0 0.0
    %994 = vmatmul.mubr.f32.gmra.mrb[0].mxu0 %v880
    %v995 = vpop.f32.mrb[0].mxu0
    %v996 = vadd.f32 %v913, %v995
    %v997 = vpop.f32.mrb[0].mxu0
    %998 = vmatprep.mubr.f32.mxu0 0.0
    %999 = vmatmul.mubr.f32.gmra.mrb[0].mxu0 %v881
    %v1000 = vpop.f32.mrb[0].mxu0
    %v1001 = vadd.f32 %v913, %v1000
    %v1002 = vpop.f32.mrb[0].mxu0
    %1003 = vmatprep.mubr.f32.mxu0 0.0
    %1004 = vmatmul.mubr.f32.gmra.mrb[0].mxu0 %v882
    %v1005 = vpop.f32.mrb[0].mxu0
    %v1006 = vadd.f32 %v913, %v1005
    %v1007 = vpop.f32.mrb[0].mxu0
    %1008 = vmatprep.mubr.f32.mxu0 0.0
    %1009 = vmatmul.mubr.f32.gmra.mrb[0].mxu0 %v883
    %v1010 = vpop.f32.mrb[0].mxu0
    %v1011 = vadd.f32 %v913, %v1010
    %v1012 = vpop.f32.mrb[0].mxu0
    %1013 = vmatprep.mubr.f32.mxu0 0.0
    %1014 = vmatmul.mubr.f32.gmra.mrb[0].mxu0 %v884
    %v1015 = vpop.f32.mrb[0].mxu0
    %v1016 = vadd.f32 %v913, %v1015
    %v1017 = vpop.f32.mrb[0].mxu0
    %1018 = vmatprep.mubr.f32.mxu0 0.0
    %1019 = vmatmul.mubr.f32.gmra.mrb[0].mxu0 %v885
    %v1020 = vpop.f32.mrb[0].mxu0
    %v1021 = vadd.f32 %v913, %v1020
    %v1022 = vpop.f32.mrb[0].mxu0
    %1023 = vmatprep.mubr.f32.mxu0 0.0
    %1024 = vmatmul.mubr.f32.gmra.mrb[0].mxu0 %v886
    %v1025 = vpop.f32.mrb[0].mxu0
    %v1026 = vadd.f32 %v913, %v1025
    %v1027 = vpop.f32.mrb[0].mxu0
    %1028 = vmatprep.mubr.f32.mxu0 0.0
    %1029 = vmatmul.mubr.f32.gmra.mrb[0].mxu0 %v887
    %v1030 = vpop.f32.mrb[0].mxu0
    %v1031 = vadd.f32 %v913, %v1030
    %v1032 = vpop.f32.mrb[0].mxu0
    %1033 = vmatprep.mubr.f32.mxu0 0.0
    %1034 = vmatmul.mubr.f32.gmra.mrb[0].mxu0 %v888
    %v1035 = vpop.f32.mrb[0].mxu0
    %v1036 = vadd.f32 %v913, %v1035
    %v1037 = vpop.f32.mrb[0].mxu0
    %1038 = vmatprep.mubr.f32.mxu0 0.0
    %1039 = vmatmul.mubr.f32.gmra.mrb[0].mxu0 %v889
    %v1040 = vpop.f32.mrb[0].mxu0
    %v1041 = vadd.f32 %v913, %v1040
    %v1042 = vpop.f32.mrb[0].mxu0
    %1043 = vmatprep.mubr.f32.mxu0 0.0
    %1044 = vmatmul.mubr.f32.gmra.mrb[0].mxu0 %v890
    %v1045 = vpop.f32.mrb[0].mxu0
    %v1046 = vadd.f32 %v913, %v1045
    %v1047 = vpop.f32.mrb[0].mxu0
    %1048 = vmatprep.mubr.f32.mxu0 0.0
    %1049 = vmatmul.mubr.f32.gmra.mrb[0].mxu0 %v891
    %v1050 = vpop.f32.mrb[0].mxu0
    %v1051 = vadd.f32 %v913, %v1050
    %v1052 = vpop.f32.mrb[0].mxu0
    %1053 = vmatprep.mubr.f32.mxu0 0.0
    %1054 = vmatmul.mubr.f32.gmra.mrb[0].mxu0 %v892
    %v1055 = vpop.f32.mrb[0].mxu0
    %v1056 = vadd.f32 %v913, %v1055
    %v1057 = vpop.f32.mrb[0].mxu0
    %1058 = vdwg.mxu0
    %v1059 = vmax.f32 %v981, 0.0
    %v1060 = vmax.f32 %v986, 0.0
    %v1061 = vmax.f32 %v991, 0.0
    %v1062 = vmax.f32 %v996, 0.0
    %v1063 = vmax.f32 %v1001, 0.0
    %v1064 = vmax.f32 %v1006, 0.0
    %v1065 = vmax.f32 %v1011, 0.0
    %v1066 = vmax.f32 %v1016, 0.0
    %v1067 = vmax.f32 %v1021, 0.0
    %v1068 = vmax.f32 %v1026, 0.0
    %v1069 = vmax.f32 %v1031, 0.0
    %v1070 = vmax.f32 %v1036, 0.0
    %v1071 = vmax.f32 %v1041, 0.0
    %v1072 = vmax.f32 %v1046, 0.0
    %v1073 = vmax.f32 %v1051, 0.0
    %v1074 = vmax.f32 %v1056, 0.0
    %v1075 = vrot.slane %v1059, 4
    %v1076 = vadd.f32 %v1059, %v1075
    %v1077 = vrot.slane %v1076, 2
    %v1078 = vadd.f32 %v1076, %v1077
    %v1079 = vrot.slane %v1078, 1
    %v1080 = vadd.f32 %v1078, %v1079
    %v1081 = vrot.slane %v1060, 4
    %v1082 = vadd.f32 %v1060, %v1081
    %v1083 = vrot.slane %v1082, 2
    %v1084 = vadd.f32 %v1082, %v1083
    %v1085 = vrot.slane %v1084, 1
    %v1086 = vadd.f32 %v1084, %v1085
    %v1087 = vrot.slane %v1061, 4
    %v1088 = vadd.f32 %v1061, %v1087
    %v1089 = vrot.slane %v1088, 2
    %v1090 = vadd.f32 %v1088, %v1089
    %v1091 = vrot.slane %v1090, 1
    %v1092 = vadd.f32 %v1090, %v1091
    %v1093 = vrot.slane %v1062, 4
    %v1094 = vadd.f32 %v1062, %v1093
    %v1095 = vrot.slane %v1094, 2
    %v1096 = vadd.f32 %v1094, %v1095
    %v1097 = vrot.slane %v1096, 1
    %v1098 = vadd.f32 %v1096, %v1097
    %v1099 = vrot.slane %v1063, 4
    %v1100 = vadd.f32 %v1063, %v1099
    %v1101 = vrot.slane %v1100, 2
    %v1102 = vadd.f32 %v1100, %v1101
    %v1103 = vrot.slane %v1102, 1
    %v1104 = vadd.f32 %v1102, %v1103
    %v1105 = vrot.slane %v1064, 4
    %v1106 = vadd.f32 %v1064, %v1105
    %v1107 = vrot.slane %v1106, 2
    %v1108 = vadd.f32 %v1106, %v1107
    %v1109 = vrot.slane %v1108, 1
    %v1110 = vadd.f32 %v1108, %v1109
    %v1111 = vrot.slane %v1065, 4
    %v1112 = vadd.f32 %v1065, %v1111
    %v1113 = vrot.slane %v1112, 2
    %v1114 = vadd.f32 %v1112, %v1113
    %v1115 = vrot.slane %v1114, 1
    %v1116 = vadd.f32 %v1114, %v1115
    %v1117 = vrot.slane %v1066, 4
    %v1118 = vadd.f32 %v1066, %v1117
    %v1119 = vrot.slane %v1118, 2
    %v1120 = vadd.f32 %v1118, %v1119
    %v1121 = vrot.slane %v1120, 1
    %v1122 = vadd.f32 %v1120, %v1121
    %v1123 = vrot.slane %v1067, 4
    %v1124 = vadd.f32 %v1067, %v1123
    %v1125 = vrot.slane %v1124, 2
    %v1126 = vadd.f32 %v1124, %v1125
    %v1127 = vrot.slane %v1126, 1
    %v1128 = vadd.f32 %v1126, %v1127
    %v1129 = vrot.slane %v1068, 4
    %v1130 = vadd.f32 %v1068, %v1129
    %v1131 = vrot.slane %v1130, 2
    %v1132 = vadd.f32 %v1130, %v1131
    %v1133 = vrot.slane %v1132, 1
    %v1134 = vadd.f32 %v1132, %v1133
    %v1135 = vrot.slane %v1069, 4
    %v1136 = vadd.f32 %v1069, %v1135
    %v1137 = vrot.slane %v1136, 2
    %v1138 = vadd.f32 %v1136, %v1137
    %v1139 = vrot.slane %v1138, 1
    %v1140 = vadd.f32 %v1138, %v1139
    %v1141 = vrot.slane %v1070, 4
    %v1142 = vadd.f32 %v1070, %v1141
    %v1143 = vrot.slane %v1142, 2
    %v1144 = vadd.f32 %v1142, %v1143
    %v1145 = vrot.slane %v1144, 1
    %v1146 = vadd.f32 %v1144, %v1145
    %v1147 = vrot.slane %v1071, 4
    %v1148 = vadd.f32 %v1071, %v1147
    %v1149 = vrot.slane %v1148, 2
    %v1150 = vadd.f32 %v1148, %v1149
    %v1151 = vrot.slane %v1150, 1
    %v1152 = vadd.f32 %v1150, %v1151
    %v1153 = vrot.slane %v1072, 4
    %v1154 = vadd.f32 %v1072, %v1153
    %v1155 = vrot.slane %v1154, 2
    %v1156 = vadd.f32 %v1154, %v1155
    %v1157 = vrot.slane %v1156, 1
    %v1158 = vadd.f32 %v1156, %v1157
    %v1159 = vrot.slane %v1073, 4
    %v1160 = vadd.f32 %v1073, %v1159
    %v1161 = vrot.slane %v1160, 2
    %v1162 = vadd.f32 %v1160, %v1161
    %v1163 = vrot.slane %v1162, 1
    %v1164 = vadd.f32 %v1162, %v1163
    %v1165 = vrot.slane %v1074, 4
    %v1166 = vadd.f32 %v1074, %v1165
    %v1167 = vrot.slane %v1166, 2
    %v1168 = vadd.f32 %v1166, %v1167
    %v1169 = vrot.slane %v1168, 1
    %v1170 = vadd.f32 %v1168, %v1169
    %v1171 = vadd.f32 %v1080, 0.0
    %v1172 = vadd.f32 %v1086, 0.0
    %v1173 = vadd.f32 %v1092, 0.0
    %v1174 = vadd.f32 %v1098, 0.0
    %v1175 = vadd.f32 %v1104, 0.0
    %v1176 = vadd.f32 %v1110, 0.0
    %v1177 = vadd.f32 %v1116, 0.0
    %v1178 = vadd.f32 %v1122, 0.0
    %v1179 = vadd.f32 %v1128, 0.0
    %v1180 = vadd.f32 %v1134, 0.0
    %v1181 = vadd.f32 %v1140, 0.0
    %v1182 = vadd.f32 %v1146, 0.0
    %v1183 = vadd.f32 %v1152, 0.0
    %v1184 = vadd.f32 %v1158, 0.0
    %v1185 = vadd.f32 %v1164, 0.0
    %v1186 = vadd.f32 %v1170, 0.0
    %v1187 = vadd.f32 %v152, %v154
    %v1188 = vadd.f32 %v158, %v160
    %v1189 = vadd.f32 %v1187, %v678
    %v1190 = vadd.f32 %v1188, %v678
    %v1191 = vmax.f32 %v1189, 0.0
    %v1192 = vmax.f32 %v1190, 0.0
    %1193 = vmatprep.subr.mxu0 0.0
    %1194 = vmatpush1.msra.mxu0 %v711
    %1195 = vmatprep.subr.mxu0 0.0
    %1196 = vmatpush1.msra.mxu0 %v712
    %1197 = vmatprep.subr.mxu0 0.0
    %1198 = vmatpush1.msra.mxu0 %v713
    %1199 = vmatprep.subr.mxu0 0.0
    %1200 = vmatpush1.msra.mxu0 %v714
    %1201 = vmatprep.subr.mxu0 0.0
    %1202 = vmatpush1.msra.mxu0 %v715
    %1203 = vmatprep.subr.mxu0 0.0
    %1204 = vmatpush1.msra.mxu0 %v716
    %1205 = vmatprep.subr.mxu0 0.0
    %1206 = vmatpush1.msra.mxu0 %v717
    %1207 = vmatprep.subr.mxu0 0.0
    %1208 = vmatpush1.msra.mxu0 %v718
    %1209 = vmatprep.subr.mxu0 0.0
    %1210 = vmatpush1.msra.mxu0 %v719
    %1211 = vmatprep.subr.mxu0 0.0
    %1212 = vmatpush1.msra.mxu0 %v720
    %1213 = vmatprep.subr.mxu0 0.0
    %1214 = vmatpush1.msra.mxu0 %v721
    %1215 = vmatprep.subr.mxu0 0.0
    %1216 = vmatpush1.msra.mxu0 %v722
    %1217 = vmatprep.subr.mxu0 0.0
    %1218 = vmatpush1.msra.mxu0 %v723
    %1219 = vmatprep.subr.mxu0 0.0
    %1220 = vmatpush1.msra.mxu0 %v724
    %1221 = vmatprep.subr.mxu0 0.0
    %1222 = vmatpush1.msra.mxu0 %v725
    %1223 = vmatprep.subr.mxu0 0.0
    %1224 = vmatpush1.msra.mxu0 %v726
    %1225 = vmatprep.subr.mxu0 0.0
    %1226 = vmatpush1.msra.mxu0 0.0
    %1227 = vmatprep.subr.mxu0 0.0
    %1228 = vmatpush1.msra.mxu0 0.0
    %1229 = vmatprep.subr.mxu0 0.0
    %1230 = vmatpush1.msra.mxu0 0.0
    %1231 = vmatprep.subr.mxu0 0.0
    %1232 = vmatpush1.msra.mxu0 0.0
    %1233 = vmatprep.subr.mxu0 0.0
    %1234 = vmatpush1.msra.mxu0 0.0
    %1235 = vmatprep.subr.mxu0 0.0
    %1236 = vmatpush1.msra.mxu0 0.0
    %1237 = vmatprep.subr.mxu0 0.0
    %1238 = vmatpush1.msra.mxu0 0.0
    %1239 = vmatprep.subr.mxu0 0.0
    %1240 = vmatpush1.msra.mxu0 0.0
    %1241 = vmatprep.subr.mxu0 0.0
    %1242 = vmatpush1.msra.mxu0 0.0
    %1243 = vmatprep.subr.mxu0 0.0
    %1244 = vmatpush1.msra.mxu0 0.0
    %1245 = vmatprep.subr.mxu0 0.0
    %1246 = vmatpush1.msra.mxu0 0.0
    %1247 = vmatprep.subr.mxu0 0.0
    %1248 = vmatpush1.msra.mxu0 0.0
    %1249 = vmatprep.subr.mxu0 0.0
    %1250 = vmatpush1.msra.mxu0 0.0
    %1251 = vmatprep.subr.mxu0 0.0
    %1252 = vmatpush1.msra.mxu0 0.0
    %1253 = vmatprep.subr.mxu0 0.0
    %1254 = vmatpush1.msra.mxu0 0.0
    %1255 = vmatprep.subr.mxu0 0.0
    %1256 = vmatpush1.msra.mxu0 0.0
    %1257 = vmatprep.mubr.f32.mxu0 0.0
    %1258 = vmatmul.mubr.f32.gmra.mrb[0].mxu0 %v1191
    %v1259 = vpop.f32.mrb[0].mxu0
    %v1260 = vadd.f32 %v731, %v1259
    %v1261 = vpop.f32.mrb[0].mxu0
    %1262 = vmatprep.mubr.f32.mxu0 0.0
    %1263 = vmatmul.mubr.f32.gmra.mrb[0].mxu0 %v1192
    %v1264 = vpop.f32.mrb[0].mxu0
    %v1265 = vadd.f32 %v731, %v1264
    %v1266 = vpop.f32.mrb[0].mxu0
    %1267 = vdwg.mxu0
    %v1268 = vmax.f32 %v1260, 0.0
    %v1269 = vmax.f32 %v1265, 0.0
    %1270 = vmatprep.subr.mxu0 0.0
    %1271 = vmatpush1.msra.mxu0 %v893
    %1272 = vmatprep.subr.mxu0 0.0
    %1273 = vmatpush1.msra.mxu0 %v894
    %1274 = vmatprep.subr.mxu0 0.0
    %1275 = vmatpush1.msra.mxu0 %v895
    %1276 = vmatprep.subr.mxu0 0.0
    %1277 = vmatpush1.msra.mxu0 %v896
    %1278 = vmatprep.subr.mxu0 0.0
    %1279 = vmatpush1.msra.mxu0 %v897
    %1280 = vmatprep.subr.mxu0 0.0
    %1281 = vmatpush1.msra.mxu0 %v898
    %1282 = vmatprep.subr.mxu0 0.0
    %1283 = vmatpush1.msra.mxu0 %v899
    %1284 = vmatprep.subr.mxu0 0.0
    %1285 = vmatpush1.msra.mxu0 %v900
    %1286 = vmatprep.subr.mxu0 0.0
    %1287 = vmatpush1.msra.mxu0 %v901
    %1288 = vmatprep.subr.mxu0 0.0
    %1289 = vmatpush1.msra.mxu0 %v902
    %1290 = vmatprep.subr.mxu0 0.0
    %1291 = vmatpush1.msra.mxu0 %v903
    %1292 = vmatprep.subr.mxu0 0.0
    %1293 = vmatpush1.msra.mxu0 %v904
    %1294 = vmatprep.subr.mxu0 0.0
    %1295 = vmatpush1.msra.mxu0 %v905
    %1296 = vmatprep.subr.mxu0 0.0
    %1297 = vmatpush1.msra.mxu0 %v906
    %1298 = vmatprep.subr.mxu0 0.0
    %1299 = vmatpush1.msra.mxu0 %v907
    %1300 = vmatprep.subr.mxu0 0.0
    %1301 = vmatpush1.msra.mxu0 %v908
    %1302 = vmatprep.subr.mxu0 0.0
    %1303 = vmatpush1.msra.mxu0 0.0
    %1304 = vmatprep.subr.mxu0 0.0
    %1305 = vmatpush1.msra.mxu0 0.0
    %1306 = vmatprep.subr.mxu0 0.0
    %1307 = vmatpush1.msra.mxu0 0.0
    %1308 = vmatprep.subr.mxu0 0.0
    %1309 = vmatpush1.msra.mxu0 0.0
    %1310 = vmatprep.subr.mxu0 0.0
    %1311 = vmatpush1.msra.mxu0 0.0
    %1312 = vmatprep.subr.mxu0 0.0
    %1313 = vmatpush1.msra.mxu0 0.0
    %1314 = vmatprep.subr.mxu0 0.0
    %1315 = vmatpush1.msra.mxu0 0.0
    %1316 = vmatprep.subr.mxu0 0.0
    %1317 = vmatpush1.msra.mxu0 0.0
    %1318 = vmatprep.subr.mxu0 0.0
    %1319 = vmatpush1.msra.mxu0 0.0
    %1320 = vmatprep.subr.mxu0 0.0
    %1321 = vmatpush1.msra.mxu0 0.0
    %1322 = vmatprep.subr.mxu0 0.0
    %1323 = vmatpush1.msra.mxu0 0.0
    %1324 = vmatprep.subr.mxu0 0.0
    %1325 = vmatpush1.msra.mxu0 0.0
    %1326 = vmatprep.subr.mxu0 0.0
    %1327 = vmatpush1.msra.mxu0 0.0
    %1328 = vmatprep.subr.mxu0 0.0
    %1329 = vmatpush1.msra.mxu0 0.0
    %1330 = vmatprep.subr.mxu0 0.0
    %1331 = vmatpush1.msra.mxu0 0.0
    %1332 = vmatprep.subr.mxu0 0.0
    %1333 = vmatpush1.msra.mxu0 0.0
    %1334 = vmatprep.mubr.f32.mxu0 0.0
    %1335 = vmatmul.mubr.f32.gmra.mrb[0].mxu0 %v1268
    %v1336 = vpop.f32.mrb[0].mxu0
    %v1337 = vadd.f32 %v913, %v1336
    %v1338 = vpop.f32.mrb[0].mxu0
    %1339 = vmatprep.mubr.f32.mxu0 0.0
    %1340 = vmatmul.mubr.f32.gmra.mrb[0].mxu0 %v1269
    %v1341 = vpop.f32.mrb[0].mxu0
    %v1342 = vadd.f32 %v913, %v1341
    %v1343 = vpop.f32.mrb[0].mxu0
    %1344 = vdwg.mxu0
    %v1345 = vmax.f32 %v1337, 0.0
    %v1346 = vmax.f32 %v1342, 0.0
    %v1349 = vrot.slane %v1345, 1
    %v1350 = vrot.slane %v1345, 2
    %v1351 = vrot.slane %v1345, 3
    %v1352 = vrot.slane %v1345, 4
    %v1353 = vrot.slane %v1345, 5
    %v1354 = vrot.slane %v1345, 6
    %v1355 = vrot.slane %v1345, 7
    %v1356 = vrot.slane %v1346, 1
    %v1357 = vrot.slane %v1346, 2
    %v1358 = vrot.slane %v1346, 3
    %v1359 = vrot.slane %v1346, 4
    %v1360 = vrot.slane %v1346, 5
    %v1361 = vrot.slane %v1346, 6
    %v1362 = vrot.slane %v1346, 7
    %v1379 = vsub.f32 %v1171, %v1345
    %v1380 = vsub.f32 %v1172, %v1349
    %v1381 = vsub.f32 %v1173, %v1350
    %v1382 = vsub.f32 %v1174, %v1351
    %v1383 = vsub.f32 %v1175, %v1352
    %v1384 = vsub.f32 %v1176, %v1353
    %v1385 = vsub.f32 %v1177, %v1354
    %v1386 = vsub.f32 %v1178, %v1355
    %v1387 = vsub.f32 %v1179, %v1346
    %v1388 = vsub.f32 %v1180, %v1356
    %v1389 = vsub.f32 %v1181, %v1357
    %v1390 = vsub.f32 %v1182, %v1358
    %v1391 = vsub.f32 %v1183, %v1359
    %v1392 = vsub.f32 %v1184, %v1360
    %v1393 = vsub.f32 %v1185, %v1361
    %v1394 = vsub.f32 %v1186, %v1362
    %v1395 = vld [vmem:[#allocation5 + $0x18] sm:$0x1]
    %v1398 = vcombine.high %v229, %v229
    %v1400 = vunpack.c.l.s4 1966171168
    %v1401 = vunpack.c.0.s8 %v1400
    %v1402 = vlaneseq
    %v1403 = vshrl.u32 %v1402, 7
    %v1404 = vsub.s32 %v1401, %v1403
    %v1405 = vrot.slane %v229, %v1404
    %v1407 = vunpack.c.l.s4 1966171168
    %v1408 = vunpack.c.0.s8 %v1407
    %v1409 = vlaneseq
    %v1410 = vshrl.u32 %v1409, 7
    %v1411 = vsub.s32 %v1408, %v1410
    %v1412 = vrot.slane %v1398, %v1411
    %v1413 = vcombine.high %v1405, %v1405
    %v1414 = vcombine.high %v1412, %v1412
    %v1416 = vunpack.c.l.s4 1966171168
    %v1417 = vunpack.c.0.s8 %v1416
    %v1418 = vlaneseq
    %v1419 = vshrl.u32 %v1418, 7
    %v1420 = vsub.s32 %v1417, %v1419
    %v1421 = vrot.slane %v1405, %v1420
    %v1423 = vunpack.c.l.s4 1966171168
    %v1424 = vunpack.c.0.s8 %v1423
    %v1425 = vlaneseq
    %v1426 = vshrl.u32 %v1425, 7
    %v1427 = vsub.s32 %v1424, %v1426
    %v1428 = vrot.slane %v1412, %v1427
    %v1430 = vunpack.c.l.s4 1966171168
    %v1431 = vunpack.c.0.s8 %v1430
    %v1432 = vlaneseq
    %v1433 = vshrl.u32 %v1432, 7
    %v1434 = vsub.s32 %v1431, %v1433
    %v1435 = vrot.slane %v1413, %v1434
    %v1437 = vunpack.c.l.s4 1966171168
    %v1438 = vunpack.c.0.s8 %v1437
    %v1439 = vlaneseq
    %v1440 = vshrl.u32 %v1439, 7
    %v1441 = vsub.s32 %v1438, %v1440
    %v1442 = vrot.slane %v1414, %v1441
    %v1443 = vcombine.high %v1421, %v1421
    %v1444 = vcombine.high %v1428, %v1428
    %v1445 = vcombine.high %v1435, %v1435
    %v1446 = vcombine.high %v1442, %v1442
    %v1447 = vcombine.high %v235, %v235
    %v1449 = vunpack.c.l.s4 1966171168
    %v1450 = vunpack.c.0.s8 %v1449
    %v1451 = vlaneseq
    %v1452 = vshrl.u32 %v1451, 7
    %v1453 = vsub.s32 %v1450, %v1452
    %v1454 = vrot.slane %v235, %v1453
    %v1456 = vunpack.c.l.s4 1966171168
    %v1457 = vunpack.c.0.s8 %v1456
    %v1458 = vlaneseq
    %v1459 = vshrl.u32 %v1458, 7
    %v1460 = vsub.s32 %v1457, %v1459
    %v1461 = vrot.slane %v1447, %v1460
    %v1462 = vcombine.high %v1454, %v1454
    %v1463 = vcombine.high %v1461, %v1461
    %v1465 = vunpack.c.l.s4 1966171168
    %v1466 = vunpack.c.0.s8 %v1465
    %v1467 = vlaneseq
    %v1468 = vshrl.u32 %v1467, 7
    %v1469 = vsub.s32 %v1466, %v1468
    %v1470 = vrot.slane %v1454, %v1469
    %v1472 = vunpack.c.l.s4 1966171168
    %v1473 = vunpack.c.0.s8 %v1472
    %v1474 = vlaneseq
    %v1475 = vshrl.u32 %v1474, 7
    %v1476 = vsub.s32 %v1473, %v1475
    %v1477 = vrot.slane %v1461, %v1476
    %v1479 = vunpack.c.l.s4 1966171168
    %v1480 = vunpack.c.0.s8 %v1479
    %v1481 = vlaneseq
    %v1482 = vshrl.u32 %v1481, 7
    %v1483 = vsub.s32 %v1480, %v1482
    %v1484 = vrot.slane %v1462, %v1483
    %v1486 = vunpack.c.l.s4 1966171168
    %v1487 = vunpack.c.0.s8 %v1486
    %v1488 = vlaneseq
    %v1489 = vshrl.u32 %v1488, 7
    %v1490 = vsub.s32 %v1487, %v1489
    %v1491 = vrot.slane %v1463, %v1490
    %v1492 = vcombine.high %v1470, %v1470
    %v1493 = vcombine.high %v1477, %v1477
    %v1494 = vcombine.high %v1484, %v1484
    %v1495 = vcombine.high %v1491, %v1491
    %v1497 = vcombine.high %v390, %v390
    %v1499 = vlaneseq
    %v1500 = vshrl.u32 %v1499, 7
    %v1501 = vsub.s32 0, %v1500
    %v1502 = vrot.slane %v1421, %v1501
    %v1503 = vlaneseq
    %v1504 = vshrl.u32 %v1503, 7
    %v1505 = vsub.s32 0, %v1504
    %v1506 = vrot.slane %v1435, %v1505
    %v1507 = vlaneseq
    %v1508 = vshrl.u32 %v1507, 7
    %v1509 = vsub.s32 0, %v1508
    %v1510 = vrot.slane %v1443, %v1509
    %v1511 = vlaneseq
    %v1512 = vshrl.u32 %v1511, 7
    %v1513 = vsub.s32 0, %v1512
    %v1514 = vrot.slane %v1445, %v1513
    %v1515 = vlaneseq
    %v1516 = vshrl.u32 %v1515, 7
    %v1517 = vsub.s32 0, %v1516
    %v1518 = vrot.slane %v1428, %v1517
    %v1519 = vlaneseq
    %v1520 = vshrl.u32 %v1519, 7
    %v1521 = vsub.s32 0, %v1520
    %v1522 = vrot.slane %v1442, %v1521
    %v1523 = vlaneseq
    %v1524 = vshrl.u32 %v1523, 7
    %v1525 = vsub.s32 0, %v1524
    %v1526 = vrot.slane %v1444, %v1525
    %v1527 = vlaneseq
    %v1528 = vshrl.u32 %v1527, 7
    %v1529 = vsub.s32 0, %v1528
    %v1530 = vrot.slane %v1446, %v1529
    %v1531 = vlaneseq
    %v1532 = vshrl.u32 %v1531, 7
    %v1533 = vsub.s32 0, %v1532
    %v1534 = vrot.slane %v1470, %v1533
    %v1535 = vlaneseq
    %v1536 = vshrl.u32 %v1535, 7
    %v1537 = vsub.s32 0, %v1536
    %v1538 = vrot.slane %v1484, %v1537
    %v1539 = vlaneseq
    %v1540 = vshrl.u32 %v1539, 7
    %v1541 = vsub.s32 0, %v1540
    %v1542 = vrot.slane %v1492, %v1541
    %v1543 = vlaneseq
    %v1544 = vshrl.u32 %v1543, 7
    %v1545 = vsub.s32 0, %v1544
    %v1546 = vrot.slane %v1494, %v1545
    %v1547 = vlaneseq
    %v1548 = vshrl.u32 %v1547, 7
    %v1549 = vsub.s32 0, %v1548
    %v1550 = vrot.slane %v1477, %v1549
    %v1551 = vlaneseq
    %v1552 = vshrl.u32 %v1551, 7
    %v1553 = vsub.s32 0, %v1552
    %v1554 = vrot.slane %v1491, %v1553
    %v1555 = vlaneseq
    %v1556 = vshrl.u32 %v1555, 7
    %v1557 = vsub.s32 0, %v1556
    %v1558 = vrot.slane %v1493, %v1557
    %v1559 = vlaneseq
    %v1560 = vshrl.u32 %v1559, 7
    %v1561 = vsub.s32 0, %v1560
    %v1562 = vrot.slane %v1495, %v1561
    %v1579 = vadd.f32 %v1502, %v390
    %v1580 = vadd.f32 %v1506, %v390
    %v1581 = vadd.f32 %v1510, %v390
    %v1582 = vadd.f32 %v1514, %v390
    %v1583 = vadd.f32 %v1518, %v390
    %v1584 = vadd.f32 %v1522, %v390
    %v1585 = vadd.f32 %v1526, %v390
    %v1586 = vadd.f32 %v1530, %v390
    %v1587 = vadd.f32 %v1534, %v1497
    %v1588 = vadd.f32 %v1538, %v1497
    %v1589 = vadd.f32 %v1542, %v1497
    %v1590 = vadd.f32 %v1546, %v1497
    %v1591 = vadd.f32 %v1550, %v1497
    %v1592 = vadd.f32 %v1554, %v1497
    %v1593 = vadd.f32 %v1558, %v1497
    %v1594 = vadd.f32 %v1562, %v1497
    %v1595 = vlaneseq
    %v1596 = vshrl.u32 %v1595, 7
    %v1597 = vsub.s32 0, %v1596
    %v1598 = vrot.slane %v1395, %v1597
    %v1599 = vadd.f32 %v1579, %v1598
    %v1600 = vadd.f32 %v1580, %v1598
    %v1601 = vadd.f32 %v1581, %v1598
    %v1602 = vadd.f32 %v1582, %v1598
    %v1603 = vadd.f32 %v1583, %v1598
    %v1604 = vadd.f32 %v1584, %v1598
    %v1605 = vadd.f32 %v1585, %v1598
    %v1606 = vadd.f32 %v1586, %v1598
    %v1607 = vadd.f32 %v1587, %v1598
    %v1608 = vadd.f32 %v1588, %v1598
    %v1609 = vadd.f32 %v1589, %v1598
    %v1610 = vadd.f32 %v1590, %v1598
    %v1611 = vadd.f32 %v1591, %v1598
    %v1612 = vadd.f32 %v1592, %v1598
    %v1613 = vadd.f32 %v1593, %v1598
    %v1614 = vadd.f32 %v1594, %v1598
    %v1615 = vmax.f32 %v1599, 0.0
    %v1616 = vmax.f32 %v1600, 0.0
    %v1617 = vmax.f32 %v1601, 0.0
    %v1618 = vmax.f32 %v1602, 0.0
    %v1619 = vmax.f32 %v1603, 0.0
    %v1620 = vmax.f32 %v1604, 0.0
    %v1621 = vmax.f32 %v1605, 0.0
    %v1622 = vmax.f32 %v1606, 0.0
    %v1623 = vmax.f32 %v1607, 0.0
    %v1624 = vmax.f32 %v1608, 0.0
    %v1625 = vmax.f32 %v1609, 0.0
    %v1626 = vmax.f32 %v1610, 0.0
    %v1627 = vmax.f32 %v1611, 0.0
    %v1628 = vmax.f32 %v1612, 0.0
    %v1629 = vmax.f32 %v1613, 0.0
    %v1630 = vmax.f32 %v1614, 0.0
    %v1631 = vld [vmem:[#allocation2 + $0x110] sm:$0xff]
    %v1632 = vld [vmem:[#allocation2 + $0x118] sm:$0xff]
    %v1633 = vld [vmem:[#allocation2 + $0x120] sm:$0xff]
    %v1634 = vld [vmem:[#allocation2 + $0x128] sm:$0xff]
    %v1635 = vld [vmem:[#allocation2 + $0x130] sm:$0xff]
    %v1636 = vld [vmem:[#allocation2 + $0x138] sm:$0xff]
    %v1637 = vld [vmem:[#allocation2 + $0x140] sm:$0xff]
    %v1638 = vld [vmem:[#allocation2 + $0x148] sm:$0xff]
    %v1639 = vld [vmem:[#allocation2 + $0x150] sm:$0xff]
    %v1640 = vld [vmem:[#allocation2 + $0x158] sm:$0xff]
    %v1641 = vld [vmem:[#allocation2 + $0x160] sm:$0xff]
    %v1642 = vld [vmem:[#allocation2 + $0x168] sm:$0xff]
    %v1643 = vld [vmem:[#allocation2 + $0x170] sm:$0xff]
    %v1644 = vld [vmem:[#allocation2 + $0x178] sm:$0xff]
    %v1645 = vld [vmem:[#allocation2 + $0x180] sm:$0xff]
    %v1646 = vld [vmem:[#allocation2 + $0x188] sm:$0xff]
    %v1647 = vld [vmem:[#allocation5 + $0x20] sm:$0x1]
    %v1648 = vlaneseq
    %v1649 = vshrl.u32 %v1648, 7
    %v1650 = vsub.s32 0, %v1649
    %v1651 = vrot.slane %v1647, %v1650
    %v1668 = vcombine.low %v1615, %v1616
    %v1669 = vcombine.low %v1617, %v1618
    %v1670 = vcombine.low %v1619, %v1620
    %v1671 = vcombine.low %v1621, %v1622
    %v1672 = vcombine.low %v1623, %v1624
    %v1673 = vcombine.low %v1625, %v1626
    %v1674 = vcombine.low %v1627, %v1628
    %v1675 = vcombine.low %v1629, %v1630
    %1684 = vmatprep.subr.mxu0 0.0
    %1685 = vmatpush1.msra.mxu0 %v1631
    %1686 = vmatprep.subr.mxu0 0.0
    %1687 = vmatpush1.msra.mxu0 %v1632
    %1688 = vmatprep.subr.mxu0 0.0
    %1689 = vmatpush1.msra.mxu0 %v1633
    %1690 = vmatprep.subr.mxu0 0.0
    %1691 = vmatpush1.msra.mxu0 %v1634
    %1692 = vmatprep.subr.mxu0 0.0
    %1693 = vmatpush1.msra.mxu0 %v1635
    %1694 = vmatprep.subr.mxu0 0.0
    %1695 = vmatpush1.msra.mxu0 %v1636
    %1696 = vmatprep.subr.mxu0 0.0
    %1697 = vmatpush1.msra.mxu0 %v1637
    %1698 = vmatprep.subr.mxu0 0.0
    %1699 = vmatpush1.msra.mxu0 %v1638
    %1700 = vmatprep.subr.mxu0 0.0
    %1701 = vmatpush1.msra.mxu0 %v1639
    %1702 = vmatprep.subr.mxu0 0.0
    %1703 = vmatpush1.msra.mxu0 %v1640
    %1704 = vmatprep.subr.mxu0 0.0
    %1705 = vmatpush1.msra.mxu0 %v1641
    %1706 = vmatprep.subr.mxu0 0.0
    %1707 = vmatpush1.msra.mxu0 %v1642
    %1708 = vmatprep.subr.mxu0 0.0
    %1709 = vmatpush1.msra.mxu0 %v1643
    %1710 = vmatprep.subr.mxu0 0.0
    %1711 = vmatpush1.msra.mxu0 %v1644
    %1712 = vmatprep.subr.mxu0 0.0
    %1713 = vmatpush1.msra.mxu0 %v1645
    %1714 = vmatprep.subr.mxu0 0.0
    %1715 = vmatpush1.msra.mxu0 %v1646
    %1716 = vmatprep.subr.mxu0 0.0
    %1717 = vmatpush1.msra.mxu0 0.0
    %1718 = vmatprep.subr.mxu0 0.0
    %1719 = vmatpush1.msra.mxu0 0.0
    %1720 = vmatprep.subr.mxu0 0.0
    %1721 = vmatpush1.msra.mxu0 0.0
    %1722 = vmatprep.subr.mxu0 0.0
    %1723 = vmatpush1.msra.mxu0 0.0
    %1724 = vmatprep.subr.mxu0 0.0
    %1725 = vmatpush1.msra.mxu0 0.0
    %1726 = vmatprep.subr.mxu0 0.0
    %1727 = vmatpush1.msra.mxu0 0.0
    %1728 = vmatprep.subr.mxu0 0.0
    %1729 = vmatpush1.msra.mxu0 0.0
    %1730 = vmatprep.subr.mxu0 0.0
    %1731 = vmatpush1.msra.mxu0 0.0
    %1732 = vmatprep.subr.mxu0 0.0
    %1733 = vmatpush1.msra.mxu0 0.0
    %1734 = vmatprep.subr.mxu0 0.0
    %1735 = vmatpush1.msra.mxu0 0.0
    %1736 = vmatprep.subr.mxu0 0.0
    %1737 = vmatpush1.msra.mxu0 0.0
    %1738 = vmatprep.subr.mxu0 0.0
    %1739 = vmatpush1.msra.mxu0 0.0
    %1740 = vmatprep.subr.mxu0 0.0
    %1741 = vmatpush1.msra.mxu0 0.0
    %1742 = vmatprep.subr.mxu0 0.0
    %1743 = vmatpush1.msra.mxu0 0.0
    %1744 = vmatprep.subr.mxu0 0.0
    %1745 = vmatpush1.msra.mxu0 0.0
    %1746 = vmatprep.subr.mxu0 0.0
    %1747 = vmatpush1.msra.mxu0 0.0
    %1748 = vmatprep.mubr.f32.mxu0 0.0
    %1749 = vmatmul.mubr.f32.gmra.mrb[0].mxu0 %v1668
    %v1750 = vpop.f32.mrb[0].mxu0
    %v1751 = vadd.f32 %v1651, %v1750
    %v1752 = vpop.f32.mrb[0].mxu0
    %1753 = vmatprep.mubr.f32.mxu0 0.0
    %1754 = vmatmul.mubr.f32.gmra.mrb[0].mxu0 %v1669
    %v1755 = vpop.f32.mrb[0].mxu0
    %v1756 = vadd.f32 %v1651, %v1755
    %v1757 = vpop.f32.mrb[0].mxu0
    %1758 = vmatprep.mubr.f32.mxu0 0.0
    %1759 = vmatmul.mubr.f32.gmra.mrb[0].mxu0 %v1670
    %v1760 = vpop.f32.mrb[0].mxu0
    %v1761 = vadd.f32 %v1651, %v1760
    %v1762 = vpop.f32.mrb[0].mxu0
    %1763 = vmatprep.mubr.f32.mxu0 0.0
    %1764 = vmatmul.mubr.f32.gmra.mrb[0].mxu0 %v1671
    %v1765 = vpop.f32.mrb[0].mxu0
    %v1766 = vadd.f32 %v1651, %v1765
    %v1767 = vpop.f32.mrb[0].mxu0
    %1768 = vmatprep.mubr.f32.mxu0 0.0
    %1769 = vmatmul.mubr.f32.gmra.mrb[0].mxu0 %v1672
    %v1770 = vpop.f32.mrb[0].mxu0
    %v1771 = vadd.f32 %v1651, %v1770
    %v1772 = vpop.f32.mrb[0].mxu0
    %1773 = vmatprep.mubr.f32.mxu0 0.0
    %1774 = vmatmul.mubr.f32.gmra.mrb[0].mxu0 %v1673
    %v1775 = vpop.f32.mrb[0].mxu0
    %v1776 = vadd.f32 %v1651, %v1775
    %v1777 = vpop.f32.mrb[0].mxu0
    %1778 = vmatprep.mubr.f32.mxu0 0.0
    %1779 = vmatmul.mubr.f32.gmra.mrb[0].mxu0 %v1674
    %v1780 = vpop.f32.mrb[0].mxu0
    %v1781 = vadd.f32 %v1651, %v1780
    %v1782 = vpop.f32.mrb[0].mxu0
    %1783 = vmatprep.mubr.f32.mxu0 0.0
    %1784 = vmatmul.mubr.f32.gmra.mrb[0].mxu0 %v1675
    %v1785 = vpop.f32.mrb[0].mxu0
    %v1786 = vadd.f32 %v1651, %v1785
    %v1787 = vpop.f32.mrb[0].mxu0
    %1788 = vdwg.mxu0
    %v1789 = vmax.f32 %v1751, 0.0
    %v1790 = vmax.f32 %v1756, 0.0
    %v1791 = vmax.f32 %v1761, 0.0
    %v1792 = vmax.f32 %v1766, 0.0
    %v1793 = vmax.f32 %v1771, 0.0
    %v1794 = vmax.f32 %v1776, 0.0
    %v1795 = vmax.f32 %v1781, 0.0
    %v1796 = vmax.f32 %v1786, 0.0
    %v1797 = vld [vmem:[#allocation2 + $0x190] sm:$0xff]
    %v1798 = vld [vmem:[#allocation2 + $0x198] sm:$0xff]
    %v1799 = vld [vmem:[#allocation2 + $0x1a0] sm:$0xff]
    %v1800 = vld [vmem:[#allocation2 + $0x1a8] sm:$0xff]
    %v1801 = vld [vmem:[#allocation2 + $0x1b0] sm:$0xff]
    %v1802 = vld [vmem:[#allocation2 + $0x1b8] sm:$0xff]
    %v1803 = vld [vmem:[#allocation2 + $0x1c0] sm:$0xff]
    %v1804 = vld [vmem:[#allocation2 + $0x1c8] sm:$0xff]
    %v1805 = vld [vmem:[#allocation2 + $0x1d0] sm:$0xff]
    %v1806 = vld [vmem:[#allocation2 + $0x1d8] sm:$0xff]
    %v1807 = vld [vmem:[#allocation2 + $0x1e0] sm:$0xff]
    %v1808 = vld [vmem:[#allocation2 + $0x1e8] sm:$0xff]
    %v1809 = vld [vmem:[#allocation2 + $0x1f0] sm:$0xff]
    %v1810 = vld [vmem:[#allocation2 + $0x1f8] sm:$0xff]
    %v1811 = vld [vmem:[#allocation2 + $0x200] sm:$0xff]
    %v1812 = vld [vmem:[#allocation2 + $0x208] sm:$0xff]
    %v1813 = vld [vmem:[#allocation5 + $0x28] sm:$0x1]
    %v1814 = vlaneseq
    %v1815 = vshrl.u32 %v1814, 7
    %v1816 = vsub.s32 0, %v1815
    %v1817 = vrot.slane %v1813, %v1816
    %1818 = vmatprep.subr.mxu0 0.0
    %1819 = vmatpush1.msra.mxu0 %v1797
    %1820 = vmatprep.subr.mxu0 0.0
    %1821 = vmatpush1.msra.mxu0 %v1798
    %1822 = vmatprep.subr.mxu0 0.0
    %1823 = vmatpush1.msra.mxu0 %v1799
    %1824 = vmatprep.subr.mxu0 0.0
    %1825 = vmatpush1.msra.mxu0 %v1800
    %1826 = vmatprep.subr.mxu0 0.0
    %1827 = vmatpush1.msra.mxu0 %v1801
    %1828 = vmatprep.subr.mxu0 0.0
    %1829 = vmatpush1.msra.mxu0 %v1802
    %1830 = vmatprep.subr.mxu0 0.0
    %1831 = vmatpush1.msra.mxu0 %v1803
    %1832 = vmatprep.subr.mxu0 0.0
    %1833 = vmatpush1.msra.mxu0 %v1804
    %1834 = vmatprep.subr.mxu0 0.0
    %1835 = vmatpush1.msra.mxu0 %v1805
    %1836 = vmatprep.subr.mxu0 0.0
    %1837 = vmatpush1.msra.mxu0 %v1806
    %1838 = vmatprep.subr.mxu0 0.0
    %1839 = vmatpush1.msra.mxu0 %v1807
    %1840 = vmatprep.subr.mxu0 0.0
    %1841 = vmatpush1.msra.mxu0 %v1808
    %1842 = vmatprep.subr.mxu0 0.0
    %1843 = vmatpush1.msra.mxu0 %v1809
    %1844 = vmatprep.subr.mxu0 0.0
    %1845 = vmatpush1.msra.mxu0 %v1810
    %1846 = vmatprep.subr.mxu0 0.0
    %1847 = vmatpush1.msra.mxu0 %v1811
    %1848 = vmatprep.subr.mxu0 0.0
    %1849 = vmatpush1.msra.mxu0 %v1812
    %1850 = vmatprep.subr.mxu0 0.0
    %1851 = vmatpush1.msra.mxu0 0.0
    %1852 = vmatprep.subr.mxu0 0.0
    %1853 = vmatpush1.msra.mxu0 0.0
    %1854 = vmatprep.subr.mxu0 0.0
    %1855 = vmatpush1.msra.mxu0 0.0
    %1856 = vmatprep.subr.mxu0 0.0
    %1857 = vmatpush1.msra.mxu0 0.0
    %1858 = vmatprep.subr.mxu0 0.0
    %1859 = vmatpush1.msra.mxu0 0.0
    %1860 = vmatprep.subr.mxu0 0.0
    %1861 = vmatpush1.msra.mxu0 0.0
    %1862 = vmatprep.subr.mxu0 0.0
    %1863 = vmatpush1.msra.mxu0 0.0
    %1864 = vmatprep.subr.mxu0 0.0
    %1865 = vmatpush1.msra.mxu0 0.0
    %1866 = vmatprep.subr.mxu0 0.0
    %1867 = vmatpush1.msra.mxu0 0.0
    %1868 = vmatprep.subr.mxu0 0.0
    %1869 = vmatpush1.msra.mxu0 0.0
    %1870 = vmatprep.subr.mxu0 0.0
    %1871 = vmatpush1.msra.mxu0 0.0
    %1872 = vmatprep.subr.mxu0 0.0
    %1873 = vmatpush1.msra.mxu0 0.0
    %1874 = vmatprep.subr.mxu0 0.0
    %1875 = vmatpush1.msra.mxu0 0.0
    %1876 = vmatprep.subr.mxu0 0.0
    %1877 = vmatpush1.msra.mxu0 0.0
    %1878 = vmatprep.subr.mxu0 0.0
    %1879 = vmatpush1.msra.mxu0 0.0
    %1880 = vmatprep.subr.mxu0 0.0
    %1881 = vmatpush1.msra.mxu0 0.0
    %1882 = vmatprep.mubr.f32.mxu0 0.0
    %1883 = vmatmul.mubr.f32.gmra.mrb[0].mxu0 %v1789
    %v1884 = vpop.f32.mrb[0].mxu0
    %v1885 = vadd.f32 %v1817, %v1884
    %v1886 = vpop.f32.mrb[0].mxu0
    %1887 = vmatprep.mubr.f32.mxu0 0.0
    %1888 = vmatmul.mubr.f32.gmra.mrb[0].mxu0 %v1790
    %v1889 = vpop.f32.mrb[0].mxu0
    %v1890 = vadd.f32 %v1817, %v1889
    %v1891 = vpop.f32.mrb[0].mxu0
    %1892 = vmatprep.mubr.f32.mxu0 0.0
    %1893 = vmatmul.mubr.f32.gmra.mrb[0].mxu0 %v1791
    %v1894 = vpop.f32.mrb[0].mxu0
    %v1895 = vadd.f32 %v1817, %v1894
    %v1896 = vpop.f32.mrb[0].mxu0
    %1897 = vmatprep.mubr.f32.mxu0 0.0
    %1898 = vmatmul.mubr.f32.gmra.mrb[0].mxu0 %v1792
    %v1899 = vpop.f32.mrb[0].mxu0
    %v1900 = vadd.f32 %v1817, %v1899
    %v1901 = vpop.f32.mrb[0].mxu0
    %1902 = vmatprep.mubr.f32.mxu0 0.0
    %1903 = vmatmul.mubr.f32.gmra.mrb[0].mxu0 %v1793
    %v1904 = vpop.f32.mrb[0].mxu0
    %v1905 = vadd.f32 %v1817, %v1904
    %v1906 = vpop.f32.mrb[0].mxu0
    %1907 = vmatprep.mubr.f32.mxu0 0.0
    %1908 = vmatmul.mubr.f32.gmra.mrb[0].mxu0 %v1794
    %v1909 = vpop.f32.mrb[0].mxu0
    %v1910 = vadd.f32 %v1817, %v1909
    %v1911 = vpop.f32.mrb[0].mxu0
    %1912 = vmatprep.mubr.f32.mxu0 0.0
    %1913 = vmatmul.mubr.f32.gmra.mrb[0].mxu0 %v1795
    %v1914 = vpop.f32.mrb[0].mxu0
    %v1915 = vadd.f32 %v1817, %v1914
    %v1916 = vpop.f32.mrb[0].mxu0
    %1917 = vmatprep.mubr.f32.mxu0 0.0
    %1918 = vmatmul.mubr.f32.gmra.mrb[0].mxu0 %v1796
    %v1919 = vpop.f32.mrb[0].mxu0
    %v1920 = vadd.f32 %v1817, %v1919
    %v1921 = vpop.f32.mrb[0].mxu0
    %1922 = vdwg.mxu0
    %v1923 = vmax.f32 %v1885, 0.0
    %v1924 = vmax.f32 %v1890, 0.0
    %v1925 = vmax.f32 %v1895, 0.0
    %v1926 = vmax.f32 %v1900, 0.0
    %v1927 = vmax.f32 %v1905, 0.0
    %v1928 = vmax.f32 %v1910, 0.0
    %v1929 = vmax.f32 %v1915, 0.0
    %v1930 = vmax.f32 %v1920, 0.0
    %v1939 = vcombine.high %v1923, %v1923
    %v1940 = vcombine.high %v1924, %v1924
    %v1941 = vcombine.high %v1925, %v1925
    %v1942 = vcombine.high %v1926, %v1926
    %v1943 = vcombine.high %v1927, %v1927
    %v1944 = vcombine.high %v1928, %v1928
    %v1945 = vcombine.high %v1929, %v1929
    %v1946 = vcombine.high %v1930, %v1930
    %v1955 = vsel %vm69, %v1923, 0.0
    %v1956 = vrot.slane %v1955, 4
    %v1957 = vadd.f32 %v1955, %v1956
    %v1958 = vrot.slane %v1957, 2
    %v1959 = vadd.f32 %v1957, %v1958
    %v1960 = vrot.slane %v1959, 1
    %v1961 = vadd.f32 %v1959, %v1960
    %v1962 = vsel %vm69, %v1939, 0.0
    %v1963 = vrot.slane %v1962, 4
    %v1964 = vadd.f32 %v1962, %v1963
    %v1965 = vrot.slane %v1964, 2
    %v1966 = vadd.f32 %v1964, %v1965
    %v1967 = vrot.slane %v1966, 1
    %v1968 = vadd.f32 %v1966, %v1967
    %v1969 = vsel %vm69, %v1924, 0.0
    %v1970 = vrot.slane %v1969, 4
    %v1971 = vadd.f32 %v1969, %v1970
    %v1972 = vrot.slane %v1971, 2
    %v1973 = vadd.f32 %v1971, %v1972
    %v1974 = vrot.slane %v1973, 1
    %v1975 = vadd.f32 %v1973, %v1974
    %v1976 = vsel %vm69, %v1940, 0.0
    %v1977 = vrot.slane %v1976, 4
    %v1978 = vadd.f32 %v1976, %v1977
    %v1979 = vrot.slane %v1978, 2
    %v1980 = vadd.f32 %v1978, %v1979
    %v1981 = vrot.slane %v1980, 1
    %v1982 = vadd.f32 %v1980, %v1981
    %v1983 = vsel %vm69, %v1925, 0.0
    %v1984 = vrot.slane %v1983, 4
    %v1985 = vadd.f32 %v1983, %v1984
    %v1986 = vrot.slane %v1985, 2
    %v1987 = vadd.f32 %v1985, %v1986
    %v1988 = vrot.slane %v1987, 1
    %v1989 = vadd.f32 %v1987, %v1988
    %v1990 = vsel %vm69, %v1941, 0.0
    %v1991 = vrot.slane %v1990, 4
    %v1992 = vadd.f32 %v1990, %v1991
    %v1993 = vrot.slane %v1992, 2
    %v1994 = vadd.f32 %v1992, %v1993
    %v1995 = vrot.slane %v1994, 1
    %v1996 = vadd.f32 %v1994, %v1995
    %v1997 = vsel %vm69, %v1926, 0.0
    %v1998 = vrot.slane %v1997, 4
    %v1999 = vadd.f32 %v1997, %v1998
    %v2000 = vrot.slane %v1999, 2
    %v2001 = vadd.f32 %v1999, %v2000
    %v2002 = vrot.slane %v2001, 1
    %v2003 = vadd.f32 %v2001, %v2002
    %v2004 = vsel %vm69, %v1942, 0.0
    %v2005 = vrot.slane %v2004, 4
    %v2006 = vadd.f32 %v2004, %v2005
    %v2007 = vrot.slane %v2006, 2
    %v2008 = vadd.f32 %v2006, %v2007
    %v2009 = vrot.slane %v2008, 1
    %v2010 = vadd.f32 %v2008, %v2009
    %v2011 = vsel %vm69, %v1927, 0.0
    %v2012 = vrot.slane %v2011, 4
    %v2013 = vadd.f32 %v2011, %v2012
    %v2014 = vrot.slane %v2013, 2
    %v2015 = vadd.f32 %v2013, %v2014
    %v2016 = vrot.slane %v2015, 1
    %v2017 = vadd.f32 %v2015, %v2016
    %v2018 = vsel %vm69, %v1943, 0.0
    %v2019 = vrot.slane %v2018, 4
    %v2020 = vadd.f32 %v2018, %v2019
    %v2021 = vrot.slane %v2020, 2
    %v2022 = vadd.f32 %v2020, %v2021
    %v2023 = vrot.slane %v2022, 1
    %v2024 = vadd.f32 %v2022, %v2023
    %v2025 = vsel %vm69, %v1928, 0.0
    %v2026 = vrot.slane %v2025, 4
    %v2027 = vadd.f32 %v2025, %v2026
    %v2028 = vrot.slane %v2027, 2
    %v2029 = vadd.f32 %v2027, %v2028
    %v2030 = vrot.slane %v2029, 1
    %v2031 = vadd.f32 %v2029, %v2030
    %v2032 = vsel %vm69, %v1944, 0.0
    %v2033 = vrot.slane %v2032, 4
    %v2034 = vadd.f32 %v2032, %v2033
    %v2035 = vrot.slane %v2034, 2
    %v2036 = vadd.f32 %v2034, %v2035
    %v2037 = vrot.slane %v2036, 1
    %v2038 = vadd.f32 %v2036, %v2037
    %v2039 = vsel %vm69, %v1929, 0.0
    %v2040 = vrot.slane %v2039, 4
    %v2041 = vadd.f32 %v2039, %v2040
    %v2042 = vrot.slane %v2041, 2
    %v2043 = vadd.f32 %v2041, %v2042
    %v2044 = vrot.slane %v2043, 1
    %v2045 = vadd.f32 %v2043, %v2044
    %v2046 = vsel %vm69, %v1945, 0.0
    %v2047 = vrot.slane %v2046, 4
    %v2048 = vadd.f32 %v2046, %v2047
    %v2049 = vrot.slane %v2048, 2
    %v2050 = vadd.f32 %v2048, %v2049
    %v2051 = vrot.slane %v2050, 1
    %v2052 = vadd.f32 %v2050, %v2051
    %v2053 = vsel %vm69, %v1930, 0.0
    %v2054 = vrot.slane %v2053, 4
    %v2055 = vadd.f32 %v2053, %v2054
    %v2056 = vrot.slane %v2055, 2
    %v2057 = vadd.f32 %v2055, %v2056
    %v2058 = vrot.slane %v2057, 1
    %v2059 = vadd.f32 %v2057, %v2058
    %v2060 = vsel %vm69, %v1946, 0.0
    %v2061 = vrot.slane %v2060, 4
    %v2062 = vadd.f32 %v2060, %v2061
    %v2063 = vrot.slane %v2062, 2
    %v2064 = vadd.f32 %v2062, %v2063
    %v2065 = vrot.slane %v2064, 1
    %v2066 = vadd.f32 %v2064, %v2065
    %v2067 = vadd.f32 %v1961, 0.0
    %v2068 = vadd.f32 %v1968, 0.0
    %v2069 = vadd.f32 %v1975, 0.0
    %v2070 = vadd.f32 %v1982, 0.0
    %v2071 = vadd.f32 %v1989, 0.0
    %v2072 = vadd.f32 %v1996, 0.0
    %v2073 = vadd.f32 %v2003, 0.0
    %v2074 = vadd.f32 %v2010, 0.0
    %v2075 = vadd.f32 %v2017, 0.0
    %v2076 = vadd.f32 %v2024, 0.0
    %v2077 = vadd.f32 %v2031, 0.0
    %v2078 = vadd.f32 %v2038, 0.0
    %v2079 = vadd.f32 %v2045, 0.0
    %v2080 = vadd.f32 %v2052, 0.0
    %v2081 = vadd.f32 %v2059, 0.0
    %v2082 = vadd.f32 %v2066, 0.0
    %v2083 = vld [vmem:[#allocation5 + $0x30] sm:$0x1]
    %v2086 = vcombine.high %v231, %v231
    %v2088 = vunpack.c.l.s4 1966171168
    %v2089 = vunpack.c.0.s8 %v2088
    %v2090 = vlaneseq
    %v2091 = vshrl.u32 %v2090, 7
    %v2092 = vsub.s32 %v2089, %v2091
    %v2093 = vrot.slane %v231, %v2092
    %v2095 = vunpack.c.l.s4 1966171168
    %v2096 = vunpack.c.0.s8 %v2095
    %v2097 = vlaneseq
    %v2098 = vshrl.u32 %v2097, 7
    %v2099 = vsub.s32 %v2096, %v2098
    %v2100 = vrot.slane %v2086, %v2099
    %v2101 = vcombine.high %v2093, %v2093
    %v2102 = vcombine.high %v2100, %v2100
    %v2104 = vunpack.c.l.s4 1966171168
    %v2105 = vunpack.c.0.s8 %v2104
    %v2106 = vlaneseq
    %v2107 = vshrl.u32 %v2106, 7
    %v2108 = vsub.s32 %v2105, %v2107
    %v2109 = vrot.slane %v2093, %v2108
    %v2111 = vunpack.c.l.s4 1966171168
    %v2112 = vunpack.c.0.s8 %v2111
    %v2113 = vlaneseq
    %v2114 = vshrl.u32 %v2113, 7
    %v2115 = vsub.s32 %v2112, %v2114
    %v2116 = vrot.slane %v2100, %v2115
    %v2118 = vunpack.c.l.s4 1966171168
    %v2119 = vunpack.c.0.s8 %v2118
    %v2120 = vlaneseq
    %v2121 = vshrl.u32 %v2120, 7
    %v2122 = vsub.s32 %v2119, %v2121
    %v2123 = vrot.slane %v2101, %v2122
    %v2125 = vunpack.c.l.s4 1966171168
    %v2126 = vunpack.c.0.s8 %v2125
    %v2127 = vlaneseq
    %v2128 = vshrl.u32 %v2127, 7
    %v2129 = vsub.s32 %v2126, %v2128
    %v2130 = vrot.slane %v2102, %v2129
    %v2131 = vcombine.high %v2109, %v2109
    %v2132 = vcombine.high %v2116, %v2116
    %v2133 = vcombine.high %v2123, %v2123
    %v2134 = vcombine.high %v2130, %v2130
    %v2135 = vcombine.high %v237, %v237
    %v2137 = vunpack.c.l.s4 1966171168
    %v2138 = vunpack.c.0.s8 %v2137
    %v2139 = vlaneseq
    %v2140 = vshrl.u32 %v2139, 7
    %v2141 = vsub.s32 %v2138, %v2140
    %v2142 = vrot.slane %v237, %v2141
    %v2144 = vunpack.c.l.s4 1966171168
    %v2145 = vunpack.c.0.s8 %v2144
    %v2146 = vlaneseq
    %v2147 = vshrl.u32 %v2146, 7
    %v2148 = vsub.s32 %v2145, %v2147
    %v2149 = vrot.slane %v2135, %v2148
    %v2150 = vcombine.high %v2142, %v2142
    %v2151 = vcombine.high %v2149, %v2149
    %v2153 = vunpack.c.l.s4 1966171168
    %v2154 = vunpack.c.0.s8 %v2153
    %v2155 = vlaneseq
    %v2156 = vshrl.u32 %v2155, 7
    %v2157 = vsub.s32 %v2154, %v2156
    %v2158 = vrot.slane %v2142, %v2157
    %v2160 = vunpack.c.l.s4 1966171168
    %v2161 = vunpack.c.0.s8 %v2160
    %v2162 = vlaneseq
    %v2163 = vshrl.u32 %v2162, 7
    %v2164 = vsub.s32 %v2161, %v2163
    %v2165 = vrot.slane %v2149, %v2164
    %v2167 = vunpack.c.l.s4 1966171168
    %v2168 = vunpack.c.0.s8 %v2167
    %v2169 = vlaneseq
    %v2170 = vshrl.u32 %v2169, 7
    %v2171 = vsub.s32 %v2168, %v2170
    %v2172 = vrot.slane %v2150, %v2171
    %v2174 = vunpack.c.l.s4 1966171168
    %v2175 = vunpack.c.0.s8 %v2174
    %v2176 = vlaneseq
    %v2177 = vshrl.u32 %v2176, 7
    %v2178 = vsub.s32 %v2175, %v2177
    %v2179 = vrot.slane %v2151, %v2178
    %v2180 = vcombine.high %v2158, %v2158
    %v2181 = vcombine.high %v2165, %v2165
    %v2182 = vcombine.high %v2172, %v2172
    %v2183 = vcombine.high %v2179, %v2179
    %v2186 = vcombine.high %v470, %v470
    %v2188 = vunpack.c.l.s4 1983009808
    %v2189 = vunpack.c.0.s8 %v2188
    %v2190 = vlaneseq
    %v2191 = vshrl.u32 %v2190, 7
    %v2192 = vsub.s32 %v2189, %v2191
    %v2193 = vrot.slane %v470, %v2192
    %v2195 = vunpack.c.l.s4 1983009808
    %v2196 = vunpack.c.0.s8 %v2195
    %v2197 = vlaneseq
    %v2198 = vshrl.u32 %v2197, 7
    %v2199 = vsub.s32 %v2196, %v2198
    %v2200 = vrot.slane %v2186, %v2199
    %v2201 = vcombine.high %v2193, %v2193
    %v2202 = vcombine.high %v2200, %v2200
    %v2204 = vunpack.c.l.s4 1983009808
    %v2205 = vunpack.c.0.s8 %v2204
    %v2206 = vlaneseq
    %v2207 = vshrl.u32 %v2206, 7
    %v2208 = vsub.s32 %v2205, %v2207
    %v2209 = vrot.slane %v475, %v2208
    %v2210 = vcombine.high %v2209, %v2209
    %v2211 = vlaneseq
    %v2212 = vshrl.u32 %v2211, 7
    %v2213 = vsub.s32 0, %v2212
    %v2214 = vrot.slane %v2109, %v2213
    %v2215 = vlaneseq
    %v2216 = vshrl.u32 %v2215, 7
    %v2217 = vsub.s32 0, %v2216
    %v2218 = vrot.slane %v2123, %v2217
    %v2219 = vlaneseq
    %v2220 = vshrl.u32 %v2219, 7
    %v2221 = vsub.s32 0, %v2220
    %v2222 = vrot.slane %v2131, %v2221
    %v2223 = vlaneseq
    %v2224 = vshrl.u32 %v2223, 7
    %v2225 = vsub.s32 0, %v2224
    %v2226 = vrot.slane %v2133, %v2225
    %v2227 = vlaneseq
    %v2228 = vshrl.u32 %v2227, 7
    %v2229 = vsub.s32 0, %v2228
    %v2230 = vrot.slane %v2116, %v2229
    %v2231 = vlaneseq
    %v2232 = vshrl.u32 %v2231, 7
    %v2233 = vsub.s32 0, %v2232
    %v2234 = vrot.slane %v2130, %v2233
    %v2235 = vlaneseq
    %v2236 = vshrl.u32 %v2235, 7
    %v2237 = vsub.s32 0, %v2236
    %v2238 = vrot.slane %v2132, %v2237
    %v2239 = vlaneseq
    %v2240 = vshrl.u32 %v2239, 7
    %v2241 = vsub.s32 0, %v2240
    %v2242 = vrot.slane %v2134, %v2241
    %v2243 = vlaneseq
    %v2244 = vshrl.u32 %v2243, 7
    %v2245 = vsub.s32 0, %v2244
    %v2246 = vrot.slane %v2158, %v2245
    %v2247 = vlaneseq
    %v2248 = vshrl.u32 %v2247, 7
    %v2249 = vsub.s32 0, %v2248
    %v2250 = vrot.slane %v2172, %v2249
    %v2251 = vlaneseq
    %v2252 = vshrl.u32 %v2251, 7
    %v2253 = vsub.s32 0, %v2252
    %v2254 = vrot.slane %v2180, %v2253
    %v2255 = vlaneseq
    %v2256 = vshrl.u32 %v2255, 7
    %v2257 = vsub.s32 0, %v2256
    %v2258 = vrot.slane %v2182, %v2257
    %v2259 = vlaneseq
    %v2260 = vshrl.u32 %v2259, 7
    %v2261 = vsub.s32 0, %v2260
    %v2262 = vrot.slane %v2165, %v2261
    %v2263 = vlaneseq
    %v2264 = vshrl.u32 %v2263, 7
    %v2265 = vsub.s32 0, %v2264
    %v2266 = vrot.slane %v2179, %v2265
    %v2267 = vlaneseq
    %v2268 = vshrl.u32 %v2267, 7
    %v2269 = vsub.s32 0, %v2268
    %v2270 = vrot.slane %v2181, %v2269
    %v2271 = vlaneseq
    %v2272 = vshrl.u32 %v2271, 7
    %v2273 = vsub.s32 0, %v2272
    %v2274 = vrot.slane %v2183, %v2273
    %v2291 = vcombine.low %v2193, %v2201
    %v2293 = vunpack.c.l.s4 1983009808
    %v2294 = vunpack.c.0.s8 %v2293
    %v2295 = vlaneseq
    %v2296 = vshrl.u32 %v2295, 7
    %v2297 = vsub.s32 %v2294, %v2296
    %v2298 = vrot.slane %v2291, %v2297
    %v2300 = vunpack.c.l.s4 1983009808
    %v2301 = vunpack.c.0.s8 %v2300
    %v2302 = vlaneseq
    %v2303 = vshrl.u32 %v2302, 7
    %v2304 = vsub.s32 %v2301, %v2303
    %v2305 = vrot.slane %v2200, %v2304
    %v2306 = vcombine.low %v2298, %v2305
    %v2307 = vcombine.low %v2202, %v2209
    %v2309 = vunpack.c.l.s4 1983009808
    %v2310 = vunpack.c.0.s8 %v2309
    %v2311 = vlaneseq
    %v2312 = vshrl.u32 %v2311, 7
    %v2313 = vsub.s32 %v2310, %v2312
    %v2314 = vrot.slane %v2307, %v2313
    %v2316 = vunpack.c.l.s4 1983009808
    %v2317 = vunpack.c.0.s8 %v2316
    %v2318 = vlaneseq
    %v2319 = vshrl.u32 %v2318, 7
    %v2320 = vsub.s32 %v2317, %v2319
    %v2321 = vrot.slane %v2210, %v2320
    %v2322 = vcombine.low %v2314, %v2321
    %v2325 = vadd.f32 %v2214, %v2306
    %v2326 = vadd.f32 %v2218, %v2306
    %v2327 = vadd.f32 %v2222, %v2306
    %v2328 = vadd.f32 %v2226, %v2306
    %v2329 = vadd.f32 %v2230, %v2306
    %v2330 = vadd.f32 %v2234, %v2306
    %v2331 = vadd.f32 %v2238, %v2306
    %v2332 = vadd.f32 %v2242, %v2306
    %v2333 = vadd.f32 %v2246, %v2322
    %v2334 = vadd.f32 %v2250, %v2322
    %v2335 = vadd.f32 %v2254, %v2322
    %v2336 = vadd.f32 %v2258, %v2322
    %v2337 = vadd.f32 %v2262, %v2322
    %v2338 = vadd.f32 %v2266, %v2322
    %v2339 = vadd.f32 %v2270, %v2322
    %v2340 = vadd.f32 %v2274, %v2322
    %v2341 = vlaneseq
    %v2342 = vshrl.u32 %v2341, 7
    %v2343 = vsub.s32 0, %v2342
    %v2344 = vrot.slane %v2083, %v2343
    %v2345 = vadd.f32 %v2325, %v2344
    %v2346 = vadd.f32 %v2326, %v2344
    %v2347 = vadd.f32 %v2327, %v2344
    %v2348 = vadd.f32 %v2328, %v2344
    %v2349 = vadd.f32 %v2329, %v2344
    %v2350 = vadd.f32 %v2330, %v2344
    %v2351 = vadd.f32 %v2331, %v2344
    %v2352 = vadd.f32 %v2332, %v2344
    %v2353 = vadd.f32 %v2333, %v2344
    %v2354 = vadd.f32 %v2334, %v2344
    %v2355 = vadd.f32 %v2335, %v2344
    %v2356 = vadd.f32 %v2336, %v2344
    %v2357 = vadd.f32 %v2337, %v2344
    %v2358 = vadd.f32 %v2338, %v2344
    %v2359 = vadd.f32 %v2339, %v2344
    %v2360 = vadd.f32 %v2340, %v2344
    %v2361 = vmax.f32 %v2345, 0.0
    %v2362 = vmax.f32 %v2346, 0.0
    %v2363 = vmax.f32 %v2347, 0.0
    %v2364 = vmax.f32 %v2348, 0.0
    %v2365 = vmax.f32 %v2349, 0.0
    %v2366 = vmax.f32 %v2350, 0.0
    %v2367 = vmax.f32 %v2351, 0.0
    %v2368 = vmax.f32 %v2352, 0.0
    %v2369 = vmax.f32 %v2353, 0.0
    %v2370 = vmax.f32 %v2354, 0.0
    %v2371 = vmax.f32 %v2355, 0.0
    %v2372 = vmax.f32 %v2356, 0.0
    %v2373 = vmax.f32 %v2357, 0.0
    %v2374 = vmax.f32 %v2358, 0.0
    %v2375 = vmax.f32 %v2359, 0.0
    %v2376 = vmax.f32 %v2360, 0.0
    %v2393 = vcombine.high %v2361, %v2361
    %v2395 = vunpack.c.l.s4 1983009808
    %v2396 = vunpack.c.0.s8 %v2395
    %v2397 = vlaneseq
    %v2398 = vshrl.u32 %v2397, 7
    %v2399 = vsub.s32 %v2396, %v2398
    %v2400 = vrot.slane %v2361, %v2399
    %v2402 = vunpack.c.l.s4 1983009808
    %v2403 = vunpack.c.0.s8 %v2402
    %v2404 = vlaneseq
    %v2405 = vshrl.u32 %v2404, 7
    %v2406 = vsub.s32 %v2403, %v2405
    %v2407 = vrot.slane %v2393, %v2406
    %v2408 = vcombine.high %v2400, %v2400
    %v2409 = vcombine.high %v2362, %v2362
    %v2411 = vunpack.c.l.s4 1983009808
    %v2412 = vunpack.c.0.s8 %v2411
    %v2413 = vlaneseq
    %v2414 = vshrl.u32 %v2413, 7
    %v2415 = vsub.s32 %v2412, %v2414
    %v2416 = vrot.slane %v2362, %v2415
    %v2418 = vunpack.c.l.s4 1983009808
    %v2419 = vunpack.c.0.s8 %v2418
    %v2420 = vlaneseq
    %v2421 = vshrl.u32 %v2420, 7
    %v2422 = vsub.s32 %v2419, %v2421
    %v2423 = vrot.slane %v2409, %v2422
    %v2424 = vcombine.high %v2416, %v2416
    %v2425 = vcombine.high %v2363, %v2363
    %v2427 = vunpack.c.l.s4 1983009808
    %v2428 = vunpack.c.0.s8 %v2427
    %v2429 = vlaneseq
    %v2430 = vshrl.u32 %v2429, 7
    %v2431 = vsub.s32 %v2428, %v2430
    %v2432 = vrot.slane %v2363, %v2431
    %v2434 = vunpack.c.l.s4 1983009808
    %v2435 = vunpack.c.0.s8 %v2434
    %v2436 = vlaneseq
    %v2437 = vshrl.u32 %v2436, 7
    %v2438 = vsub.s32 %v2435, %v2437
    %v2439 = vrot.slane %v2425, %v2438
    %v2440 = vcombine.high %v2432, %v2432
    %v2441 = vcombine.high %v2364, %v2364
    %v2443 = vunpack.c.l.s4 1983009808
    %v2444 = vunpack.c.0.s8 %v2443
    %v2445 = vlaneseq
    %v2446 = vshrl.u32 %v2445, 7
    %v2447 = vsub.s32 %v2444, %v2446
    %v2448 = vrot.slane %v2364, %v2447
    %v2450 = vunpack.c.l.s4 1983009808
    %v2451 = vunpack.c.0.s8 %v2450
    %v2452 = vlaneseq
    %v2453 = vshrl.u32 %v2452, 7
    %v2454 = vsub.s32 %v2451, %v2453
    %v2455 = vrot.slane %v2441, %v2454
    %v2456 = vcombine.high %v2448, %v2448
    %v2457 = vcombine.high %v2365, %v2365
    %v2459 = vunpack.c.l.s4 1983009808
    %v2460 = vunpack.c.0.s8 %v2459
    %v2461 = vlaneseq
    %v2462 = vshrl.u32 %v2461, 7
    %v2463 = vsub.s32 %v2460, %v2462
    %v2464 = vrot.slane %v2365, %v2463
    %v2466 = vunpack.c.l.s4 1983009808
    %v2467 = vunpack.c.0.s8 %v2466
    %v2468 = vlaneseq
    %v2469 = vshrl.u32 %v2468, 7
    %v2470 = vsub.s32 %v2467, %v2469
    %v2471 = vrot.slane %v2457, %v2470
    %v2472 = vcombine.high %v2464, %v2464
    %v2473 = vcombine.high %v2366, %v2366
    %v2475 = vunpack.c.l.s4 1983009808
    %v2476 = vunpack.c.0.s8 %v2475
    %v2477 = vlaneseq
    %v2478 = vshrl.u32 %v2477, 7
    %v2479 = vsub.s32 %v2476, %v2478
    %v2480 = vrot.slane %v2366, %v2479
    %v2482 = vunpack.c.l.s4 1983009808
    %v2483 = vunpack.c.0.s8 %v2482
    %v2484 = vlaneseq
    %v2485 = vshrl.u32 %v2484, 7
    %v2486 = vsub.s32 %v2483, %v2485
    %v2487 = vrot.slane %v2473, %v2486
    %v2488 = vcombine.high %v2480, %v2480
    %v2489 = vcombine.high %v2367, %v2367
    %v2491 = vunpack.c.l.s4 1983009808
    %v2492 = vunpack.c.0.s8 %v2491
    %v2493 = vlaneseq
    %v2494 = vshrl.u32 %v2493, 7
    %v2495 = vsub.s32 %v2492, %v2494
    %v2496 = vrot.slane %v2367, %v2495
    %v2498 = vunpack.c.l.s4 1983009808
    %v2499 = vunpack.c.0.s8 %v2498
    %v2500 = vlaneseq
    %v2501 = vshrl.u32 %v2500, 7
    %v2502 = vsub.s32 %v2499, %v2501
    %v2503 = vrot.slane %v2489, %v2502
    %v2504 = vcombine.high %v2496, %v2496
    %v2505 = vcombine.high %v2368, %v2368
    %v2507 = vunpack.c.l.s4 1983009808
    %v2508 = vunpack.c.0.s8 %v2507
    %v2509 = vlaneseq
    %v2510 = vshrl.u32 %v2509, 7
    %v2511 = vsub.s32 %v2508, %v2510
    %v2512 = vrot.slane %v2368, %v2511
    %v2514 = vunpack.c.l.s4 1983009808
    %v2515 = vunpack.c.0.s8 %v2514
    %v2516 = vlaneseq
    %v2517 = vshrl.u32 %v2516, 7
    %v2518 = vsub.s32 %v2515, %v2517
    %v2519 = vrot.slane %v2505, %v2518
    %v2520 = vcombine.high %v2512, %v2512
    %v2521 = vcombine.high %v2369, %v2369
    %v2523 = vunpack.c.l.s4 1983009808
    %v2524 = vunpack.c.0.s8 %v2523
    %v2525 = vlaneseq
    %v2526 = vshrl.u32 %v2525, 7
    %v2527 = vsub.s32 %v2524, %v2526
    %v2528 = vrot.slane %v2369, %v2527
    %v2530 = vunpack.c.l.s4 1983009808
    %v2531 = vunpack.c.0.s8 %v2530
    %v2532 = vlaneseq
    %v2533 = vshrl.u32 %v2532, 7
    %v2534 = vsub.s32 %v2531, %v2533
    %v2535 = vrot.slane %v2521, %v2534
    %v2536 = vcombine.high %v2528, %v2528
    %v2537 = vcombine.high %v2370, %v2370
    %v2539 = vunpack.c.l.s4 1983009808
    %v2540 = vunpack.c.0.s8 %v2539
    %v2541 = vlaneseq
    %v2542 = vshrl.u32 %v2541, 7
    %v2543 = vsub.s32 %v2540, %v2542
    %v2544 = vrot.slane %v2370, %v2543
    %v2546 = vunpack.c.l.s4 1983009808
    %v2547 = vunpack.c.0.s8 %v2546
    %v2548 = vlaneseq
    %v2549 = vshrl.u32 %v2548, 7
    %v2550 = vsub.s32 %v2547, %v2549
    %v2551 = vrot.slane %v2537, %v2550
    %v2552 = vcombine.high %v2544, %v2544
    %v2553 = vcombine.high %v2371, %v2371
    %v2555 = vunpack.c.l.s4 1983009808
    %v2556 = vunpack.c.0.s8 %v2555
    %v2557 = vlaneseq
    %v2558 = vshrl.u32 %v2557, 7
    %v2559 = vsub.s32 %v2556, %v2558
    %v2560 = vrot.slane %v2371, %v2559
    %v2562 = vunpack.c.l.s4 1983009808
    %v2563 = vunpack.c.0.s8 %v2562
    %v2564 = vlaneseq
    %v2565 = vshrl.u32 %v2564, 7
    %v2566 = vsub.s32 %v2563, %v2565
    %v2567 = vrot.slane %v2553, %v2566
    %v2568 = vcombine.high %v2560, %v2560
    %v2569 = vcombine.high %v2372, %v2372
    %v2571 = vunpack.c.l.s4 1983009808
    %v2572 = vunpack.c.0.s8 %v2571
    %v2573 = vlaneseq
    %v2574 = vshrl.u32 %v2573, 7
    %v2575 = vsub.s32 %v2572, %v2574
    %v2576 = vrot.slane %v2372, %v2575
    %v2578 = vunpack.c.l.s4 1983009808
    %v2579 = vunpack.c.0.s8 %v2578
    %v2580 = vlaneseq
    %v2581 = vshrl.u32 %v2580, 7
    %v2582 = vsub.s32 %v2579, %v2581
    %v2583 = vrot.slane %v2569, %v2582
    %v2584 = vcombine.high %v2576, %v2576
    %v2585 = vcombine.high %v2373, %v2373
    %v2587 = vunpack.c.l.s4 1983009808
    %v2588 = vunpack.c.0.s8 %v2587
    %v2589 = vlaneseq
    %v2590 = vshrl.u32 %v2589, 7
    %v2591 = vsub.s32 %v2588, %v2590
    %v2592 = vrot.slane %v2373, %v2591
    %v2594 = vunpack.c.l.s4 1983009808
    %v2595 = vunpack.c.0.s8 %v2594
    %v2596 = vlaneseq
    %v2597 = vshrl.u32 %v2596, 7
    %v2598 = vsub.s32 %v2595, %v2597
    %v2599 = vrot.slane %v2585, %v2598
    %v2600 = vcombine.high %v2592, %v2592
    %v2601 = vcombine.high %v2374, %v2374
    %v2603 = vunpack.c.l.s4 1983009808
    %v2604 = vunpack.c.0.s8 %v2603
    %v2605 = vlaneseq
    %v2606 = vshrl.u32 %v2605, 7
    %v2607 = vsub.s32 %v2604, %v2606
    %v2608 = vrot.slane %v2374, %v2607
    %v2610 = vunpack.c.l.s4 1983009808
    %v2611 = vunpack.c.0.s8 %v2610
    %v2612 = vlaneseq
    %v2613 = vshrl.u32 %v2612, 7
    %v2614 = vsub.s32 %v2611, %v2613
    %v2615 = vrot.slane %v2601, %v2614
    %v2616 = vcombine.high %v2608, %v2608
    %v2617 = vcombine.high %v2375, %v2375
    %v2619 = vunpack.c.l.s4 1983009808
    %v2620 = vunpack.c.0.s8 %v2619
    %v2621 = vlaneseq
    %v2622 = vshrl.u32 %v2621, 7
    %v2623 = vsub.s32 %v2620, %v2622
    %v2624 = vrot.slane %v2375, %v2623
    %v2626 = vunpack.c.l.s4 1983009808
    %v2627 = vunpack.c.0.s8 %v2626
    %v2628 = vlaneseq
    %v2629 = vshrl.u32 %v2628, 7
    %v2630 = vsub.s32 %v2627, %v2629
    %v2631 = vrot.slane %v2617, %v2630
    %v2632 = vcombine.high %v2624, %v2624
    %v2633 = vcombine.high %v2376, %v2376
    %v2635 = vunpack.c.l.s4 1983009808
    %v2636 = vunpack.c.0.s8 %v2635
    %v2637 = vlaneseq
    %v2638 = vshrl.u32 %v2637, 7
    %v2639 = vsub.s32 %v2636, %v2638
    %v2640 = vrot.slane %v2376, %v2639
    %v2642 = vunpack.c.l.s4 1983009808
    %v2643 = vunpack.c.0.s8 %v2642
    %v2644 = vlaneseq
    %v2645 = vshrl.u32 %v2644, 7
    %v2646 = vsub.s32 %v2643, %v2645
    %v2647 = vrot.slane %v2633, %v2646
    %v2648 = vcombine.high %v2640, %v2640
    %v2649 = vld [vmem:[#allocation2 + $0x210] sm:$0xff]
    %v2650 = vld [vmem:[#allocation2 + $0x218] sm:$0xff]
    %v2651 = vld [vmem:[#allocation2 + $0x220] sm:$0xff]
    %v2652 = vld [vmem:[#allocation2 + $0x228] sm:$0xff]
    %v2653 = vld [vmem:[#allocation2 + $0x230] sm:$0xff]
    %v2654 = vld [vmem:[#allocation2 + $0x238] sm:$0xff]
    %v2655 = vld [vmem:[#allocation2 + $0x240] sm:$0xff]
    %v2656 = vld [vmem:[#allocation2 + $0x248] sm:$0xff]
    %v2657 = vld [vmem:[#allocation2 + $0x250] sm:$0xff]
    %v2658 = vld [vmem:[#allocation2 + $0x258] sm:$0xff]
    %v2659 = vld [vmem:[#allocation2 + $0x260] sm:$0xff]
    %v2660 = vld [vmem:[#allocation2 + $0x268] sm:$0xff]
    %v2661 = vld [vmem:[#allocation2 + $0x270] sm:$0xff]
    %v2662 = vld [vmem:[#allocation2 + $0x278] sm:$0xff]
    %v2663 = vld [vmem:[#allocation2 + $0x280] sm:$0xff]
    %v2664 = vld [vmem:[#allocation2 + $0x288] sm:$0xff]
    %v2665 = vld [vmem:[#allocation5 + $0x38] sm:$0x1]
    %v2666 = vlaneseq
    %v2667 = vshrl.u32 %v2666, 7
    %v2668 = vsub.s32 0, %v2667
    %v2669 = vrot.slane %v2665, %v2668
    %v2670 = vcombine.low %v2400, %v2408
    %v2671 = vcombine.low %v2407, %v2416
    %v2673 = vunpack.c.l.s4 1983009808
    %v2674 = vunpack.c.0.s8 %v2673
    %v2675 = vlaneseq
    %v2676 = vshrl.u32 %v2675, 7
    %v2677 = vsub.s32 %v2674, %v2676
    %v2678 = vrot.slane %v2670, %v2677
    %v2680 = vunpack.c.l.s4 1983009808
    %v2681 = vunpack.c.0.s8 %v2680
    %v2682 = vlaneseq
    %v2683 = vshrl.u32 %v2682, 7
    %v2684 = vsub.s32 %v2681, %v2683
    %v2685 = vrot.slane %v2671, %v2684
    %v2686 = vcombine.low %v2678, %v2685
    %v2687 = vcombine.low %v2424, %v2423
    %v2688 = vcombine.low %v2432, %v2440
    %v2690 = vunpack.c.l.s4 1983009808
    %v2691 = vunpack.c.0.s8 %v2690
    %v2692 = vlaneseq
    %v2693 = vshrl.u32 %v2692, 7
    %v2694 = vsub.s32 %v2691, %v2693
    %v2695 = vrot.slane %v2687, %v2694
    %v2697 = vunpack.c.l.s4 1983009808
    %v2698 = vunpack.c.0.s8 %v2697
    %v2699 = vlaneseq
    %v2700 = vshrl.u32 %v2699, 7
    %v2701 = vsub.s32 %v2698, %v2700
    %v2702 = vrot.slane %v2688, %v2701
    %v2703 = vcombine.low %v2695, %v2702
    %v2704 = vcombine.low %v2439, %v2448
    %v2705 = vcombine.low %v2456, %v2455
    %v2707 = vunpack.c.l.s4 1983009808
    %v2708 = vunpack.c.0.s8 %v2707
    %v2709 = vlaneseq
    %v2710 = vshrl.u32 %v2709, 7
    %v2711 = vsub.s32 %v2708, %v2710
    %v2712 = vrot.slane %v2704, %v2711
    %v2714 = vunpack.c.l.s4 1983009808
    %v2715 = vunpack.c.0.s8 %v2714
    %v2716 = vlaneseq
    %v2717 = vshrl.u32 %v2716, 7
    %v2718 = vsub.s32 %v2715, %v2717
    %v2719 = vrot.slane %v2705, %v2718
    %v2720 = vcombine.low %v2712, %v2719
    %v2721 = vcombine.low %v2464, %v2472
    %v2722 = vcombine.low %v2471, %v2480
    %v2724 = vunpack.c.l.s4 1983009808
    %v2725 = vunpack.c.0.s8 %v2724
    %v2726 = vlaneseq
    %v2727 = vshrl.u32 %v2726, 7
    %v2728 = vsub.s32 %v2725, %v2727
    %v2729 = vrot.slane %v2721, %v2728
    %v2731 = vunpack.c.l.s4 1983009808
    %v2732 = vunpack.c.0.s8 %v2731
    %v2733 = vlaneseq
    %v2734 = vshrl.u32 %v2733, 7
    %v2735 = vsub.s32 %v2732, %v2734
    %v2736 = vrot.slane %v2722, %v2735
    %v2737 = vcombine.low %v2729, %v2736
    %v2738 = vcombine.low %v2488, %v2487
    %v2739 = vcombine.low %v2496, %v2504
    %v2741 = vunpack.c.l.s4 1983009808
    %v2742 = vunpack.c.0.s8 %v2741
    %v2743 = vlaneseq
    %v2744 = vshrl.u32 %v2743, 7
    %v2745 = vsub.s32 %v2742, %v2744
    %v2746 = vrot.slane %v2738, %v2745
    %v2748 = vunpack.c.l.s4 1983009808
    %v2749 = vunpack.c.0.s8 %v2748
    %v2750 = vlaneseq
    %v2751 = vshrl.u32 %v2750, 7
    %v2752 = vsub.s32 %v2749, %v2751
    %v2753 = vrot.slane %v2739, %v2752
    %v2754 = vcombine.low %v2746, %v2753
    %v2755 = vcombine.low %v2503, %v2512
    %v2756 = vcombine.low %v2520, %v2519
    %v2758 = vunpack.c.l.s4 1983009808
    %v2759 = vunpack.c.0.s8 %v2758
    %v2760 = vlaneseq
    %v2761 = vshrl.u32 %v2760, 7
    %v2762 = vsub.s32 %v2759, %v2761
    %v2763 = vrot.slane %v2755, %v2762
    %v2765 = vunpack.c.l.s4 1983009808
    %v2766 = vunpack.c.0.s8 %v2765
    %v2767 = vlaneseq
    %v2768 = vshrl.u32 %v2767, 7
    %v2769 = vsub.s32 %v2766, %v2768
    %v2770 = vrot.slane %v2756, %v2769
    %v2771 = vcombine.low %v2763, %v2770
    %v2772 = vcombine.low %v2528, %v2536
    %v2773 = vcombine.low %v2535, %v2544
    %v2775 = vunpack.c.l.s4 1983009808
    %v2776 = vunpack.c.0.s8 %v2775
    %v2777 = vlaneseq
    %v2778 = vshrl.u32 %v2777, 7
    %v2779 = vsub.s32 %v2776, %v2778
    %v2780 = vrot.slane %v2772, %v2779
    %v2782 = vunpack.c.l.s4 1983009808
    %v2783 = vunpack.c.0.s8 %v2782
    %v2784 = vlaneseq
    %v2785 = vshrl.u32 %v2784, 7
    %v2786 = vsub.s32 %v2783, %v2785
    %v2787 = vrot.slane %v2773, %v2786
    %v2788 = vcombine.low %v2780, %v2787
    %v2789 = vcombine.low %v2552, %v2551
    %v2790 = vcombine.low %v2560, %v2568
    %v2792 = vunpack.c.l.s4 1983009808
    %v2793 = vunpack.c.0.s8 %v2792
    %v2794 = vlaneseq
    %v2795 = vshrl.u32 %v2794, 7
    %v2796 = vsub.s32 %v2793, %v2795
    %v2797 = vrot.slane %v2789, %v2796
    %v2799 = vunpack.c.l.s4 1983009808
    %v2800 = vunpack.c.0.s8 %v2799
    %v2801 = vlaneseq
    %v2802 = vshrl.u32 %v2801, 7
    %v2803 = vsub.s32 %v2800, %v2802
    %v2804 = vrot.slane %v2790, %v2803
    %v2805 = vcombine.low %v2797, %v2804
    %v2806 = vcombine.low %v2567, %v2576
    %v2807 = vcombine.low %v2584, %v2583
    %v2809 = vunpack.c.l.s4 1983009808
    %v2810 = vunpack.c.0.s8 %v2809
    %v2811 = vlaneseq
    %v2812 = vshrl.u32 %v2811, 7
    %v2813 = vsub.s32 %v2810, %v2812
    %v2814 = vrot.slane %v2806, %v2813
    %v2816 = vunpack.c.l.s4 1983009808
    %v2817 = vunpack.c.0.s8 %v2816
    %v2818 = vlaneseq
    %v2819 = vshrl.u32 %v2818, 7
    %v2820 = vsub.s32 %v2817, %v2819
    %v2821 = vrot.slane %v2807, %v2820
    %v2822 = vcombine.low %v2814, %v2821
    %v2823 = vcombine.low %v2592, %v2600
    %v2824 = vcombine.low %v2599, %v2608
    %v2826 = vunpack.c.l.s4 1983009808
    %v2827 = vunpack.c.0.s8 %v2826
    %v2828 = vlaneseq
    %v2829 = vshrl.u32 %v2828, 7
    %v2830 = vsub.s32 %v2827, %v2829
    %v2831 = vrot.slane %v2823, %v2830
    %v2833 = vunpack.c.l.s4 1983009808
    %v2834 = vunpack.c.0.s8 %v2833
    %v2835 = vlaneseq
    %v2836 = vshrl.u32 %v2835, 7
    %v2837 = vsub.s32 %v2834, %v2836
    %v2838 = vrot.slane %v2824, %v2837
    %v2839 = vcombine.low %v2831, %v2838
    %v2840 = vcombine.low %v2616, %v2615
    %v2841 = vcombine.low %v2624, %v2632
    %v2843 = vunpack.c.l.s4 1983009808
    %v2844 = vunpack.c.0.s8 %v2843
    %v2845 = vlaneseq
    %v2846 = vshrl.u32 %v2845, 7
    %v2847 = vsub.s32 %v2844, %v2846
    %v2848 = vrot.slane %v2840, %v2847
    %v2850 = vunpack.c.l.s4 1983009808
    %v2851 = vunpack.c.0.s8 %v2850
    %v2852 = vlaneseq
    %v2853 = vshrl.u32 %v2852, 7
    %v2854 = vsub.s32 %v2851, %v2853
    %v2855 = vrot.slane %v2841, %v2854
    %v2856 = vcombine.low %v2848, %v2855
    %v2857 = vcombine.low %v2631, %v2640
    %v2858 = vcombine.low %v2648, %v2647
    %v2860 = vunpack.c.l.s4 1983009808
    %v2861 = vunpack.c.0.s8 %v2860
    %v2862 = vlaneseq
    %v2863 = vshrl.u32 %v2862, 7
    %v2864 = vsub.s32 %v2861, %v2863
    %v2865 = vrot.slane %v2857, %v2864
    %v2867 = vunpack.c.l.s4 1983009808
    %v2868 = vunpack.c.0.s8 %v2867
    %v2869 = vlaneseq
    %v2870 = vshrl.u32 %v2869, 7
    %v2871 = vsub.s32 %v2868, %v2870
    %v2872 = vrot.slane %v2858, %v2871
    %v2873 = vcombine.low %v2865, %v2872
    %2886 = vmatprep.subr.mxu0 0.0
    %2887 = vmatpush1.msra.mxu0 %v2649
    %2888 = vmatprep.subr.mxu0 0.0
    %2889 = vmatpush1.msra.mxu0 %v2650
    %2890 = vmatprep.subr.mxu0 0.0
    %2891 = vmatpush1.msra.mxu0 %v2651
    %2892 = vmatprep.subr.mxu0 0.0
    %2893 = vmatpush1.msra.mxu0 %v2652
    %2894 = vmatprep.subr.mxu0 0.0
    %2895 = vmatpush1.msra.mxu0 %v2653
    %2896 = vmatprep.subr.mxu0 0.0
    %2897 = vmatpush1.msra.mxu0 %v2654
    %2898 = vmatprep.subr.mxu0 0.0
    %2899 = vmatpush1.msra.mxu0 %v2655
    %2900 = vmatprep.subr.mxu0 0.0
    %2901 = vmatpush1.msra.mxu0 %v2656
    %2902 = vmatprep.subr.mxu0 0.0
    %2903 = vmatpush1.msra.mxu0 %v2657
    %2904 = vmatprep.subr.mxu0 0.0
    %2905 = vmatpush1.msra.mxu0 %v2658
    %2906 = vmatprep.subr.mxu0 0.0
    %2907 = vmatpush1.msra.mxu0 %v2659
    %2908 = vmatprep.subr.mxu0 0.0
    %2909 = vmatpush1.msra.mxu0 %v2660
    %2910 = vmatprep.subr.mxu0 0.0
    %2911 = vmatpush1.msra.mxu0 %v2661
    %2912 = vmatprep.subr.mxu0 0.0
    %2913 = vmatpush1.msra.mxu0 %v2662
    %2914 = vmatprep.subr.mxu0 0.0
    %2915 = vmatpush1.msra.mxu0 %v2663
    %2916 = vmatprep.subr.mxu0 0.0
    %2917 = vmatpush1.msra.mxu0 %v2664
    %2918 = vmatprep.subr.mxu0 0.0
    %2919 = vmatpush1.msra.mxu0 0.0
    %2920 = vmatprep.subr.mxu0 0.0
    %2921 = vmatpush1.msra.mxu0 0.0
    %2922 = vmatprep.subr.mxu0 0.0
    %2923 = vmatpush1.msra.mxu0 0.0
    %2924 = vmatprep.subr.mxu0 0.0
    %2925 = vmatpush1.msra.mxu0 0.0
    %2926 = vmatprep.subr.mxu0 0.0
    %2927 = vmatpush1.msra.mxu0 0.0
    %2928 = vmatprep.subr.mxu0 0.0
    %2929 = vmatpush1.msra.mxu0 0.0
    %2930 = vmatprep.subr.mxu0 0.0
    %2931 = vmatpush1.msra.mxu0 0.0
    %2932 = vmatprep.subr.mxu0 0.0
    %2933 = vmatpush1.msra.mxu0 0.0
    %2934 = vmatprep.subr.mxu0 0.0
    %2935 = vmatpush1.msra.mxu0 0.0
    %2936 = vmatprep.subr.mxu0 0.0
    %2937 = vmatpush1.msra.mxu0 0.0
    %2938 = vmatprep.subr.mxu0 0.0
    %2939 = vmatpush1.msra.mxu0 0.0
    %2940 = vmatprep.subr.mxu0 0.0
    %2941 = vmatpush1.msra.mxu0 0.0
    %2942 = vmatprep.subr.mxu0 0.0
    %2943 = vmatpush1.msra.mxu0 0.0
    %2944 = vmatprep.subr.mxu0 0.0
    %2945 = vmatpush1.msra.mxu0 0.0
    %2946 = vmatprep.subr.mxu0 0.0
    %2947 = vmatpush1.msra.mxu0 0.0
    %2948 = vmatprep.subr.mxu0 0.0
    %2949 = vmatpush1.msra.mxu0 0.0
    %2950 = vmatprep.mubr.f32.mxu0 0.0
    %2951 = vmatmul.mubr.f32.gmra.mrb[0].mxu0 %v2686
    %v2952 = vpop.f32.mrb[0].mxu0
    %v2953 = vadd.f32 %v2669, %v2952
    %v2954 = vpop.f32.mrb[0].mxu0
    %2955 = vmatprep.mubr.f32.mxu0 0.0
    %2956 = vmatmul.mubr.f32.gmra.mrb[0].mxu0 %v2703
    %v2957 = vpop.f32.mrb[0].mxu0
    %v2958 = vadd.f32 %v2669, %v2957
    %v2959 = vpop.f32.mrb[0].mxu0
    %2960 = vmatprep.mubr.f32.mxu0 0.0
    %2961 = vmatmul.mubr.f32.gmra.mrb[0].mxu0 %v2720
    %v2962 = vpop.f32.mrb[0].mxu0
    %v2963 = vadd.f32 %v2669, %v2962
    %v2964 = vpop.f32.mrb[0].mxu0
    %2965 = vmatprep.mubr.f32.mxu0 0.0
    %2966 = vmatmul.mubr.f32.gmra.mrb[0].mxu0 %v2737
    %v2967 = vpop.f32.mrb[0].mxu0
    %v2968 = vadd.f32 %v2669, %v2967
    %v2969 = vpop.f32.mrb[0].mxu0
    %2970 = vmatprep.mubr.f32.mxu0 0.0
    %2971 = vmatmul.mubr.f32.gmra.mrb[0].mxu0 %v2754
    %v2972 = vpop.f32.mrb[0].mxu0
    %v2973 = vadd.f32 %v2669, %v2972
    %v2974 = vpop.f32.mrb[0].mxu0
    %2975 = vmatprep.mubr.f32.mxu0 0.0
    %2976 = vmatmul.mubr.f32.gmra.mrb[0].mxu0 %v2771
    %v2977 = vpop.f32.mrb[0].mxu0
    %v2978 = vadd.f32 %v2669, %v2977
    %v2979 = vpop.f32.mrb[0].mxu0
    %2980 = vmatprep.mubr.f32.mxu0 0.0
    %2981 = vmatmul.mubr.f32.gmra.mrb[0].mxu0 %v2788
    %v2982 = vpop.f32.mrb[0].mxu0
    %v2983 = vadd.f32 %v2669, %v2982
    %v2984 = vpop.f32.mrb[0].mxu0
    %2985 = vmatprep.mubr.f32.mxu0 0.0
    %2986 = vmatmul.mubr.f32.gmra.mrb[0].mxu0 %v2805
    %v2987 = vpop.f32.mrb[0].mxu0
    %v2988 = vadd.f32 %v2669, %v2987
    %v2989 = vpop.f32.mrb[0].mxu0
    %2990 = vmatprep.mubr.f32.mxu0 0.0
    %2991 = vmatmul.mubr.f32.gmra.mrb[0].mxu0 %v2822
    %v2992 = vpop.f32.mrb[0].mxu0
    %v2993 = vadd.f32 %v2669, %v2992
    %v2994 = vpop.f32.mrb[0].mxu0
    %2995 = vmatprep.mubr.f32.mxu0 0.0
    %2996 = vmatmul.mubr.f32.gmra.mrb[0].mxu0 %v2839
    %v2997 = vpop.f32.mrb[0].mxu0
    %v2998 = vadd.f32 %v2669, %v2997
    %v2999 = vpop.f32.mrb[0].mxu0
    %3000 = vmatprep.mubr.f32.mxu0 0.0
    %3001 = vmatmul.mubr.f32.gmra.mrb[0].mxu0 %v2856
    %v3002 = vpop.f32.mrb[0].mxu0
    %v3003 = vadd.f32 %v2669, %v3002
    %v3004 = vpop.f32.mrb[0].mxu0
    %3005 = vmatprep.mubr.f32.mxu0 0.0
    %3006 = vmatmul.mubr.f32.gmra.mrb[0].mxu0 %v2873
    %v3007 = vpop.f32.mrb[0].mxu0
    %v3008 = vadd.f32 %v2669, %v3007
    %v3009 = vpop.f32.mrb[0].mxu0
    %3010 = vdwg.mxu0
    %v3011 = vmax.f32 %v2953, 0.0
    %v3012 = vmax.f32 %v2958, 0.0
    %v3013 = vmax.f32 %v2963, 0.0
    %v3014 = vmax.f32 %v2968, 0.0
    %v3015 = vmax.f32 %v2973, 0.0
    %v3016 = vmax.f32 %v2978, 0.0
    %v3017 = vmax.f32 %v2983, 0.0
    %v3018 = vmax.f32 %v2988, 0.0
    %v3019 = vmax.f32 %v2993, 0.0
    %v3020 = vmax.f32 %v2998, 0.0
    %v3021 = vmax.f32 %v3003, 0.0
    %v3022 = vmax.f32 %v3008, 0.0
    %v3023 = vld [vmem:[#allocation2 + $0x290] sm:$0xff]
    %v3024 = vld [vmem:[#allocation2 + $0x298] sm:$0xff]
    %v3025 = vld [vmem:[#allocation2 + $0x2a0] sm:$0xff]
    %v3026 = vld [vmem:[#allocation2 + $0x2a8] sm:$0xff]
    %v3027 = vld [vmem:[#allocation2 + $0x2b0] sm:$0xff]
    %v3028 = vld [vmem:[#allocation2 + $0x2b8] sm:$0xff]
    %v3029 = vld [vmem:[#allocation2 + $0x2c0] sm:$0xff]
    %v3030 = vld [vmem:[#allocation2 + $0x2c8] sm:$0xff]
    %v3031 = vld [vmem:[#allocation2 + $0x2d0] sm:$0xff]
    %v3032 = vld [vmem:[#allocation2 + $0x2d8] sm:$0xff]
    %v3033 = vld [vmem:[#allocation2 + $0x2e0] sm:$0xff]
    %v3034 = vld [vmem:[#allocation2 + $0x2e8] sm:$0xff]
    %v3035 = vld [vmem:[#allocation2 + $0x2f0] sm:$0xff]
    %v3036 = vld [vmem:[#allocation2 + $0x2f8] sm:$0xff]
    %v3037 = vld [vmem:[#allocation2 + $0x300] sm:$0xff]
    %v3038 = vld [vmem:[#allocation2 + $0x308] sm:$0xff]
    %v3039 = vld [vmem:[#allocation5 + $0x40] sm:$0x1]
    %v3040 = vlaneseq
    %v3041 = vshrl.u32 %v3040, 7
    %v3042 = vsub.s32 0, %v3041
    %v3043 = vrot.slane %v3039, %v3042
    %3044 = vmatprep.subr.mxu0 0.0
    %3045 = vmatpush1.msra.mxu0 %v3023
    %3046 = vmatprep.subr.mxu0 0.0
    %3047 = vmatpush1.msra.mxu0 %v3024
    %3048 = vmatprep.subr.mxu0 0.0
    %3049 = vmatpush1.msra.mxu0 %v3025
    %3050 = vmatprep.subr.mxu0 0.0
    %3051 = vmatpush1.msra.mxu0 %v3026
    %3052 = vmatprep.subr.mxu0 0.0
    %3053 = vmatpush1.msra.mxu0 %v3027
    %3054 = vmatprep.subr.mxu0 0.0
    %3055 = vmatpush1.msra.mxu0 %v3028
    %3056 = vmatprep.subr.mxu0 0.0
    %3057 = vmatpush1.msra.mxu0 %v3029
    %3058 = vmatprep.subr.mxu0 0.0
    %3059 = vmatpush1.msra.mxu0 %v3030
    %3060 = vmatprep.subr.mxu0 0.0
    %3061 = vmatpush1.msra.mxu0 %v3031
    %3062 = vmatprep.subr.mxu0 0.0
    %3063 = vmatpush1.msra.mxu0 %v3032
    %3064 = vmatprep.subr.mxu0 0.0
    %3065 = vmatpush1.msra.mxu0 %v3033
    %3066 = vmatprep.subr.mxu0 0.0
    %3067 = vmatpush1.msra.mxu0 %v3034
    %3068 = vmatprep.subr.mxu0 0.0
    %3069 = vmatpush1.msra.mxu0 %v3035
    %3070 = vmatprep.subr.mxu0 0.0
    %3071 = vmatpush1.msra.mxu0 %v3036
    %3072 = vmatprep.subr.mxu0 0.0
    %3073 = vmatpush1.msra.mxu0 %v3037
    %3074 = vmatprep.subr.mxu0 0.0
    %3075 = vmatpush1.msra.mxu0 %v3038
    %3076 = vmatprep.subr.mxu0 0.0
    %3077 = vmatpush1.msra.mxu0 0.0
    %3078 = vmatprep.subr.mxu0 0.0
    %3079 = vmatpush1.msra.mxu0 0.0
    %3080 = vmatprep.subr.mxu0 0.0
    %3081 = vmatpush1.msra.mxu0 0.0
    %3082 = vmatprep.subr.mxu0 0.0
    %3083 = vmatpush1.msra.mxu0 0.0
    %3084 = vmatprep.subr.mxu0 0.0
    %3085 = vmatpush1.msra.mxu0 0.0
    %3086 = vmatprep.subr.mxu0 0.0
    %3087 = vmatpush1.msra.mxu0 0.0
    %3088 = vmatprep.subr.mxu0 0.0
    %3089 = vmatpush1.msra.mxu0 0.0
    %3090 = vmatprep.subr.mxu0 0.0
    %3091 = vmatpush1.msra.mxu0 0.0
    %3092 = vmatprep.subr.mxu0 0.0
    %3093 = vmatpush1.msra.mxu0 0.0
    %3094 = vmatprep.subr.mxu0 0.0
    %3095 = vmatpush1.msra.mxu0 0.0
    %3096 = vmatprep.subr.mxu0 0.0
    %3097 = vmatpush1.msra.mxu0 0.0
    %3098 = vmatprep.subr.mxu0 0.0
    %3099 = vmatpush1.msra.mxu0 0.0
    %3100 = vmatprep.subr.mxu0 0.0
    %3101 = vmatpush1.msra.mxu0 0.0
    %3102 = vmatprep.subr.mxu0 0.0
    %3103 = vmatpush1.msra.mxu0 0.0
    %3104 = vmatprep.subr.mxu0 0.0
    %3105 = vmatpush1.msra.mxu0 0.0
    %3106 = vmatprep.subr.mxu0 0.0
    %3107 = vmatpush1.msra.mxu0 0.0
    %3108 = vmatprep.mubr.f32.mxu0 0.0
    %3109 = vmatmul.mubr.f32.gmra.mrb[0].mxu0 %v3011
    %v3110 = vpop.f32.mrb[0].mxu0
    %v3111 = vadd.f32 %v3043, %v3110
    %v3112 = vpop.f32.mrb[0].mxu0
    %3113 = vmatprep.mubr.f32.mxu0 0.0
    %3114 = vmatmul.mubr.f32.gmra.mrb[0].mxu0 %v3012
    %v3115 = vpop.f32.mrb[0].mxu0
    %v3116 = vadd.f32 %v3043, %v3115
    %v3117 = vpop.f32.mrb[0].mxu0
    %3118 = vmatprep.mubr.f32.mxu0 0.0
    %3119 = vmatmul.mubr.f32.gmra.mrb[0].mxu0 %v3013
    %v3120 = vpop.f32.mrb[0].mxu0
    %v3121 = vadd.f32 %v3043, %v3120
    %v3122 = vpop.f32.mrb[0].mxu0
    %3123 = vmatprep.mubr.f32.mxu0 0.0
    %3124 = vmatmul.mubr.f32.gmra.mrb[0].mxu0 %v3014
    %v3125 = vpop.f32.mrb[0].mxu0
    %v3126 = vadd.f32 %v3043, %v3125
    %v3127 = vpop.f32.mrb[0].mxu0
    %3128 = vmatprep.mubr.f32.mxu0 0.0
    %3129 = vmatmul.mubr.f32.gmra.mrb[0].mxu0 %v3015
    %v3130 = vpop.f32.mrb[0].mxu0
    %v3131 = vadd.f32 %v3043, %v3130
    %v3132 = vpop.f32.mrb[0].mxu0
    %3133 = vmatprep.mubr.f32.mxu0 0.0
    %3134 = vmatmul.mubr.f32.gmra.mrb[0].mxu0 %v3016
    %v3135 = vpop.f32.mrb[0].mxu0
    %v3136 = vadd.f32 %v3043, %v3135
    %v3137 = vpop.f32.mrb[0].mxu0
    %3138 = vmatprep.mubr.f32.mxu0 0.0
    %3139 = vmatmul.mubr.f32.gmra.mrb[0].mxu0 %v3017
    %v3140 = vpop.f32.mrb[0].mxu0
    %v3141 = vadd.f32 %v3043, %v3140
    %v3142 = vpop.f32.mrb[0].mxu0
    %3143 = vmatprep.mubr.f32.mxu0 0.0
    %3144 = vmatmul.mubr.f32.gmra.mrb[0].mxu0 %v3018
    %v3145 = vpop.f32.mrb[0].mxu0
    %v3146 = vadd.f32 %v3043, %v3145
    %v3147 = vpop.f32.mrb[0].mxu0
    %3148 = vmatprep.mubr.f32.mxu0 0.0
    %3149 = vmatmul.mubr.f32.gmra.mrb[0].mxu0 %v3019
    %v3150 = vpop.f32.mrb[0].mxu0
    %v3151 = vadd.f32 %v3043, %v3150
    %v3152 = vpop.f32.mrb[0].mxu0
    %3153 = vmatprep.mubr.f32.mxu0 0.0
    %3154 = vmatmul.mubr.f32.gmra.mrb[0].mxu0 %v3020
    %v3155 = vpop.f32.mrb[0].mxu0
    %v3156 = vadd.f32 %v3043, %v3155
    %v3157 = vpop.f32.mrb[0].mxu0
    %3158 = vmatprep.mubr.f32.mxu0 0.0
    %3159 = vmatmul.mubr.f32.gmra.mrb[0].mxu0 %v3021
    %v3160 = vpop.f32.mrb[0].mxu0
    %v3161 = vadd.f32 %v3043, %v3160
    %v3162 = vpop.f32.mrb[0].mxu0
    %3163 = vmatprep.mubr.f32.mxu0 0.0
    %3164 = vmatmul.mubr.f32.gmra.mrb[0].mxu0 %v3022
    %v3165 = vpop.f32.mrb[0].mxu0
    %v3166 = vadd.f32 %v3043, %v3165
    %v3167 = vpop.f32.mrb[0].mxu0
    %3168 = vdwg.mxu0
    %v3169 = vmax.f32 %v3111, 0.0
    %v3170 = vmax.f32 %v3116, 0.0
    %v3171 = vmax.f32 %v3121, 0.0
    %v3172 = vmax.f32 %v3126, 0.0
    %v3173 = vmax.f32 %v3131, 0.0
    %v3174 = vmax.f32 %v3136, 0.0
    %v3175 = vmax.f32 %v3141, 0.0
    %v3176 = vmax.f32 %v3146, 0.0
    %v3177 = vmax.f32 %v3151, 0.0
    %v3178 = vmax.f32 %v3156, 0.0
    %v3179 = vmax.f32 %v3161, 0.0
    %v3180 = vmax.f32 %v3166, 0.0
    %v3193 = vcombine.high %v3169, %v3169
    %v3195 = vunpack.c.l.s4 1983009808
    %v3196 = vunpack.c.0.s8 %v3195
    %v3197 = vlaneseq
    %v3198 = vshrl.u32 %v3197, 7
    %v3199 = vsub.s32 %v3196, %v3198
    %v3200 = vrot.slane %v3169, %v3199
    %v3202 = vunpack.c.l.s4 1983009808
    %v3203 = vunpack.c.0.s8 %v3202
    %v3204 = vlaneseq
    %v3205 = vshrl.u32 %v3204, 7
    %v3206 = vsub.s32 %v3203, %v3205
    %v3207 = vrot.slane %v3193, %v3206
    %v3208 = vcombine.high %v3200, %v3200
    %v3209 = vcombine.high %v3207, %v3207
    %v3210 = vcombine.high %v3170, %v3170
    %v3212 = vunpack.c.l.s4 1983009808
    %v3213 = vunpack.c.0.s8 %v3212
    %v3214 = vlaneseq
    %v3215 = vshrl.u32 %v3214, 7
    %v3216 = vsub.s32 %v3213, %v3215
    %v3217 = vrot.slane %v3170, %v3216
    %v3219 = vunpack.c.l.s4 1983009808
    %v3220 = vunpack.c.0.s8 %v3219
    %v3221 = vlaneseq
    %v3222 = vshrl.u32 %v3221, 7
    %v3223 = vsub.s32 %v3220, %v3222
    %v3224 = vrot.slane %v3210, %v3223
    %v3225 = vcombine.high %v3217, %v3217
    %v3226 = vcombine.high %v3224, %v3224
    %v3227 = vcombine.high %v3171, %v3171
    %v3229 = vunpack.c.l.s4 1983009808
    %v3230 = vunpack.c.0.s8 %v3229
    %v3231 = vlaneseq
    %v3232 = vshrl.u32 %v3231, 7
    %v3233 = vsub.s32 %v3230, %v3232
    %v3234 = vrot.slane %v3171, %v3233
    %v3236 = vunpack.c.l.s4 1983009808
    %v3237 = vunpack.c.0.s8 %v3236
    %v3238 = vlaneseq
    %v3239 = vshrl.u32 %v3238, 7
    %v3240 = vsub.s32 %v3237, %v3239
    %v3241 = vrot.slane %v3227, %v3240
    %v3242 = vcombine.high %v3234, %v3234
    %v3243 = vcombine.high %v3241, %v3241
    %v3244 = vcombine.high %v3172, %v3172
    %v3246 = vunpack.c.l.s4 1983009808
    %v3247 = vunpack.c.0.s8 %v3246
    %v3248 = vlaneseq
    %v3249 = vshrl.u32 %v3248, 7
    %v3250 = vsub.s32 %v3247, %v3249
    %v3251 = vrot.slane %v3172, %v3250
    %v3253 = vunpack.c.l.s4 1983009808
    %v3254 = vunpack.c.0.s8 %v3253
    %v3255 = vlaneseq
    %v3256 = vshrl.u32 %v3255, 7
    %v3257 = vsub.s32 %v3254, %v3256
    %v3258 = vrot.slane %v3244, %v3257
    %v3259 = vcombine.high %v3251, %v3251
    %v3260 = vcombine.high %v3258, %v3258
    %v3261 = vcombine.high %v3173, %v3173
    %v3263 = vunpack.c.l.s4 1983009808
    %v3264 = vunpack.c.0.s8 %v3263
    %v3265 = vlaneseq
    %v3266 = vshrl.u32 %v3265, 7
    %v3267 = vsub.s32 %v3264, %v3266
    %v3268 = vrot.slane %v3173, %v3267
    %v3270 = vunpack.c.l.s4 1983009808
    %v3271 = vunpack.c.0.s8 %v3270
    %v3272 = vlaneseq
    %v3273 = vshrl.u32 %v3272, 7
    %v3274 = vsub.s32 %v3271, %v3273
    %v3275 = vrot.slane %v3261, %v3274
    %v3276 = vcombine.high %v3268, %v3268
    %v3277 = vcombine.high %v3275, %v3275
    %v3278 = vcombine.high %v3174, %v3174
    %v3280 = vunpack.c.l.s4 1983009808
    %v3281 = vunpack.c.0.s8 %v3280
    %v3282 = vlaneseq
    %v3283 = vshrl.u32 %v3282, 7
    %v3284 = vsub.s32 %v3281, %v3283
    %v3285 = vrot.slane %v3174, %v3284
    %v3287 = vunpack.c.l.s4 1983009808
    %v3288 = vunpack.c.0.s8 %v3287
    %v3289 = vlaneseq
    %v3290 = vshrl.u32 %v3289, 7
    %v3291 = vsub.s32 %v3288, %v3290
    %v3292 = vrot.slane %v3278, %v3291
    %v3293 = vcombine.high %v3285, %v3285
    %v3294 = vcombine.high %v3292, %v3292
    %v3295 = vcombine.high %v3175, %v3175
    %v3297 = vunpack.c.l.s4 1983009808
    %v3298 = vunpack.c.0.s8 %v3297
    %v3299 = vlaneseq
    %v3300 = vshrl.u32 %v3299, 7
    %v3301 = vsub.s32 %v3298, %v3300
    %v3302 = vrot.slane %v3175, %v3301
    %v3304 = vunpack.c.l.s4 1983009808
    %v3305 = vunpack.c.0.s8 %v3304
    %v3306 = vlaneseq
    %v3307 = vshrl.u32 %v3306, 7
    %v3308 = vsub.s32 %v3305, %v3307
    %v3309 = vrot.slane %v3295, %v3308
    %v3310 = vcombine.high %v3302, %v3302
    %v3311 = vcombine.high %v3309, %v3309
    %v3312 = vcombine.high %v3176, %v3176
    %v3314 = vunpack.c.l.s4 1983009808
    %v3315 = vunpack.c.0.s8 %v3314
    %v3316 = vlaneseq
    %v3317 = vshrl.u32 %v3316, 7
    %v3318 = vsub.s32 %v3315, %v3317
    %v3319 = vrot.slane %v3176, %v3318
    %v3321 = vunpack.c.l.s4 1983009808
    %v3322 = vunpack.c.0.s8 %v3321
    %v3323 = vlaneseq
    %v3324 = vshrl.u32 %v3323, 7
    %v3325 = vsub.s32 %v3322, %v3324
    %v3326 = vrot.slane %v3312, %v3325
    %v3327 = vcombine.high %v3319, %v3319
    %v3328 = vcombine.high %v3326, %v3326
    %v3329 = vcombine.high %v3177, %v3177
    %v3331 = vunpack.c.l.s4 1983009808
    %v3332 = vunpack.c.0.s8 %v3331
    %v3333 = vlaneseq
    %v3334 = vshrl.u32 %v3333, 7
    %v3335 = vsub.s32 %v3332, %v3334
    %v3336 = vrot.slane %v3177, %v3335
    %v3338 = vunpack.c.l.s4 1983009808
    %v3339 = vunpack.c.0.s8 %v3338
    %v3340 = vlaneseq
    %v3341 = vshrl.u32 %v3340, 7
    %v3342 = vsub.s32 %v3339, %v3341
    %v3343 = vrot.slane %v3329, %v3342
    %v3344 = vcombine.high %v3336, %v3336
    %v3345 = vcombine.high %v3343, %v3343
    %v3346 = vcombine.high %v3178, %v3178
    %v3348 = vunpack.c.l.s4 1983009808
    %v3349 = vunpack.c.0.s8 %v3348
    %v3350 = vlaneseq
    %v3351 = vshrl.u32 %v3350, 7
    %v3352 = vsub.s32 %v3349, %v3351
    %v3353 = vrot.slane %v3178, %v3352
    %v3355 = vunpack.c.l.s4 1983009808
    %v3356 = vunpack.c.0.s8 %v3355
    %v3357 = vlaneseq
    %v3358 = vshrl.u32 %v3357, 7
    %v3359 = vsub.s32 %v3356, %v3358
    %v3360 = vrot.slane %v3346, %v3359
    %v3361 = vcombine.high %v3353, %v3353
    %v3362 = vcombine.high %v3360, %v3360
    %v3363 = vcombine.high %v3179, %v3179
    %v3365 = vunpack.c.l.s4 1983009808
    %v3366 = vunpack.c.0.s8 %v3365
    %v3367 = vlaneseq
    %v3368 = vshrl.u32 %v3367, 7
    %v3369 = vsub.s32 %v3366, %v3368
    %v3370 = vrot.slane %v3179, %v3369
    %v3372 = vunpack.c.l.s4 1983009808
    %v3373 = vunpack.c.0.s8 %v3372
    %v3374 = vlaneseq
    %v3375 = vshrl.u32 %v3374, 7
    %v3376 = vsub.s32 %v3373, %v3375
    %v3377 = vrot.slane %v3363, %v3376
    %v3378 = vcombine.high %v3370, %v3370
    %v3379 = vcombine.high %v3377, %v3377
    %v3380 = vcombine.high %v3180, %v3180
    %v3382 = vunpack.c.l.s4 1983009808
    %v3383 = vunpack.c.0.s8 %v3382
    %v3384 = vlaneseq
    %v3385 = vshrl.u32 %v3384, 7
    %v3386 = vsub.s32 %v3383, %v3385
    %v3387 = vrot.slane %v3180, %v3386
    %v3389 = vunpack.c.l.s4 1983009808
    %v3390 = vunpack.c.0.s8 %v3389
    %v3391 = vlaneseq
    %v3392 = vshrl.u32 %v3391, 7
    %v3393 = vsub.s32 %v3390, %v3392
    %v3394 = vrot.slane %v3380, %v3393
    %v3395 = vcombine.high %v3387, %v3387
    %v3396 = vcombine.high %v3394, %v3394
    %v3397 = vcombine.low %v3200, %v3208
    %v3399 = vunpack.c.l.s4 1983009808
    %v3400 = vunpack.c.0.s8 %v3399
    %v3401 = vlaneseq
    %v3402 = vshrl.u32 %v3401, 7
    %v3403 = vsub.s32 %v3400, %v3402
    %v3404 = vrot.slane %v3397, %v3403
    %v3406 = vunpack.c.l.s4 1983009808
    %v3407 = vunpack.c.0.s8 %v3406
    %v3408 = vlaneseq
    %v3409 = vshrl.u32 %v3408, 7
    %v3410 = vsub.s32 %v3407, %v3409
    %v3411 = vrot.slane %v3207, %v3410
    %v3412 = vcombine.low %v3404, %v3411
    %v3413 = vcombine.low %v3209, %v3217
    %v3415 = vunpack.c.l.s4 1983009808
    %v3416 = vunpack.c.0.s8 %v3415
    %v3417 = vlaneseq
    %v3418 = vshrl.u32 %v3417, 7
    %v3419 = vsub.s32 %v3416, %v3418
    %v3420 = vrot.slane %v3413, %v3419
    %v3422 = vunpack.c.l.s4 1983009808
    %v3423 = vunpack.c.0.s8 %v3422
    %v3424 = vlaneseq
    %v3425 = vshrl.u32 %v3424, 7
    %v3426 = vsub.s32 %v3423, %v3425
    %v3427 = vrot.slane %v3225, %v3426
    %v3428 = vcombine.low %v3420, %v3427
    %v3429 = vcombine.low %v3224, %v3226
    %v3431 = vunpack.c.l.s4 1983009808
    %v3432 = vunpack.c.0.s8 %v3431
    %v3433 = vlaneseq
    %v3434 = vshrl.u32 %v3433, 7
    %v3435 = vsub.s32 %v3432, %v3434
    %v3436 = vrot.slane %v3429, %v3435
    %v3438 = vunpack.c.l.s4 1983009808
    %v3439 = vunpack.c.0.s8 %v3438
    %v3440 = vlaneseq
    %v3441 = vshrl.u32 %v3440, 7
    %v3442 = vsub.s32 %v3439, %v3441
    %v3443 = vrot.slane %v3234, %v3442
    %v3444 = vcombine.low %v3436, %v3443
    %v3445 = vcombine.low %v3242, %v3241
    %v3447 = vunpack.c.l.s4 1983009808
    %v3448 = vunpack.c.0.s8 %v3447
    %v3449 = vlaneseq
    %v3450 = vshrl.u32 %v3449, 7
    %v3451 = vsub.s32 %v3448, %v3450
    %v3452 = vrot.slane %v3445, %v3451
    %v3454 = vunpack.c.l.s4 1983009808
    %v3455 = vunpack.c.0.s8 %v3454
    %v3456 = vlaneseq
    %v3457 = vshrl.u32 %v3456, 7
    %v3458 = vsub.s32 %v3455, %v3457
    %v3459 = vrot.slane %v3243, %v3458
    %v3460 = vcombine.low %v3452, %v3459
    %v3461 = vcombine.low %v3251, %v3259
    %v3463 = vunpack.c.l.s4 1983009808
    %v3464 = vunpack.c.0.s8 %v3463
    %v3465 = vlaneseq
    %v3466 = vshrl.u32 %v3465, 7
    %v3467 = vsub.s32 %v3464, %v3466
    %v3468 = vrot.slane %v3461, %v3467
    %v3470 = vunpack.c.l.s4 1983009808
    %v3471 = vunpack.c.0.s8 %v3470
    %v3472 = vlaneseq
    %v3473 = vshrl.u32 %v3472, 7
    %v3474 = vsub.s32 %v3471, %v3473
    %v3475 = vrot.slane %v3258, %v3474
    %v3476 = vcombine.low %v3468, %v3475
    %v3477 = vcombine.low %v3260, %v3268
    %v3479 = vunpack.c.l.s4 1983009808
    %v3480 = vunpack.c.0.s8 %v3479
    %v3481 = vlaneseq
    %v3482 = vshrl.u32 %v3481, 7
    %v3483 = vsub.s32 %v3480, %v3482
    %v3484 = vrot.slane %v3477, %v3483
    %v3486 = vunpack.c.l.s4 1983009808
    %v3487 = vunpack.c.0.s8 %v3486
    %v3488 = vlaneseq
    %v3489 = vshrl.u32 %v3488, 7
    %v3490 = vsub.s32 %v3487, %v3489
    %v3491 = vrot.slane %v3276, %v3490
    %v3492 = vcombine.low %v3484, %v3491
    %v3493 = vcombine.low %v3275, %v3277
    %v3495 = vunpack.c.l.s4 1983009808
    %v3496 = vunpack.c.0.s8 %v3495
    %v3497 = vlaneseq
    %v3498 = vshrl.u32 %v3497, 7
    %v3499 = vsub.s32 %v3496, %v3498
    %v3500 = vrot.slane %v3493, %v3499
    %v3502 = vunpack.c.l.s4 1983009808
    %v3503 = vunpack.c.0.s8 %v3502
    %v3504 = vlaneseq
    %v3505 = vshrl.u32 %v3504, 7
    %v3506 = vsub.s32 %v3503, %v3505
    %v3507 = vrot.slane %v3285, %v3506
    %v3508 = vcombine.low %v3500, %v3507
    %v3509 = vcombine.low %v3293, %v3292
    %v3511 = vunpack.c.l.s4 1983009808
    %v3512 = vunpack.c.0.s8 %v3511
    %v3513 = vlaneseq
    %v3514 = vshrl.u32 %v3513, 7
    %v3515 = vsub.s32 %v3512, %v3514
    %v3516 = vrot.slane %v3509, %v3515
    %v3518 = vunpack.c.l.s4 1983009808
    %v3519 = vunpack.c.0.s8 %v3518
    %v3520 = vlaneseq
    %v3521 = vshrl.u32 %v3520, 7
    %v3522 = vsub.s32 %v3519, %v3521
    %v3523 = vrot.slane %v3294, %v3522
    %v3524 = vcombine.low %v3516, %v3523
    %v3525 = vcombine.low %v3302, %v3310
    %v3527 = vunpack.c.l.s4 1983009808
    %v3528 = vunpack.c.0.s8 %v3527
    %v3529 = vlaneseq
    %v3530 = vshrl.u32 %v3529, 7
    %v3531 = vsub.s32 %v3528, %v3530
    %v3532 = vrot.slane %v3525, %v3531
    %v3534 = vunpack.c.l.s4 1983009808
    %v3535 = vunpack.c.0.s8 %v3534
    %v3536 = vlaneseq
    %v3537 = vshrl.u32 %v3536, 7
    %v3538 = vsub.s32 %v3535, %v3537
    %v3539 = vrot.slane %v3309, %v3538
    %v3540 = vcombine.low %v3532, %v3539
    %v3541 = vcombine.low %v3311, %v3319
    %v3543 = vunpack.c.l.s4 1983009808
    %v3544 = vunpack.c.0.s8 %v3543
    %v3545 = vlaneseq
    %v3546 = vshrl.u32 %v3545, 7
    %v3547 = vsub.s32 %v3544, %v3546
    %v3548 = vrot.slane %v3541, %v3547
    %v3550 = vunpack.c.l.s4 1983009808
    %v3551 = vunpack.c.0.s8 %v3550
    %v3552 = vlaneseq
    %v3553 = vshrl.u32 %v3552, 7
    %v3554 = vsub.s32 %v3551, %v3553
    %v3555 = vrot.slane %v3327, %v3554
    %v3556 = vcombine.low %v3548, %v3555
    %v3557 = vcombine.low %v3326, %v3328
    %v3559 = vunpack.c.l.s4 1983009808
    %v3560 = vunpack.c.0.s8 %v3559
    %v3561 = vlaneseq
    %v3562 = vshrl.u32 %v3561, 7
    %v3563 = vsub.s32 %v3560, %v3562
    %v3564 = vrot.slane %v3557, %v3563
    %v3566 = vunpack.c.l.s4 1983009808
    %v3567 = vunpack.c.0.s8 %v3566
    %v3568 = vlaneseq
    %v3569 = vshrl.u32 %v3568, 7
    %v3570 = vsub.s32 %v3567, %v3569
    %v3571 = vrot.slane %v3336, %v3570
    %v3572 = vcombine.low %v3564, %v3571
    %v3573 = vcombine.low %v3344, %v3343
    %v3575 = vunpack.c.l.s4 1983009808
    %v3576 = vunpack.c.0.s8 %v3575
    %v3577 = vlaneseq
    %v3578 = vshrl.u32 %v3577, 7
    %v3579 = vsub.s32 %v3576, %v3578
    %v3580 = vrot.slane %v3573, %v3579
    %v3582 = vunpack.c.l.s4 1983009808
    %v3583 = vunpack.c.0.s8 %v3582
    %v3584 = vlaneseq
    %v3585 = vshrl.u32 %v3584, 7
    %v3586 = vsub.s32 %v3583, %v3585
    %v3587 = vrot.slane %v3345, %v3586
    %v3588 = vcombine.low %v3580, %v3587
    %v3589 = vcombine.low %v3353, %v3361
    %v3591 = vunpack.c.l.s4 1983009808
    %v3592 = vunpack.c.0.s8 %v3591
    %v3593 = vlaneseq
    %v3594 = vshrl.u32 %v3593, 7
    %v3595 = vsub.s32 %v3592, %v3594
    %v3596 = vrot.slane %v3589, %v3595
    %v3598 = vunpack.c.l.s4 1983009808
    %v3599 = vunpack.c.0.s8 %v3598
    %v3600 = vlaneseq
    %v3601 = vshrl.u32 %v3600, 7
    %v3602 = vsub.s32 %v3599, %v3601
    %v3603 = vrot.slane %v3360, %v3602
    %v3604 = vcombine.low %v3596, %v3603
    %v3605 = vcombine.low %v3362, %v3370
    %v3607 = vunpack.c.l.s4 1983009808
    %v3608 = vunpack.c.0.s8 %v3607
    %v3609 = vlaneseq
    %v3610 = vshrl.u32 %v3609, 7
    %v3611 = vsub.s32 %v3608, %v3610
    %v3612 = vrot.slane %v3605, %v3611
    %v3614 = vunpack.c.l.s4 1983009808
    %v3615 = vunpack.c.0.s8 %v3614
    %v3616 = vlaneseq
    %v3617 = vshrl.u32 %v3616, 7
    %v3618 = vsub.s32 %v3615, %v3617
    %v3619 = vrot.slane %v3378, %v3618
    %v3620 = vcombine.low %v3612, %v3619
    %v3621 = vcombine.low %v3377, %v3379
    %v3623 = vunpack.c.l.s4 1983009808
    %v3624 = vunpack.c.0.s8 %v3623
    %v3625 = vlaneseq
    %v3626 = vshrl.u32 %v3625, 7
    %v3627 = vsub.s32 %v3624, %v3626
    %v3628 = vrot.slane %v3621, %v3627
    %v3630 = vunpack.c.l.s4 1983009808
    %v3631 = vunpack.c.0.s8 %v3630
    %v3632 = vlaneseq
    %v3633 = vshrl.u32 %v3632, 7
    %v3634 = vsub.s32 %v3631, %v3633
    %v3635 = vrot.slane %v3387, %v3634
    %v3636 = vcombine.low %v3628, %v3635
    %v3637 = vcombine.low %v3395, %v3394
    %v3639 = vunpack.c.l.s4 1983009808
    %v3640 = vunpack.c.0.s8 %v3639
    %v3641 = vlaneseq
    %v3642 = vshrl.u32 %v3641, 7
    %v3643 = vsub.s32 %v3640, %v3642
    %v3644 = vrot.slane %v3637, %v3643
    %v3646 = vunpack.c.l.s4 1983009808
    %v3647 = vunpack.c.0.s8 %v3646
    %v3648 = vlaneseq
    %v3649 = vshrl.u32 %v3648, 7
    %v3650 = vsub.s32 %v3647, %v3649
    %v3651 = vrot.slane %v3396, %v3650
    %v3652 = vcombine.low %v3644, %v3651
    %vm3669 = vcmask 1045504
    %v3670 = vsel %vm3669, %v3412, 0.0
    %v3671 = vrot.slane %v3670, 4
    %v3672 = vadd.f32 %v3670, %v3671
    %v3673 = vrot.slane %v3672, 2
    %v3674 = vadd.f32 %v3672, %v3673
    %v3675 = vrot.slane %v3674, 1
    %v3676 = vadd.f32 %v3674, %v3675
    %v3677 = vsel %vm3669, %v3428, 0.0
    %v3678 = vrot.slane %v3677, 4
    %v3679 = vadd.f32 %v3677, %v3678
    %v3680 = vrot.slane %v3679, 2
    %v3681 = vadd.f32 %v3679, %v3680
    %v3682 = vrot.slane %v3681, 1
    %v3683 = vadd.f32 %v3681, %v3682
    %v3684 = vsel %vm3669, %v3444, 0.0
    %v3685 = vrot.slane %v3684, 4
    %v3686 = vadd.f32 %v3684, %v3685
    %v3687 = vrot.slane %v3686, 2
    %v3688 = vadd.f32 %v3686, %v3687
    %v3689 = vrot.slane %v3688, 1
    %v3690 = vadd.f32 %v3688, %v3689
    %v3691 = vsel %vm3669, %v3460, 0.0
    %v3692 = vrot.slane %v3691, 4
    %v3693 = vadd.f32 %v3691, %v3692
    %v3694 = vrot.slane %v3693, 2
    %v3695 = vadd.f32 %v3693, %v3694
    %v3696 = vrot.slane %v3695, 1
    %v3697 = vadd.f32 %v3695, %v3696
    %v3698 = vsel %vm3669, %v3476, 0.0
    %v3699 = vrot.slane %v3698, 4
    %v3700 = vadd.f32 %v3698, %v3699
    %v3701 = vrot.slane %v3700, 2
    %v3702 = vadd.f32 %v3700, %v3701
    %v3703 = vrot.slane %v3702, 1
    %v3704 = vadd.f32 %v3702, %v3703
    %v3705 = vsel %vm3669, %v3492, 0.0
    %v3706 = vrot.slane %v3705, 4
    %v3707 = vadd.f32 %v3705, %v3706
    %v3708 = vrot.slane %v3707, 2
    %v3709 = vadd.f32 %v3707, %v3708
    %v3710 = vrot.slane %v3709, 1
    %v3711 = vadd.f32 %v3709, %v3710
    %v3712 = vsel %vm3669, %v3508, 0.0
    %v3713 = vrot.slane %v3712, 4
    %v3714 = vadd.f32 %v3712, %v3713
    %v3715 = vrot.slane %v3714, 2
    %v3716 = vadd.f32 %v3714, %v3715
    %v3717 = vrot.slane %v3716, 1
    %v3718 = vadd.f32 %v3716, %v3717
    %v3719 = vsel %vm3669, %v3524, 0.0
    %v3720 = vrot.slane %v3719, 4
    %v3721 = vadd.f32 %v3719, %v3720
    %v3722 = vrot.slane %v3721, 2
    %v3723 = vadd.f32 %v3721, %v3722
    %v3724 = vrot.slane %v3723, 1
    %v3725 = vadd.f32 %v3723, %v3724
    %v3726 = vsel %vm3669, %v3540, 0.0
    %v3727 = vrot.slane %v3726, 4
    %v3728 = vadd.f32 %v3726, %v3727
    %v3729 = vrot.slane %v3728, 2
    %v3730 = vadd.f32 %v3728, %v3729
    %v3731 = vrot.slane %v3730, 1
    %v3732 = vadd.f32 %v3730, %v3731
    %v3733 = vsel %vm3669, %v3556, 0.0
    %v3734 = vrot.slane %v3733, 4
    %v3735 = vadd.f32 %v3733, %v3734
    %v3736 = vrot.slane %v3735, 2
    %v3737 = vadd.f32 %v3735, %v3736
    %v3738 = vrot.slane %v3737, 1
    %v3739 = vadd.f32 %v3737, %v3738
    %v3740 = vsel %vm3669, %v3572, 0.0
    %v3741 = vrot.slane %v3740, 4
    %v3742 = vadd.f32 %v3740, %v3741
    %v3743 = vrot.slane %v3742, 2
    %v3744 = vadd.f32 %v3742, %v3743
    %v3745 = vrot.slane %v3744, 1
    %v3746 = vadd.f32 %v3744, %v3745
    %v3747 = vsel %vm3669, %v3588, 0.0
    %v3748 = vrot.slane %v3747, 4
    %v3749 = vadd.f32 %v3747, %v3748
    %v3750 = vrot.slane %v3749, 2
    %v3751 = vadd.f32 %v3749, %v3750
    %v3752 = vrot.slane %v3751, 1
    %v3753 = vadd.f32 %v3751, %v3752
    %v3754 = vsel %vm3669, %v3604, 0.0
    %v3755 = vrot.slane %v3754, 4
    %v3756 = vadd.f32 %v3754, %v3755
    %v3757 = vrot.slane %v3756, 2
    %v3758 = vadd.f32 %v3756, %v3757
    %v3759 = vrot.slane %v3758, 1
    %v3760 = vadd.f32 %v3758, %v3759
    %v3761 = vsel %vm3669, %v3620, 0.0
    %v3762 = vrot.slane %v3761, 4
    %v3763 = vadd.f32 %v3761, %v3762
    %v3764 = vrot.slane %v3763, 2
    %v3765 = vadd.f32 %v3763, %v3764
    %v3766 = vrot.slane %v3765, 1
    %v3767 = vadd.f32 %v3765, %v3766
    %v3768 = vsel %vm3669, %v3636, 0.0
    %v3769 = vrot.slane %v3768, 4
    %v3770 = vadd.f32 %v3768, %v3769
    %v3771 = vrot.slane %v3770, 2
    %v3772 = vadd.f32 %v3770, %v3771
    %v3773 = vrot.slane %v3772, 1
    %v3774 = vadd.f32 %v3772, %v3773
    %v3775 = vsel %vm3669, %v3652, 0.0
    %v3776 = vrot.slane %v3775, 4
    %v3777 = vadd.f32 %v3775, %v3776
    %v3778 = vrot.slane %v3777, 2
    %v3779 = vadd.f32 %v3777, %v3778
    %v3780 = vrot.slane %v3779, 1
    %v3781 = vadd.f32 %v3779, %v3780
    %v3782 = vadd.f32 %v3676, 0.0
    %v3783 = vadd.f32 %v3683, 0.0
    %v3784 = vadd.f32 %v3690, 0.0
    %v3785 = vadd.f32 %v3697, 0.0
    %v3786 = vadd.f32 %v3704, 0.0
    %v3787 = vadd.f32 %v3711, 0.0
    %v3788 = vadd.f32 %v3718, 0.0
    %v3789 = vadd.f32 %v3725, 0.0
    %v3790 = vadd.f32 %v3732, 0.0
    %v3791 = vadd.f32 %v3739, 0.0
    %v3792 = vadd.f32 %v3746, 0.0
    %v3793 = vadd.f32 %v3753, 0.0
    %v3794 = vadd.f32 %v3760, 0.0
    %v3795 = vadd.f32 %v3767, 0.0
    %v3796 = vadd.f32 %v3774, 0.0
    %v3797 = vadd.f32 %v3781, 0.0
    %v3814 = vrot.slane %v1380, 7
    %vm3815 = vcmask 1041409
    %v3816 = vsel %vm3815, %v3814, %v1379
    %v3817 = vrot.slane %v1381, 6
    %vm3818 = vcmask 1042434
    %v3819 = vsel %vm3818, %v3817, %v3816
    %v3820 = vrot.slane %v1382, 5
    %vm3821 = vcmask 1043459
    %v3822 = vsel %vm3821, %v3820, %v3819
    %v3823 = vrot.slane %v1383, 4
    %vm3824 = vcmask 1044484
    %v3825 = vsel %vm3824, %v3823, %v3822
    %v3826 = vrot.slane %v1384, 3
    %vm3827 = vcmask 1045509
    %v3828 = vsel %vm3827, %v3826, %v3825
    %v3829 = vrot.slane %v1385, 2
    %vm3830 = vcmask 1046534
    %v3831 = vsel %vm3830, %v3829, %v3828
    %v3832 = vrot.slane %v1386, 1
    %vm3833 = vcmask 1047559
    %v3834 = vsel %vm3833, %v3832, %v3831
    %v3835 = vrot.slane %v1388, 7
    %v3836 = vsel %vm3815, %v3835, %v1387
    %v3837 = vrot.slane %v1389, 6
    %v3838 = vsel %vm3818, %v3837, %v3836
    %v3839 = vrot.slane %v1390, 5
    %v3840 = vsel %vm3821, %v3839, %v3838
    %v3841 = vrot.slane %v1391, 4
    %v3842 = vsel %vm3824, %v3841, %v3840
    %v3843 = vrot.slane %v1392, 3
    %v3844 = vsel %vm3827, %v3843, %v3842
    %v3845 = vrot.slane %v1393, 2
    %v3846 = vsel %vm3830, %v3845, %v3844
    %v3847 = vrot.slane %v1394, 1
    %v3848 = vsel %vm3833, %v3847, %v3846
    %v3867 = vsel %vm3815, %v2068, %v2067
    %v3868 = vsel %vm3818, %v2069, %v3867
    %v3869 = vsel %vm3821, %v2070, %v3868
    %v3870 = vsel %vm3824, %v2071, %v3869
    %v3871 = vsel %vm3827, %v2072, %v3870
    %v3872 = vsel %vm3830, %v2073, %v3871
    %v3873 = vsel %vm3833, %v2074, %v3872
    %v3874 = vsel %vm3815, %v2076, %v2075
    %v3875 = vsel %vm3818, %v2077, %v3874
    %v3876 = vsel %vm3821, %v2078, %v3875
    %v3877 = vsel %vm3824, %v2079, %v3876
    %v3878 = vsel %vm3827, %v2080, %v3877
    %v3879 = vsel %vm3830, %v2081, %v3878
    %v3880 = vsel %vm3833, %v2082, %v3879
    %v3899 = vsel %vm3815, %v3783, %v3782
    %v3900 = vsel %vm3818, %v3784, %v3899
    %v3901 = vsel %vm3821, %v3785, %v3900
    %v3902 = vsel %vm3824, %v3786, %v3901
    %v3903 = vsel %vm3827, %v3787, %v3902
    %v3904 = vsel %vm3830, %v3788, %v3903
    %v3905 = vsel %vm3833, %v3789, %v3904
    %v3906 = vsel %vm3815, %v3791, %v3790
    %v3907 = vsel %vm3818, %v3792, %v3906
    %v3908 = vsel %vm3821, %v3793, %v3907
    %v3909 = vsel %vm3824, %v3794, %v3908
    %v3910 = vsel %vm3827, %v3795, %v3909
    %v3911 = vsel %vm3830, %v3796, %v3910
    %v3912 = vsel %vm3833, %v3797, %v3911
    %v3915 = vld [vmem:[#allocation2 + $0x310] sm:$0xff]
    %v3916 = vld [vmem:[#allocation2 + $0x318] sm:$0xff]
    %v3917 = vld [vmem:[#allocation2 + $0x320] sm:$0xff]
    %v3918 = vld [vmem:[#allocation2 + $0x328] sm:$0xff]
    %v3919 = vld [vmem:[#allocation2 + $0x330] sm:$0xff]
    %v3920 = vld [vmem:[#allocation2 + $0x338] sm:$0xff]
    %v3921 = vld [vmem:[#allocation2 + $0x340] sm:$0xff]
    %v3922 = vld [vmem:[#allocation2 + $0x348] sm:$0xff]
    %v3923 = vld [vmem:[#allocation2 + $0x350] sm:$0xff]
    %v3924 = vld [vmem:[#allocation2 + $0x358] sm:$0xff]
    %v3925 = vld [vmem:[#allocation2 + $0x360] sm:$0xff]
    %v3926 = vld [vmem:[#allocation2 + $0x368] sm:$0xff]
    %v3927 = vld [vmem:[#allocation2 + $0x370] sm:$0xff]
    %v3928 = vld [vmem:[#allocation2 + $0x378] sm:$0xff]
    %v3929 = vld [vmem:[#allocation2 + $0x380] sm:$0xff]
    %v3930 = vld [vmem:[#allocation2 + $0x388] sm:$0xff]
    %v3931 = vld [vmem:[#allocation2 + $0x390] sm:$0xff]
    %v3932 = vld [vmem:[#allocation2 + $0x398] sm:$0xff]
    %v3933 = vld [vmem:[#allocation2 + $0x3a0] sm:$0xff]
    %v3934 = vld [vmem:[#allocation2 + $0x3a8] sm:$0xff]
    %v3935 = vld [vmem:[#allocation2 + $0x3b0] sm:$0xff]
    %v3936 = vld [vmem:[#allocation2 + $0x3b8] sm:$0xff]
    %v3937 = vld [vmem:[#allocation2 + $0x3c0] sm:$0xff]
    %v3938 = vld [vmem:[#allocation2 + $0x3c8] sm:$0xff]
    %v3939 = vld [vmem:[#allocation2 + $0x3d0] sm:$0xff]
    %v3940 = vld [vmem:[#allocation2 + $0x3d8] sm:$0xff]
    %v3941 = vld [vmem:[#allocation2 + $0x3e0] sm:$0xff]
    %v3942 = vld [vmem:[#allocation2 + $0x3e8] sm:$0xff]
    %v3943 = vld [vmem:[#allocation2 + $0x3f0] sm:$0xff]
    %v3944 = vld [vmem:[#allocation2 + $0x3f8] sm:$0xff]
    %v3945 = vld [vmem:[#allocation2 + $0x400] sm:$0xff]
    %v3946 = vld [vmem:[#allocation2 + $0x408] sm:$0xff]
    %v3947 = vld [vmem:[#allocation2 + $0x410] sm:$0xff]
    %v3948 = vld [vmem:[#allocation2 + $0x418] sm:$0xff]
    %v3949 = vld [vmem:[#allocation2 + $0x420] sm:$0xff]
    %v3950 = vld [vmem:[#allocation2 + $0x428] sm:$0xff]
    %v3951 = vld [vmem:[#allocation2 + $0x430] sm:$0xff]
    %v3952 = vld [vmem:[#allocation2 + $0x438] sm:$0xff]
    %v3953 = vld [vmem:[#allocation2 + $0x440] sm:$0xff]
    %v3954 = vld [vmem:[#allocation2 + $0x448] sm:$0xff]
    %v3955 = vld [vmem:[#allocation2 + $0x450] sm:$0xff]
    %v3956 = vld [vmem:[#allocation2 + $0x458] sm:$0xff]
    %v3957 = vld [vmem:[#allocation2 + $0x460] sm:$0xff]
    %v3958 = vld [vmem:[#allocation2 + $0x468] sm:$0xff]
    %v3959 = vld [vmem:[#allocation2 + $0x470] sm:$0xff]
    %v3960 = vld [vmem:[#allocation2 + $0x478] sm:$0xff]
    %v3961 = vld [vmem:[#allocation2 + $0x480] sm:$0xff]
    %v3962 = vld [vmem:[#allocation2 + $0x488] sm:$0xff]
    %3963 = vmatprep.subr.mxu0 0.0
    %3964 = vmatpush1.msra.mxu0 %v3915
    %3965 = vmatprep.subr.mxu0 0.0
    %3966 = vmatpush1.msra.mxu0 %v3916
    %3967 = vmatprep.subr.mxu0 0.0
    %3968 = vmatpush1.msra.mxu0 %v3917
    %3969 = vmatprep.subr.mxu0 0.0
    %3970 = vmatpush1.msra.mxu0 %v3918
    %3971 = vmatprep.subr.mxu0 0.0
    %3972 = vmatpush1.msra.mxu0 %v3919
    %3973 = vmatprep.subr.mxu0 0.0
    %3974 = vmatpush1.msra.mxu0 %v3920
    %3975 = vmatprep.subr.mxu0 0.0
    %3976 = vmatpush1.msra.mxu0 %v3921
    %3977 = vmatprep.subr.mxu0 0.0
    %3978 = vmatpush1.msra.mxu0 %v3922
    %3979 = vmatprep.subr.mxu0 0.0
    %3980 = vmatpush1.msra.mxu0 %v3923
    %3981 = vmatprep.subr.mxu0 0.0
    %3982 = vmatpush1.msra.mxu0 %v3924
    %3983 = vmatprep.subr.mxu0 0.0
    %3984 = vmatpush1.msra.mxu0 %v3925
    %3985 = vmatprep.subr.mxu0 0.0
    %3986 = vmatpush1.msra.mxu0 %v3926
    %3987 = vmatprep.subr.mxu0 0.0
    %3988 = vmatpush1.msra.mxu0 %v3927
    %3989 = vmatprep.subr.mxu0 0.0
    %3990 = vmatpush1.msra.mxu0 %v3928
    %3991 = vmatprep.subr.mxu0 0.0
    %3992 = vmatpush1.msra.mxu0 %v3929
    %3993 = vmatprep.subr.mxu0 0.0
    %3994 = vmatpush1.msra.mxu0 %v3930
    %3995 = vmatprep.subr.mxu0 0.0
    %3996 = vmatpush1.msra.mxu0 %v3931
    %3997 = vmatprep.subr.mxu0 0.0
    %3998 = vmatpush1.msra.mxu0 %v3932
    %3999 = vmatprep.subr.mxu0 0.0
    %4000 = vmatpush1.msra.mxu0 %v3933
    %4001 = vmatprep.subr.mxu0 0.0
    %4002 = vmatpush1.msra.mxu0 %v3934
    %4003 = vmatprep.subr.mxu0 0.0
    %4004 = vmatpush1.msra.mxu0 %v3935
    %4005 = vmatprep.subr.mxu0 0.0
    %4006 = vmatpush1.msra.mxu0 %v3936
    %4007 = vmatprep.subr.mxu0 0.0
    %4008 = vmatpush1.msra.mxu0 %v3937
    %4009 = vmatprep.subr.mxu0 0.0
    %4010 = vmatpush1.msra.mxu0 %v3938
    %4011 = vmatprep.subr.mxu0 0.0
    %4012 = vmatpush1.msra.mxu0 %v3939
    %4013 = vmatprep.subr.mxu0 0.0
    %4014 = vmatpush1.msra.mxu0 %v3940
    %4015 = vmatprep.subr.mxu0 0.0
    %4016 = vmatpush1.msra.mxu0 %v3941
    %4017 = vmatprep.subr.mxu0 0.0
    %4018 = vmatpush1.msra.mxu0 %v3942
    %4019 = vmatprep.subr.mxu0 0.0
    %4020 = vmatpush1.msra.mxu0 %v3943
    %4021 = vmatprep.subr.mxu0 0.0
    %4022 = vmatpush1.msra.mxu0 %v3944
    %4023 = vmatprep.subr.mxu0 0.0
    %4024 = vmatpush1.msra.mxu0 %v3945
    %4025 = vmatprep.subr.mxu0 0.0
    %4026 = vmatpush1.msra.mxu0 %v3946
    %4027 = vmatprep.mubr.f32.mxu0 %v3873
    %4028 = vmatmul.mubr.f32.gmra.mrb[0].mxu0 %v3834
    %v4029 = vpop.f32.mrb[0].mxu0
    %v4030 = vadd.f32 0.0, %v4029
    %v4031 = vpop.f32.mrb[0].mxu0
    %4032 = vmatprep.mubr.f32.mxu0 %v3880
    %4033 = vmatmul.mubr.f32.gmra.mrb[0].mxu0 %v3848
    %v4034 = vpop.f32.mrb[0].mxu0
    %v4035 = vadd.f32 0.0, %v4034
    %v4036 = vpop.f32.mrb[0].mxu0
    %4037 = vdwg.mxu0
    %4038 = vmatprep.subr.mxu0 0.0
    %4039 = vmatpush1.msra.mxu0 %v3947
    %4040 = vmatprep.subr.mxu0 0.0
    %4041 = vmatpush1.msra.mxu0 %v3948
    %4042 = vmatprep.subr.mxu0 0.0
    %4043 = vmatpush1.msra.mxu0 %v3949
    %4044 = vmatprep.subr.mxu0 0.0
    %4045 = vmatpush1.msra.mxu0 %v3950
    %4046 = vmatprep.subr.mxu0 0.0
    %4047 = vmatpush1.msra.mxu0 %v3951
    %4048 = vmatprep.subr.mxu0 0.0
    %4049 = vmatpush1.msra.mxu0 %v3952
    %4050 = vmatprep.subr.mxu0 0.0
    %4051 = vmatpush1.msra.mxu0 %v3953
    %4052 = vmatprep.subr.mxu0 0.0
    %4053 = vmatpush1.msra.mxu0 %v3954
    %4054 = vmatprep.subr.mxu0 0.0
    %4055 = vmatpush1.msra.mxu0 %v3955
    %4056 = vmatprep.subr.mxu0 0.0
    %4057 = vmatpush1.msra.mxu0 %v3956
    %4058 = vmatprep.subr.mxu0 0.0
    %4059 = vmatpush1.msra.mxu0 %v3957
    %4060 = vmatprep.subr.mxu0 0.0
    %4061 = vmatpush1.msra.mxu0 %v3958
    %4062 = vmatprep.subr.mxu0 0.0
    %4063 = vmatpush1.msra.mxu0 %v3959
    %4064 = vmatprep.subr.mxu0 0.0
    %4065 = vmatpush1.msra.mxu0 %v3960
    %4066 = vmatprep.subr.mxu0 0.0
    %4067 = vmatpush1.msra.mxu0 %v3961
    %4068 = vmatprep.subr.mxu0 0.0
    %4069 = vmatpush1.msra.mxu0 %v3962
    %4070 = vmatprep.subr.mxu0 0.0
    %4071 = vmatpush1.msra.mxu0 0.0
    %4072 = vmatprep.subr.mxu0 0.0
    %4073 = vmatpush1.msra.mxu0 0.0
    %4074 = vmatprep.subr.mxu0 0.0
    %4075 = vmatpush1.msra.mxu0 0.0
    %4076 = vmatprep.subr.mxu0 0.0
    %4077 = vmatpush1.msra.mxu0 0.0
    %4078 = vmatprep.subr.mxu0 0.0
    %4079 = vmatpush1.msra.mxu0 0.0
    %4080 = vmatprep.subr.mxu0 0.0
    %4081 = vmatpush1.msra.mxu0 0.0
    %4082 = vmatprep.subr.mxu0 0.0
    %4083 = vmatpush1.msra.mxu0 0.0
    %4084 = vmatprep.subr.mxu0 0.0
    %4085 = vmatpush1.msra.mxu0 0.0
    %4086 = vmatprep.subr.mxu0 0.0
    %4087 = vmatpush1.msra.mxu0 0.0
    %4088 = vmatprep.subr.mxu0 0.0
    %4089 = vmatpush1.msra.mxu0 0.0
    %4090 = vmatprep.subr.mxu0 0.0
    %4091 = vmatpush1.msra.mxu0 0.0
    %4092 = vmatprep.subr.mxu0 0.0
    %4093 = vmatpush1.msra.mxu0 0.0
    %4094 = vmatprep.subr.mxu0 0.0
    %4095 = vmatpush1.msra.mxu0 0.0
    %4096 = vmatprep.subr.mxu0 0.0
    %4097 = vmatpush1.msra.mxu0 0.0
    %4098 = vmatprep.subr.mxu0 0.0
    %4099 = vmatpush1.msra.mxu0 0.0
    %4100 = vmatprep.subr.mxu0 0.0
    %4101 = vmatpush1.msra.mxu0 0.0
    %4102 = vmatprep.mubr.f32.mxu0 0.0
    %4103 = vmatmul.mubr.f32.gmra.mrb[0].mxu0 %v3905
    %v4104 = vpop.f32.mrb[0].mxu0
    %v4105 = vadd.f32 %v4030, %v4104
    %v4106 = vpop.f32.mrb[0].mxu0
    %4107 = vmatprep.mubr.f32.mxu0 0.0
    %4108 = vmatmul.mubr.f32.gmra.mrb[0].mxu0 %v3912
    %v4109 = vpop.f32.mrb[0].mxu0
    %v4110 = vadd.f32 %v4035, %v4109
    %v4111 = vpop.f32.mrb[0].mxu0
    %4112 = vdwg.mxu0
    %v4113 = vadd.f32 %v306, %v4105
    %v4114 = vadd.f32 %v311, %v4110
    %v4115 = vld [vmem:[#allocation5 + $0x48] sm:$0x1]
    %v4116 = vlaneseq
    %v4117 = vshrl.u32 %v4116, 7
    %v4118 = vsub.s32 0, %v4117
    %v4119 = vrot.slane %v4115, %v4118
    %v4120 = vadd.f32 %v4113, %v4119
    %v4121 = vadd.f32 %v4114, %v4119
    %v4122 = vmax.f32 %v4120, 0.0
    %v4123 = vmax.f32 %v4121, 0.0
    %v4124 = vld [vmem:[#allocation2 + $0x490] sm:$0xff]
    %v4125 = vld [vmem:[#allocation2 + $0x498] sm:$0xff]
    %v4126 = vld [vmem:[#allocation2 + $0x4a0] sm:$0xff]
    %v4127 = vld [vmem:[#allocation2 + $0x4a8] sm:$0xff]
    %v4128 = vld [vmem:[#allocation2 + $0x4b0] sm:$0xff]
    %v4129 = vld [vmem:[#allocation2 + $0x4b8] sm:$0xff]
    %v4130 = vld [vmem:[#allocation2 + $0x4c0] sm:$0xff]
    %v4131 = vld [vmem:[#allocation2 + $0x4c8] sm:$0xff]
    %v4132 = vld [vmem:[#allocation2 + $0x4d0] sm:$0xff]
    %v4133 = vld [vmem:[#allocation2 + $0x4d8] sm:$0xff]
    %v4134 = vld [vmem:[#allocation2 + $0x4e0] sm:$0xff]
    %v4135 = vld [vmem:[#allocation2 + $0x4e8] sm:$0xff]
    %v4136 = vld [vmem:[#allocation2 + $0x4f0] sm:$0xff]
    %v4137 = vld [vmem:[#allocation2 + $0x4f8] sm:$0xff]
    %v4138 = vld [vmem:[#allocation2 + $0x500] sm:$0xff]
    %v4139 = vld [vmem:[#allocation2 + $0x508] sm:$0xff]
    %v4140 = vld [vmem:[#allocation5 + $0x50] sm:$0x1]
    %v4141 = vlaneseq
    %v4142 = vshrl.u32 %v4141, 7
    %v4143 = vsub.s32 0, %v4142
    %v4144 = vrot.slane %v4140, %v4143
    %4145 = vmatprep.subr.mxu0 0.0
    %4146 = vmatpush1.msra.mxu0 %v4124
    %4147 = vmatprep.subr.mxu0 0.0
    %4148 = vmatpush1.msra.mxu0 %v4125
    %4149 = vmatprep.subr.mxu0 0.0
    %4150 = vmatpush1.msra.mxu0 %v4126
    %4151 = vmatprep.subr.mxu0 0.0
    %4152 = vmatpush1.msra.mxu0 %v4127
    %4153 = vmatprep.subr.mxu0 0.0
    %4154 = vmatpush1.msra.mxu0 %v4128
    %4155 = vmatprep.subr.mxu0 0.0
    %4156 = vmatpush1.msra.mxu0 %v4129
    %4157 = vmatprep.subr.mxu0 0.0
    %4158 = vmatpush1.msra.mxu0 %v4130
    %4159 = vmatprep.subr.mxu0 0.0
    %4160 = vmatpush1.msra.mxu0 %v4131
    %4161 = vmatprep.subr.mxu0 0.0
    %4162 = vmatpush1.msra.mxu0 %v4132
    %4163 = vmatprep.subr.mxu0 0.0
    %4164 = vmatpush1.msra.mxu0 %v4133
    %4165 = vmatprep.subr.mxu0 0.0
    %4166 = vmatpush1.msra.mxu0 %v4134
    %4167 = vmatprep.subr.mxu0 0.0
    %4168 = vmatpush1.msra.mxu0 %v4135
    %4169 = vmatprep.subr.mxu0 0.0
    %4170 = vmatpush1.msra.mxu0 %v4136
    %4171 = vmatprep.subr.mxu0 0.0
    %4172 = vmatpush1.msra.mxu0 %v4137
    %4173 = vmatprep.subr.mxu0 0.0
    %4174 = vmatpush1.msra.mxu0 %v4138
    %4175 = vmatprep.subr.mxu0 0.0
    %4176 = vmatpush1.msra.mxu0 %v4139
    %4177 = vmatprep.subr.mxu0 0.0
    %4178 = vmatpush1.msra.mxu0 0.0
    %4179 = vmatprep.subr.mxu0 0.0
    %4180 = vmatpush1.msra.mxu0 0.0
    %4181 = vmatprep.subr.mxu0 0.0
    %4182 = vmatpush1.msra.mxu0 0.0
    %4183 = vmatprep.subr.mxu0 0.0
    %4184 = vmatpush1.msra.mxu0 0.0
    %4185 = vmatprep.subr.mxu0 0.0
    %4186 = vmatpush1.msra.mxu0 0.0
    %4187 = vmatprep.subr.mxu0 0.0
    %4188 = vmatpush1.msra.mxu0 0.0
    %4189 = vmatprep.subr.mxu0 0.0
    %4190 = vmatpush1.msra.mxu0 0.0
    %4191 = vmatprep.subr.mxu0 0.0
    %4192 = vmatpush1.msra.mxu0 0.0
    %4193 = vmatprep.subr.mxu0 0.0
    %4194 = vmatpush1.msra.mxu0 0.0
    %4195 = vmatprep.subr.mxu0 0.0
    %4196 = vmatpush1.msra.mxu0 0.0
    %4197 = vmatprep.subr.mxu0 0.0
    %4198 = vmatpush1.msra.mxu0 0.0
    %4199 = vmatprep.subr.mxu0 0.0
    %4200 = vmatpush1.msra.mxu0 0.0
    %4201 = vmatprep.subr.mxu0 0.0
    %4202 = vmatpush1.msra.mxu0 0.0
    %4203 = vmatprep.subr.mxu0 0.0
    %4204 = vmatpush1.msra.mxu0 0.0
    %4205 = vmatprep.subr.mxu0 0.0
    %4206 = vmatpush1.msra.mxu0 0.0
    %4207 = vmatprep.subr.mxu0 0.0
    %4208 = vmatpush1.msra.mxu0 0.0
    %4209 = vmatprep.mubr.f32.mxu0 0.0
    %4210 = vmatmul.mubr.f32.gmra.mrb[0].mxu0 %v4122
    %v4211 = vpop.f32.mrb[0].mxu0
    %v4212 = vadd.f32 %v4144, %v4211
    %v4213 = vpop.f32.mrb[0].mxu0
    %4214 = vmatprep.mubr.f32.mxu0 0.0
    %4215 = vmatmul.mubr.f32.gmra.mrb[0].mxu0 %v4123
    %v4216 = vpop.f32.mrb[0].mxu0
    %v4217 = vadd.f32 %v4144, %v4216
    %v4218 = vpop.f32.mrb[0].mxu0
    %4219 = vdwg.mxu0
    %v4220 = vmax.f32 %v4212, 0.0
    %v4221 = vmax.f32 %v4217, 0.0
    %v4222 = vld [vmem:[#allocation2 + $0x510] sm:$0xff]
    %v4223 = vld [vmem:[#allocation2 + $0x518] sm:$0xff]
    %v4224 = vld [vmem:[#allocation2 + $0x520] sm:$0xff]
    %v4225 = vld [vmem:[#allocation2 + $0x528] sm:$0xff]
    %v4226 = vld [vmem:[#allocation2 + $0x530] sm:$0xff]
    %v4227 = vld [vmem:[#allocation2 + $0x538] sm:$0xff]
    %v4228 = vld [vmem:[#allocation2 + $0x540] sm:$0xff]
    %v4229 = vld [vmem:[#allocation2 + $0x548] sm:$0xff]
    %v4230 = vld [vmem:[#allocation2 + $0x550] sm:$0xff]
    %v4231 = vld [vmem:[#allocation2 + $0x558] sm:$0xff]
    %v4232 = vld [vmem:[#allocation2 + $0x560] sm:$0xff]
    %v4233 = vld [vmem:[#allocation2 + $0x568] sm:$0xff]
    %v4234 = vld [vmem:[#allocation2 + $0x570] sm:$0xff]
    %v4235 = vld [vmem:[#allocation2 + $0x578] sm:$0xff]
    %v4236 = vld [vmem:[#allocation2 + $0x580] sm:$0xff]
    %v4237 = vld [vmem:[#allocation2 + $0x588] sm:$0xff]
    %v4238 = vld [vmem:[#allocation5 + $0x58] sm:$0x1]
    %v4239 = vlaneseq
    %v4240 = vshrl.u32 %v4239, 7
    %v4241 = vsub.s32 0, %v4240
    %v4242 = vrot.slane %v4238, %v4241
    %4243 = vmatprep.subr.mxu0 0.0
    %4244 = vmatpush1.msra.mxu0 %v4222
    %4245 = vmatprep.subr.mxu0 0.0
    %4246 = vmatpush1.msra.mxu0 %v4223
    %4247 = vmatprep.subr.mxu0 0.0
    %4248 = vmatpush1.msra.mxu0 %v4224
    %4249 = vmatprep.subr.mxu0 0.0
    %4250 = vmatpush1.msra.mxu0 %v4225
    %4251 = vmatprep.subr.mxu0 0.0
    %4252 = vmatpush1.msra.mxu0 %v4226
    %4253 = vmatprep.subr.mxu0 0.0
    %4254 = vmatpush1.msra.mxu0 %v4227
    %4255 = vmatprep.subr.mxu0 0.0
    %4256 = vmatpush1.msra.mxu0 %v4228
    %4257 = vmatprep.subr.mxu0 0.0
    %4258 = vmatpush1.msra.mxu0 %v4229
    %4259 = vmatprep.subr.mxu0 0.0
    %4260 = vmatpush1.msra.mxu0 %v4230
    %4261 = vmatprep.subr.mxu0 0.0
    %4262 = vmatpush1.msra.mxu0 %v4231
    %4263 = vmatprep.subr.mxu0 0.0
    %4264 = vmatpush1.msra.mxu0 %v4232
    %4265 = vmatprep.subr.mxu0 0.0
    %4266 = vmatpush1.msra.mxu0 %v4233
    %4267 = vmatprep.subr.mxu0 0.0
    %4268 = vmatpush1.msra.mxu0 %v4234
    %4269 = vmatprep.subr.mxu0 0.0
    %4270 = vmatpush1.msra.mxu0 %v4235
    %4271 = vmatprep.subr.mxu0 0.0
    %4272 = vmatpush1.msra.mxu0 %v4236
    %4273 = vmatprep.subr.mxu0 0.0
    %4274 = vmatpush1.msra.mxu0 %v4237
    %4275 = vmatprep.subr.mxu0 0.0
    %4276 = vmatpush1.msra.mxu0 0.0
    %4277 = vmatprep.subr.mxu0 0.0
    %4278 = vmatpush1.msra.mxu0 0.0
    %4279 = vmatprep.subr.mxu0 0.0
    %4280 = vmatpush1.msra.mxu0 0.0
    %4281 = vmatprep.subr.mxu0 0.0
    %4282 = vmatpush1.msra.mxu0 0.0
    %4283 = vmatprep.subr.mxu0 0.0
    %4284 = vmatpush1.msra.mxu0 0.0
    %4285 = vmatprep.subr.mxu0 0.0
    %4286 = vmatpush1.msra.mxu0 0.0
    %4287 = vmatprep.subr.mxu0 0.0
    %4288 = vmatpush1.msra.mxu0 0.0
    %4289 = vmatprep.subr.mxu0 0.0
    %4290 = vmatpush1.msra.mxu0 0.0
    %4291 = vmatprep.subr.mxu0 0.0
    %4292 = vmatpush1.msra.mxu0 0.0
    %4293 = vmatprep.subr.mxu0 0.0
    %4294 = vmatpush1.msra.mxu0 0.0
    %4295 = vmatprep.subr.mxu0 0.0
    %4296 = vmatpush1.msra.mxu0 0.0
    %4297 = vmatprep.subr.mxu0 0.0
    %4298 = vmatpush1.msra.mxu0 0.0
    %4299 = vmatprep.subr.mxu0 0.0
    %4300 = vmatpush1.msra.mxu0 0.0
    %4301 = vmatprep.subr.mxu0 0.0
    %4302 = vmatpush1.msra.mxu0 0.0
    %4303 = vmatprep.subr.mxu0 0.0
    %4304 = vmatpush1.msra.mxu0 0.0
    %4305 = vmatprep.subr.mxu0 0.0
    %4306 = vmatpush1.msra.mxu0 0.0
    %4307 = vmatprep.mubr.f32.mxu0 0.0
    %4308 = vmatmul.mubr.f32.gmra.mrb[0].mxu0 %v4220
    %v4309 = vpop.f32.mrb[0].mxu0
    %v4310 = vadd.f32 %v4242, %v4309
    %v4311 = vpop.f32.mrb[0].mxu0
    %4312 = vmatprep.mubr.f32.mxu0 0.0
    %4313 = vmatmul.mubr.f32.gmra.mrb[0].mxu0 %v4221
    %v4314 = vpop.f32.mrb[0].mxu0
    %v4315 = vadd.f32 %v4242, %v4314
    %v4316 = vpop.f32.mrb[0].mxu0
    %4317 = vdwg.mxu0
    %v4318 = vmax.f32 %v4310, 0.0
    %v4319 = vmax.f32 %v4315, 0.0
    %v4320 = vrot.slane %v4318, 4
    %v4321 = vadd.f32 %v4318, %v4320
    %v4322 = vrot.slane %v4321, 2
    %v4323 = vadd.f32 %v4321, %v4322
    %v4324 = vrot.slane %v4323, 1
    %v4325 = vadd.f32 %v4323, %v4324
    %v4326 = vrot.slane %v4319, 4
    %v4327 = vadd.f32 %v4319, %v4326
    %v4328 = vrot.slane %v4327, 2
    %v4329 = vadd.f32 %v4327, %v4328
    %v4330 = vrot.slane %v4329, 1
    %v4331 = vadd.f32 %v4329, %v4330
    %v4332 = vld [vmem:[#allocation2 + $0x590] sm:$0xff]
    %v4333 = vld [vmem:[#allocation2 + $0x598] sm:$0xff]
    %v4334 = vld [vmem:[#allocation2 + $0x5a0] sm:$0xff]
    %v4335 = vld [vmem:[#allocation2 + $0x5a8] sm:$0xff]
    %v4336 = vld [vmem:[#allocation2 + $0x5b0] sm:$0xff]
    %v4337 = vld [vmem:[#allocation2 + $0x5b8] sm:$0xff]
    %v4338 = vld [vmem:[#allocation2 + $0x5c0] sm:$0xff]
    %v4339 = vld [vmem:[#allocation2 + $0x5c8] sm:$0xff]
    %v4340 = vld [vmem:[#allocation2 + $0x5d0] sm:$0xff]
    %v4341 = vld [vmem:[#allocation2 + $0x5d8] sm:$0xff]
    %v4342 = vld [vmem:[#allocation2 + $0x5e0] sm:$0xff]
    %v4343 = vld [vmem:[#allocation2 + $0x5e8] sm:$0xff]
    %v4344 = vld [vmem:[#allocation2 + $0x5f0] sm:$0xff]
    %v4345 = vld [vmem:[#allocation2 + $0x5f8] sm:$0xff]
    %v4346 = vld [vmem:[#allocation2 + $0x600] sm:$0xff]
    %v4347 = vld [vmem:[#allocation2 + $0x608] sm:$0xff]
    %v4348 = vld [vmem:[#allocation5 + $0x60] sm:$0x1]
    %v4349 = vlaneseq
    %v4350 = vshrl.u32 %v4349, 7
    %v4351 = vsub.s32 0, %v4350
    %v4352 = vrot.slane %v4348, %v4351
    %v4355 = vsel %vm3815, %v4331, %v4325
    %4357 = vmatprep.subr.mxu0 0.0
    %4358 = vmatpush1.msra.mxu0 %v4332
    %4359 = vmatprep.subr.mxu0 0.0
    %4360 = vmatpush1.msra.mxu0 %v4333
    %4361 = vmatprep.subr.mxu0 0.0
    %4362 = vmatpush1.msra.mxu0 %v4334
    %4363 = vmatprep.subr.mxu0 0.0
    %4364 = vmatpush1.msra.mxu0 %v4335
    %4365 = vmatprep.subr.mxu0 0.0
    %4366 = vmatpush1.msra.mxu0 %v4336
    %4367 = vmatprep.subr.mxu0 0.0
    %4368 = vmatpush1.msra.mxu0 %v4337
    %4369 = vmatprep.subr.mxu0 0.0
    %4370 = vmatpush1.msra.mxu0 %v4338
    %4371 = vmatprep.subr.mxu0 0.0
    %4372 = vmatpush1.msra.mxu0 %v4339
    %4373 = vmatprep.subr.mxu0 0.0
    %4374 = vmatpush1.msra.mxu0 %v4340
    %4375 = vmatprep.subr.mxu0 0.0
    %4376 = vmatpush1.msra.mxu0 %v4341
    %4377 = vmatprep.subr.mxu0 0.0
    %4378 = vmatpush1.msra.mxu0 %v4342
    %4379 = vmatprep.subr.mxu0 0.0
    %4380 = vmatpush1.msra.mxu0 %v4343
    %4381 = vmatprep.subr.mxu0 0.0
    %4382 = vmatpush1.msra.mxu0 %v4344
    %4383 = vmatprep.subr.mxu0 0.0
    %4384 = vmatpush1.msra.mxu0 %v4345
    %4385 = vmatprep.subr.mxu0 0.0
    %4386 = vmatpush1.msra.mxu0 %v4346
    %4387 = vmatprep.subr.mxu0 0.0
    %4388 = vmatpush1.msra.mxu0 %v4347
    %4389 = vmatprep.subr.mxu0 0.0
    %4390 = vmatpush1.msra.mxu0 0.0
    %4391 = vmatprep.subr.mxu0 0.0
    %4392 = vmatpush1.msra.mxu0 0.0
    %4393 = vmatprep.subr.mxu0 0.0
    %4394 = vmatpush1.msra.mxu0 0.0
    %4395 = vmatprep.subr.mxu0 0.0
    %4396 = vmatpush1.msra.mxu0 0.0
    %4397 = vmatprep.subr.mxu0 0.0
    %4398 = vmatpush1.msra.mxu0 0.0
    %4399 = vmatprep.subr.mxu0 0.0
    %4400 = vmatpush1.msra.mxu0 0.0
    %4401 = vmatprep.subr.mxu0 0.0
    %4402 = vmatpush1.msra.mxu0 0.0
    %4403 = vmatprep.subr.mxu0 0.0
    %4404 = vmatpush1.msra.mxu0 0.0
    %4405 = vmatprep.subr.mxu0 0.0
    %4406 = vmatpush1.msra.mxu0 0.0
    %4407 = vmatprep.subr.mxu0 0.0
    %4408 = vmatpush1.msra.mxu0 0.0
    %4409 = vmatprep.subr.mxu0 0.0
    %4410 = vmatpush1.msra.mxu0 0.0
    %4411 = vmatprep.subr.mxu0 0.0
    %4412 = vmatpush1.msra.mxu0 0.0
    %4413 = vmatprep.subr.mxu0 0.0
    %4414 = vmatpush1.msra.mxu0 0.0
    %4415 = vmatprep.subr.mxu0 0.0
    %4416 = vmatpush1.msra.mxu0 0.0
    %4417 = vmatprep.subr.mxu0 0.0
    %4418 = vmatpush1.msra.mxu0 0.0
    %4419 = vmatprep.subr.mxu0 0.0
    %4420 = vmatpush1.msra.mxu0 0.0
    %4421 = vmatprep.mubr.f32.mxu0 0.0
    %4422 = vmatmul.mubr.f32.gmra.mrb[0].mxu0 %v4355
    %v4423 = vpop.f32.mrb[0].mxu0
    %v4424 = vadd.f32 %v4352, %v4423
    %v4425 = vpop.f32.mrb[0].mxu0
    %4426 = vdwg.mxu0
    %4427 = vst [vmem:[#allocation7] sm:$0x3] %v4424
    // Predicated region
    $region34: #{tpu_custom_call.1} parent=1 // pred_check
      _
    $region35: #{tpu_custom_call.1} parent=1 // pred_check_branch
      %4429 = sbr.rel (0) target = $region37
    $region36: #{tpu_custom_call.1} parent=1 // pred_region
      %s4431 = ssub.s32 32, 32
      %4432 = vsyncadd [#allocation4], %s4431
      %s4434 = sshll.u32 [#allocation7], 4
      %s4435 = int_to_ptr.vmem [resolvable:$true] %s4434
      %4437 = dma.vmem_to_hbm [thread:$0]  %s4435, 32, %s6, [#allocation4]
    $region37: #{tpu_custom_call.1} parent=1 // pred_fallthru
      _
    // Predicated region
    $region38: #{tpu_custom_call.1} parent=1 // pred_check
      _
    $region39: #{tpu_custom_call.1} parent=1 // pred_check_branch
      %4439 = sbr.rel (0) target = $region41
    $region40: #{tpu_custom_call.1} parent=1 // pred_region
      %4440 = dma.done [#allocation4], 32
    $region41: #{tpu_custom_call.1} parent=1 // pred_fallthru
      _
    %4441 = vsyncpa [#allocation3], 1
    %4442 = vsyncpa [#allocation6], 1
    %4443 = vsyncpa [#allocation4], 1

</llo_original>
